<compile_context>
chip_gen: v7x
topology: tpu7x:2x2x1
jax: 0.10.0
libtpu: 0.0.40
codegen_flags: <defaults>
</compile_context>

<pallas_src>
import functools

import jax
import jax.numpy as jnp
from jax.experimental import pallas as pl
from jax.experimental.pallas import tpu as pltpu


_CENTER = 74.5          # hard-coded in the PyTorch module
_SIDE = 150             # implied by the 74.5 center: (149 - 74.5)/74.5 == 1.0


def _circle_crop_kernel(img_ref, out_ref, *, width, center):
    """img_ref/out_ref: (bb, H*W) float32, row-major flattened pixels."""
    _, L = img_ref.shape
    # Flat pixel index as f32 (exact: L = 22500 < 2^24). 2-D iota is TPU-friendly.
    k = jax.lax.broadcasted_iota(jnp.int32, (1, L), 1).astype(jnp.float32)
    # Recover (row, col) without vector integer div/mod.  (k + 0.5)/width is
    # always >= 1/(2*width) away from an integer, so the float floor is exact
    # even with reciprocal-multiply rounding.
    row = jnp.floor((k + jnp.float32(0.5)) * jnp.float32(1.0 / width))
    col = k - row * jnp.float32(width)          # exact (integers < 2^24)
    x = (col - jnp.float32(center)) * jnp.float32(1.0 / center)
    y = (row - jnp.float32(center)) * jnp.float32(1.0 / center)
    # x^2 + y^2 <= 0.5  ==  sqrt(x^2+y^2)/max(r) <= 0.5  (max(r) = sqrt(2)).
    inside = (x * x + y * y) <= jnp.float32(0.5)
    # Single select; `inside` (1, L) broadcasts over the batch sublanes.
    out_ref[...] = jnp.where(inside, img_ref[...], jnp.float32(0.0))


def circle_crop(img, *, block_b=None):
    """Pallas Circle_Crop.  img: (C, H, W) or (B, C, H, W) float32, C==1, H==W==150."""
    squeeze = img.ndim == 3
    if squeeze:
        img = img[None]
    B, C, H, W = img.shape
    if C != 1:
        raise ValueError("Circle_Crop: multiple channels not supported (matches PyTorch module)")
    if H != _SIDE or W != _SIDE:
        raise ValueError("Circle_Crop: hard-coded 74.5 center implies 150x150 images")

    L = H * W
    flat = img.reshape(B, L)                    # free row-major metadata reshape
    kernel = functools.partial(_circle_crop_kernel, width=W, center=_CENTER)

    if block_b is None:
        # Keep double-buffered in+out blocks well under scoped VMEM (32 MiB v6e/v7x, 16 MiB v5e).
        budget = 8 * 1024 * 1024
        block_b = max(8, budget // (4 * L * flat.dtype.itemsize))
    if block_b < B:
        block_b = max(8, (block_b // 8) * 8)    # sublane-aligned batch tiles
    if block_b >= B:
        block_b = B                             # whole batch fits: no grid at all

    if block_b == B:
        out_flat = pl.pallas_call(
            kernel,
            out_shape=jax.ShapeDtypeStruct((B, L), flat.dtype),
        )(flat)
    else:
        out_flat = pl.pallas_call(
            kernel,
            out_shape=jax.ShapeDtypeStruct((B, L), flat.dtype),
            grid=(pl.cdiv(B, block_b),),
            in_specs=[pl.BlockSpec((block_b, L), lambda b: (b, 0))],
            out_specs=pl.BlockSpec((block_b, L), lambda b: (b, 0)),
            compiler_params=pltpu.CompilerParams(
                dimension_semantics=("parallel",)),
        )(flat)

    out = out_flat.reshape(B, C, H, W)
    return out[0] if squeeze else out


def circle_crop_ref(img):
    """Pure-JAX reference mirroring the torch code exactly."""
    H, W = img.shape[-2], img.shape[-1]
    x = jnp.tile(jnp.arange(W, dtype=jnp.float32), (H, 1))
    x = (x - 74.5) / 74.5
    y = x.T
    r = jnp.sqrt(x**2 + y**2)
    r = r / jnp.max(r)
    r = jnp.where(r < 0.5, -1.0, r)
    r = jnp.where(r == 0.5, -1.0, r)
    r = jnp.where(r != -1.0, 0.0, r)
    r = r**2
    return r * img


if __name__ == "__main__":
    C, H, W = 1, _SIDE, _SIDE   # module's hard-coded 74.5 center => 150x150, C=1
    key = jax.random.PRNGKey(0)

    # Single image: no-grid, whole-array-in-VMEM path.
    img1 = jax.random.normal(key, (C, H, W), dtype=jnp.float32)
    out1 = jax.block_until_ready(circle_crop(img1))
    ref1 = circle_crop_ref(img1)
    assert out1.shape == img1.shape and out1.dtype == img1.dtype
    assert jnp.allclose(out1, ref1, atol=1e-6, rtol=1e-6), "single-image mismatch vs reference"

    # Small batch: gridded path (batch tiles of 8, parallel batch axis).
    imgB = jax.random.normal(jax.random.PRNGKey(0), (16, C, H, W), dtype=jnp.float32)
    outB = jax.block_until_ready(circle_crop(imgB, block_b=8))
    refB = circle_crop_ref(imgB)
    assert outB.shape == imgB.shape and outB.dtype == imgB.dtype
    assert jnp.allclose(outB, refB, atol=1e-6, rtol=1e-6), "batched mismatch vs reference"

    print("KERNEL_OK")
</pallas_src>

<mosaic_0001>
module attributes {stable_mosaic.version = 11 : i64} {
  func.func @_circle_crop_kernel(%arg0: memref<1x22500xf32, #tpu.memory_space<vmem>>, %arg1: memref<1x22500xf32, #tpu.memory_space<vmem>>) attributes {dimension_semantics = [], scalar_prefetch = 0 : i64, scratch_operands = 0 : i64, tpu.core_type = #tpu.core_type<tc>} {
    %0 = tpu.iota {dimensions = array<i32: 1>} : vector<1x22500xi32>
    %1 = arith.sitofp %0 : vector<1x22500xi32> to vector<1x22500xf32>
    %cst = arith.constant 5.000000e-01 : f32
    %2 = vector.broadcast %cst : f32 to vector<1x22500xf32>
    %3 = arith.addf %1, %2 : vector<1x22500xf32>
    %cst_0 = arith.constant 0.00666666683 : f32
    %4 = vector.broadcast %cst_0 : f32 to vector<1x22500xf32>
    %5 = arith.mulf %3, %4 : vector<1x22500xf32>
    %6 = math.floor %5 : vector<1x22500xf32>
    %cst_1 = arith.constant 1.500000e+02 : f32
    %7 = vector.broadcast %cst_1 : f32 to vector<1x22500xf32>
    %8 = arith.mulf %6, %7 : vector<1x22500xf32>
    %9 = arith.subf %1, %8 : vector<1x22500xf32>
    %cst_2 = arith.constant 7.450000e+01 : f32
    %10 = vector.broadcast %cst_2 : f32 to vector<1x22500xf32>
    %11 = arith.subf %9, %10 : vector<1x22500xf32>
    %cst_3 = arith.constant 0.0134228189 : f32
    %12 = vector.broadcast %cst_3 : f32 to vector<1x22500xf32>
    %13 = arith.mulf %11, %12 : vector<1x22500xf32>
    %cst_4 = arith.constant 7.450000e+01 : f32
    %14 = vector.broadcast %cst_4 : f32 to vector<1x22500xf32>
    %15 = arith.subf %6, %14 : vector<1x22500xf32>
    %cst_5 = arith.constant 0.0134228189 : f32
    %16 = vector.broadcast %cst_5 : f32 to vector<1x22500xf32>
    %17 = arith.mulf %15, %16 : vector<1x22500xf32>
    %18 = arith.mulf %13, %13 : vector<1x22500xf32>
    %19 = arith.mulf %17, %17 : vector<1x22500xf32>
    %20 = arith.addf %18, %19 : vector<1x22500xf32>
    %cst_6 = arith.constant 5.000000e-01 : f32
    %21 = vector.broadcast %cst_6 : f32 to vector<1x22500xf32>
    %22 = arith.cmpf ole, %20, %21 : vector<1x22500xf32>
    %c0 = arith.constant 0 : index
    %c0_7 = arith.constant 0 : index
    %23 = vector.load %arg0[%c0, %c0_7] : memref<1x22500xf32, #tpu.memory_space<vmem>>, vector<1x22500xf32>
    %cst_8 = arith.constant 0.000000e+00 : f32
    %24 = vector.broadcast %cst_8 : f32 to vector<1x22500xf32>
    %25 = arith.select %22, %23, %24 : vector<1x22500xi1>, vector<1x22500xf32>
    %c0_9 = arith.constant 0 : index
    %c0_10 = arith.constant 0 : index
    %26 = vector.load %arg1[%c0_9, %c0_10] : memref<1x22500xf32, #tpu.memory_space<vmem>>, vector<1x22500xf32>
    tpu.vector_store %arg1[%c0_9, %c0_10], %25 {strides = array<i32>} : memref<1x22500xf32, #tpu.memory_space<vmem>>, vector<1x22500xf32>,
    return
  }
}

</mosaic_0001>

<llo_original>
// kernel: tpu_custom_call.1
$region0: #{tpu_custom_call.1}
  #allocation0 [shape = 'u32[]', space=smem, size = 0x4, offset = 0x4, fixed_abs, tag = 'smem constant byte address 0x4 - core index']
  #allocation1 [shape = 'u32[144,128]{1,0:T(1,128)}', space=vmem, size = 0x12000, scoped, tag = 'internal scratch']
  %s0 = inlined_call_operand.hbm [shape: f32[1,22500], index: 0, kind: input, shape index: {}]
  %s1 = inlined_call_operand.hbm [shape: f32[1,22500], index: 1, kind: output, shape index: {}]
  %s2 = sld [smem:[#allocation0]]
  $region18: #{tpu_custom_call.1} parent=0
    _
  %s4 = ssub.s32 1, %s2
  %s5 = scalar_select 0, %s4, %s2
  $region1: #{tpu_custom_call.1} parent=0
    #allocation2 [shape = 'u8[90112]{0}', space=vmem, size = 0x16000, scoped, tag = 'input window, operand 0, single buffered']
    #allocation3 [shape = 's32[1]{0}', space=sflag, size = 0x4, scoped, tag = 'scoped memory for tpu_custom_call.1']
    #allocation4 [shape = 's32[1]{0}', space=sflag, size = 0x4, scoped, tag = 'scoped memory for tpu_custom_call.1']
    #allocation5 [shape = 'u8[90112]{0}', space=vmem, size = 0x16000, scoped, tag = 'output window, operand 0, single buffered']
    %6 = vsyncpa [#allocation3], 0
    %7 = vsyncpa [#allocation4], 0
    // Predicated region
    $region2: #{tpu_custom_call.1} parent=1 // pred_check
      _
    $region3: #{tpu_custom_call.1} parent=1 // pred_check_branch
      %9 = sbr.rel (0) target = $region5
    $region4: #{tpu_custom_call.1} parent=1 // pred_region
      %s11 = ssub.s32 2816, 2816
      %12 = vsyncadd [#allocation3], %s11
      %s14 = sshll.u32 [#allocation2], 4
      %s15 = int_to_ptr.vmem [resolvable:$true] %s14
      %17 = dma.hbm_to_vmem [thread:$0]  %s0, 2816, %s15, [#allocation3]
    $region5: #{tpu_custom_call.1} parent=1 // pred_fallthru
      _
    // Predicated region
    $region6: #{tpu_custom_call.1} parent=1 // pred_check
      _
    $region7: #{tpu_custom_call.1} parent=1 // pred_check_branch
      %19 = sbr.rel (0) target = $region9
    $region8: #{tpu_custom_call.1} parent=1 // pred_region
      %20 = dma.done [#allocation3], 2816
    $region9: #{tpu_custom_call.1} parent=1 // pred_fallthru
      _
    %v21 = vlaneseq
    %v22 = vand.u32 %v21, 127
    %v23 = vadd.s32 %v22, 128
    %v24 = vadd.s32 %v22, 256
    %v25 = vadd.s32 %v22, 384
    %v26 = vadd.s32 %v22, 512
    %v27 = vadd.s32 %v22, 640
    %v28 = vadd.s32 %v22, 768
    %v29 = vadd.s32 %v22, 896
    %v30 = vadd.s32 %v22, 1024
    %v31 = vadd.s32 %v22, 1152
    %v32 = vadd.s32 %v22, 1280
    %v33 = vadd.s32 %v22, 1408
    %v34 = vadd.s32 %v22, 1536
    %v35 = vadd.s32 %v22, 1664
    %v36 = vadd.s32 %v22, 1792
    %v37 = vadd.s32 %v22, 1920
    %v38 = vadd.s32 %v22, 2048
    %v39 = vadd.s32 %v22, 2176
    %v40 = vadd.s32 %v22, 2304
    %v41 = vadd.s32 %v22, 2432
    %v42 = vadd.s32 %v22, 2560
    %v43 = vadd.s32 %v22, 2688
    %v44 = vadd.s32 %v22, 2816
    %v45 = vadd.s32 %v22, 2944
    %v46 = vadd.s32 %v22, 3072
    %v47 = vadd.s32 %v22, 3200
    %v48 = vadd.s32 %v22, 3328
    %v49 = vadd.s32 %v22, 3456
    %v50 = vadd.s32 %v22, 3584
    %v51 = vadd.s32 %v22, 3712
    %v52 = vadd.s32 %v22, 3840
    %v53 = vadd.s32 %v22, 3968
    %v54 = vadd.s32 %v22, 4096
    %v55 = vadd.s32 %v22, 4224
    %v56 = vadd.s32 %v22, 4352
    %v57 = vadd.s32 %v22, 4480
    %v58 = vadd.s32 %v22, 4608
    %v59 = vadd.s32 %v22, 4736
    %v60 = vadd.s32 %v22, 4864
    %v61 = vadd.s32 %v22, 4992
    %v62 = vadd.s32 %v22, 5120
    %v63 = vadd.s32 %v22, 5248
    %v64 = vadd.s32 %v22, 5376
    %v65 = vadd.s32 %v22, 5504
    %v66 = vadd.s32 %v22, 5632
    %v67 = vadd.s32 %v22, 5760
    %v68 = vadd.s32 %v22, 5888
    %v69 = vadd.s32 %v22, 6016
    %v70 = vadd.s32 %v22, 6144
    %v71 = vadd.s32 %v22, 6272
    %v72 = vadd.s32 %v22, 6400
    %v73 = vadd.s32 %v22, 6528
    %v74 = vadd.s32 %v22, 6656
    %v75 = vadd.s32 %v22, 6784
    %v76 = vadd.s32 %v22, 6912
    %v77 = vadd.s32 %v22, 7040
    %v78 = vadd.s32 %v22, 7168
    %v79 = vadd.s32 %v22, 7296
    %v80 = vadd.s32 %v22, 7424
    %v81 = vadd.s32 %v22, 7552
    %v82 = vadd.s32 %v22, 7680
    %v83 = vadd.s32 %v22, 7808
    %v84 = vadd.s32 %v22, 7936
    %v85 = vadd.s32 %v22, 8064
    %v86 = vadd.s32 %v22, 8192
    %v87 = vadd.s32 %v22, 8320
    %v88 = vadd.s32 %v22, 8448
    %v89 = vadd.s32 %v22, 8576
    %v90 = vadd.s32 %v22, 8704
    %v91 = vadd.s32 %v22, 8832
    %v92 = vadd.s32 %v22, 8960
    %v93 = vadd.s32 %v22, 9088
    %v94 = vadd.s32 %v22, 9216
    %v95 = vadd.s32 %v22, 9344
    %v96 = vadd.s32 %v22, 9472
    %v97 = vadd.s32 %v22, 9600
    %v98 = vadd.s32 %v22, 9728
    %v99 = vadd.s32 %v22, 9856
    %v100 = vadd.s32 %v22, 9984
    %v101 = vadd.s32 %v22, 10112
    %v102 = vadd.s32 %v22, 10240
    %v103 = vadd.s32 %v22, 10368
    %v104 = vadd.s32 %v22, 10496
    %v105 = vadd.s32 %v22, 10624
    %v106 = vadd.s32 %v22, 10752
    %v107 = vadd.s32 %v22, 10880
    %v108 = vadd.s32 %v22, 11008
    %v109 = vadd.s32 %v22, 11136
    %v110 = vadd.s32 %v22, 11264
    %v111 = vadd.s32 %v22, 11392
    %v112 = vadd.s32 %v22, 11520
    %v113 = vadd.s32 %v22, 11648
    %v114 = vadd.s32 %v22, 11776
    %v115 = vadd.s32 %v22, 11904
    %v116 = vadd.s32 %v22, 12032
    %v117 = vadd.s32 %v22, 12160
    %v118 = vadd.s32 %v22, 12288
    %v119 = vadd.s32 %v22, 12416
    %v120 = vadd.s32 %v22, 12544
    %v121 = vadd.s32 %v22, 12672
    %v122 = vadd.s32 %v22, 12800
    %v123 = vadd.s32 %v22, 12928
    %v124 = vadd.s32 %v22, 13056
    %v125 = vadd.s32 %v22, 13184
    %v126 = vadd.s32 %v22, 13312
    %v127 = vadd.s32 %v22, 13440
    %v128 = vadd.s32 %v22, 13568
    %v129 = vadd.s32 %v22, 13696
    %v130 = vadd.s32 %v22, 13824
    %v131 = vadd.s32 %v22, 13952
    %v132 = vadd.s32 %v22, 14080
    %v133 = vadd.s32 %v22, 14208
    %v134 = vadd.s32 %v22, 14336
    %v135 = vadd.s32 %v22, 14464
    %v136 = vadd.s32 %v22, 14592
    %v137 = vadd.s32 %v22, 14720
    %v138 = vadd.s32 %v22, 14848
    %v139 = vadd.s32 %v22, 14976
    %v140 = vadd.s32 %v22, 15104
    %v141 = vadd.s32 %v22, 15232
    %v142 = vadd.s32 %v22, 15360
    %v143 = vadd.s32 %v22, 15488
    %v144 = vadd.s32 %v22, 15616
    %v145 = vadd.s32 %v22, 15744
    %v146 = vadd.s32 %v22, 15872
    %v147 = vadd.s32 %v22, 16000
    %v148 = vadd.s32 %v22, 16128
    %v149 = vadd.s32 %v22, 16256
    %v150 = vadd.s32 %v22, 16384
    %v151 = vadd.s32 %v22, 16512
    %v152 = vadd.s32 %v22, 16640
    %v153 = vadd.s32 %v22, 16768
    %v154 = vadd.s32 %v22, 16896
    %v155 = vadd.s32 %v22, 17024
    %v156 = vadd.s32 %v22, 17152
    %v157 = vadd.s32 %v22, 17280
    %v158 = vadd.s32 %v22, 17408
    %v159 = vadd.s32 %v22, 17536
    %v160 = vadd.s32 %v22, 17664
    %v161 = vadd.s32 %v22, 17792
    %v162 = vadd.s32 %v22, 17920
    %v163 = vadd.s32 %v22, 18048
    %v164 = vadd.s32 %v22, 18176
    %v165 = vadd.s32 %v22, 18304
    %v166 = vadd.s32 %v22, 18432
    %v167 = vadd.s32 %v22, 18560
    %v168 = vadd.s32 %v22, 18688
    %v169 = vadd.s32 %v22, 18816
    %v170 = vadd.s32 %v22, 18944
    %v171 = vadd.s32 %v22, 19072
    %v172 = vadd.s32 %v22, 19200
    %v173 = vadd.s32 %v22, 19328
    %v174 = vadd.s32 %v22, 19456
    %v175 = vadd.s32 %v22, 19584
    %v176 = vadd.s32 %v22, 19712
    %v177 = vadd.s32 %v22, 19840
    %v178 = vadd.s32 %v22, 19968
    %v179 = vadd.s32 %v22, 20096
    %v180 = vadd.s32 %v22, 20224
    %v181 = vadd.s32 %v22, 20352
    %v182 = vadd.s32 %v22, 20480
    %v183 = vadd.s32 %v22, 20608
    %v184 = vadd.s32 %v22, 20736
    %v185 = vadd.s32 %v22, 20864
    %v186 = vadd.s32 %v22, 20992
    %v187 = vadd.s32 %v22, 21120
    %v188 = vadd.s32 %v22, 21248
    %v189 = vadd.s32 %v22, 21376
    %v190 = vadd.s32 %v22, 21504
    %v191 = vadd.s32 %v22, 21632
    %v192 = vadd.s32 %v22, 21760
    %v193 = vadd.s32 %v22, 21888
    %v194 = vadd.s32 %v22, 22016
    %v195 = vadd.s32 %v22, 22144
    %v196 = vadd.s32 %v22, 22272
    %v197 = vadd.s32 %v22, 22400
    %v198 = vcvt.s32.f32 %v22
    %v199 = vcvt.s32.f32 %v23
    %v200 = vcvt.s32.f32 %v24
    %v201 = vcvt.s32.f32 %v25
    %v202 = vcvt.s32.f32 %v26
    %v203 = vcvt.s32.f32 %v27
    %v204 = vcvt.s32.f32 %v28
    %v205 = vcvt.s32.f32 %v29
    %v206 = vcvt.s32.f32 %v30
    %v207 = vcvt.s32.f32 %v31
    %v208 = vcvt.s32.f32 %v32
    %v209 = vcvt.s32.f32 %v33
    %v210 = vcvt.s32.f32 %v34
    %v211 = vcvt.s32.f32 %v35
    %v212 = vcvt.s32.f32 %v36
    %v213 = vcvt.s32.f32 %v37
    %v214 = vcvt.s32.f32 %v38
    %v215 = vcvt.s32.f32 %v39
    %v216 = vcvt.s32.f32 %v40
    %v217 = vcvt.s32.f32 %v41
    %v218 = vcvt.s32.f32 %v42
    %v219 = vcvt.s32.f32 %v43
    %v220 = vcvt.s32.f32 %v44
    %v221 = vcvt.s32.f32 %v45
    %v222 = vcvt.s32.f32 %v46
    %v223 = vcvt.s32.f32 %v47
    %v224 = vcvt.s32.f32 %v48
    %v225 = vcvt.s32.f32 %v49
    %v226 = vcvt.s32.f32 %v50
    %v227 = vcvt.s32.f32 %v51
    %v228 = vcvt.s32.f32 %v52
    %v229 = vcvt.s32.f32 %v53
    %v230 = vcvt.s32.f32 %v54
    %v231 = vcvt.s32.f32 %v55
    %v232 = vcvt.s32.f32 %v56
    %v233 = vcvt.s32.f32 %v57
    %v234 = vcvt.s32.f32 %v58
    %v235 = vcvt.s32.f32 %v59
    %v236 = vcvt.s32.f32 %v60
    %v237 = vcvt.s32.f32 %v61
    %v238 = vcvt.s32.f32 %v62
    %v239 = vcvt.s32.f32 %v63
    %v240 = vcvt.s32.f32 %v64
    %v241 = vcvt.s32.f32 %v65
    %v242 = vcvt.s32.f32 %v66
    %v243 = vcvt.s32.f32 %v67
    %v244 = vcvt.s32.f32 %v68
    %v245 = vcvt.s32.f32 %v69
    %v246 = vcvt.s32.f32 %v70
    %v247 = vcvt.s32.f32 %v71
    %v248 = vcvt.s32.f32 %v72
    %v249 = vcvt.s32.f32 %v73
    %v250 = vcvt.s32.f32 %v74
    %v251 = vcvt.s32.f32 %v75
    %v252 = vcvt.s32.f32 %v76
    %v253 = vcvt.s32.f32 %v77
    %v254 = vcvt.s32.f32 %v78
    %v255 = vcvt.s32.f32 %v79
    %v256 = vcvt.s32.f32 %v80
    %v257 = vcvt.s32.f32 %v81
    %v258 = vcvt.s32.f32 %v82
    %v259 = vcvt.s32.f32 %v83
    %v260 = vcvt.s32.f32 %v84
    %v261 = vcvt.s32.f32 %v85
    %v262 = vcvt.s32.f32 %v86
    %v263 = vcvt.s32.f32 %v87
    %v264 = vcvt.s32.f32 %v88
    %v265 = vcvt.s32.f32 %v89
    %v266 = vcvt.s32.f32 %v90
    %v267 = vcvt.s32.f32 %v91
    %v268 = vcvt.s32.f32 %v92
    %v269 = vcvt.s32.f32 %v93
    %v270 = vcvt.s32.f32 %v94
    %v271 = vcvt.s32.f32 %v95
    %v272 = vcvt.s32.f32 %v96
    %v273 = vcvt.s32.f32 %v97
    %v274 = vcvt.s32.f32 %v98
    %v275 = vcvt.s32.f32 %v99
    %v276 = vcvt.s32.f32 %v100
    %v277 = vcvt.s32.f32 %v101
    %v278 = vcvt.s32.f32 %v102
    %v279 = vcvt.s32.f32 %v103
    %v280 = vcvt.s32.f32 %v104
    %v281 = vcvt.s32.f32 %v105
    %v282 = vcvt.s32.f32 %v106
    %v283 = vcvt.s32.f32 %v107
    %v284 = vcvt.s32.f32 %v108
    %v285 = vcvt.s32.f32 %v109
    %v286 = vcvt.s32.f32 %v110
    %v287 = vcvt.s32.f32 %v111
    %v288 = vcvt.s32.f32 %v112
    %v289 = vcvt.s32.f32 %v113
    %v290 = vcvt.s32.f32 %v114
    %v291 = vcvt.s32.f32 %v115
    %v292 = vcvt.s32.f32 %v116
    %v293 = vcvt.s32.f32 %v117
    %v294 = vcvt.s32.f32 %v118
    %v295 = vcvt.s32.f32 %v119
    %v296 = vcvt.s32.f32 %v120
    %v297 = vcvt.s32.f32 %v121
    %v298 = vcvt.s32.f32 %v122
    %v299 = vcvt.s32.f32 %v123
    %v300 = vcvt.s32.f32 %v124
    %v301 = vcvt.s32.f32 %v125
    %v302 = vcvt.s32.f32 %v126
    %v303 = vcvt.s32.f32 %v127
    %v304 = vcvt.s32.f32 %v128
    %v305 = vcvt.s32.f32 %v129
    %v306 = vcvt.s32.f32 %v130
    %v307 = vcvt.s32.f32 %v131
    %v308 = vcvt.s32.f32 %v132
    %v309 = vcvt.s32.f32 %v133
    %v310 = vcvt.s32.f32 %v134
    %v311 = vcvt.s32.f32 %v135
    %v312 = vcvt.s32.f32 %v136
    %v313 = vcvt.s32.f32 %v137
    %v314 = vcvt.s32.f32 %v138
    %v315 = vcvt.s32.f32 %v139
    %v316 = vcvt.s32.f32 %v140
    %v317 = vcvt.s32.f32 %v141
    %v318 = vcvt.s32.f32 %v142
    %v319 = vcvt.s32.f32 %v143
    %v320 = vcvt.s32.f32 %v144
    %v321 = vcvt.s32.f32 %v145
    %v322 = vcvt.s32.f32 %v146
    %v323 = vcvt.s32.f32 %v147
    %v324 = vcvt.s32.f32 %v148
    %v325 = vcvt.s32.f32 %v149
    %v326 = vcvt.s32.f32 %v150
    %v327 = vcvt.s32.f32 %v151
    %v328 = vcvt.s32.f32 %v152
    %v329 = vcvt.s32.f32 %v153
    %v330 = vcvt.s32.f32 %v154
    %v331 = vcvt.s32.f32 %v155
    %v332 = vcvt.s32.f32 %v156
    %v333 = vcvt.s32.f32 %v157
    %v334 = vcvt.s32.f32 %v158
    %v335 = vcvt.s32.f32 %v159
    %v336 = vcvt.s32.f32 %v160
    %v337 = vcvt.s32.f32 %v161
    %v338 = vcvt.s32.f32 %v162
    %v339 = vcvt.s32.f32 %v163
    %v340 = vcvt.s32.f32 %v164
    %v341 = vcvt.s32.f32 %v165
    %v342 = vcvt.s32.f32 %v166
    %v343 = vcvt.s32.f32 %v167
    %v344 = vcvt.s32.f32 %v168
    %v345 = vcvt.s32.f32 %v169
    %v346 = vcvt.s32.f32 %v170
    %v347 = vcvt.s32.f32 %v171
    %v348 = vcvt.s32.f32 %v172
    %v349 = vcvt.s32.f32 %v173
    %v350 = vcvt.s32.f32 %v174
    %v351 = vcvt.s32.f32 %v175
    %v352 = vcvt.s32.f32 %v176
    %v353 = vcvt.s32.f32 %v177
    %v354 = vcvt.s32.f32 %v178
    %v355 = vcvt.s32.f32 %v179
    %v356 = vcvt.s32.f32 %v180
    %v357 = vcvt.s32.f32 %v181
    %v358 = vcvt.s32.f32 %v182
    %v359 = vcvt.s32.f32 %v183
    %v360 = vcvt.s32.f32 %v184
    %v361 = vcvt.s32.f32 %v185
    %v362 = vcvt.s32.f32 %v186
    %v363 = vcvt.s32.f32 %v187
    %v364 = vcvt.s32.f32 %v188
    %v365 = vcvt.s32.f32 %v189
    %v366 = vcvt.s32.f32 %v190
    %v367 = vcvt.s32.f32 %v191
    %v368 = vcvt.s32.f32 %v192
    %v369 = vcvt.s32.f32 %v193
    %v370 = vcvt.s32.f32 %v194
    %v371 = vcvt.s32.f32 %v195
    %v372 = vcvt.s32.f32 %v196
    %v373 = vcvt.s32.f32 %v197
    %v374 = vadd.f32 %v198, 0.5
    %v375 = vadd.f32 %v199, 0.5
    %v376 = vadd.f32 %v200, 0.5
    %v377 = vadd.f32 %v201, 0.5
    %v378 = vadd.f32 %v202, 0.5
    %v379 = vadd.f32 %v203, 0.5
    %v380 = vadd.f32 %v204, 0.5
    %v381 = vadd.f32 %v205, 0.5
    %v382 = vadd.f32 %v206, 0.5
    %v383 = vadd.f32 %v207, 0.5
    %v384 = vadd.f32 %v208, 0.5
    %v385 = vadd.f32 %v209, 0.5
    %v386 = vadd.f32 %v210, 0.5
    %v387 = vadd.f32 %v211, 0.5
    %v388 = vadd.f32 %v212, 0.5
    %v389 = vadd.f32 %v213, 0.5
    %v390 = vadd.f32 %v214, 0.5
    %v391 = vadd.f32 %v215, 0.5
    %v392 = vadd.f32 %v216, 0.5
    %v393 = vadd.f32 %v217, 0.5
    %v394 = vadd.f32 %v218, 0.5
    %v395 = vadd.f32 %v219, 0.5
    %v396 = vadd.f32 %v220, 0.5
    %v397 = vadd.f32 %v221, 0.5
    %v398 = vadd.f32 %v222, 0.5
    %v399 = vadd.f32 %v223, 0.5
    %v400 = vadd.f32 %v224, 0.5
    %v401 = vadd.f32 %v225, 0.5
    %v402 = vadd.f32 %v226, 0.5
    %v403 = vadd.f32 %v227, 0.5
    %v404 = vadd.f32 %v228, 0.5
    %v405 = vadd.f32 %v229, 0.5
    %v406 = vadd.f32 %v230, 0.5
    %v407 = vadd.f32 %v231, 0.5
    %v408 = vadd.f32 %v232, 0.5
    %v409 = vadd.f32 %v233, 0.5
    %v410 = vadd.f32 %v234, 0.5
    %v411 = vadd.f32 %v235, 0.5
    %v412 = vadd.f32 %v236, 0.5
    %v413 = vadd.f32 %v237, 0.5
    %v414 = vadd.f32 %v238, 0.5
    %v415 = vadd.f32 %v239, 0.5
    %v416 = vadd.f32 %v240, 0.5
    %v417 = vadd.f32 %v241, 0.5
    %v418 = vadd.f32 %v242, 0.5
    %v419 = vadd.f32 %v243, 0.5
    %v420 = vadd.f32 %v244, 0.5
    %v421 = vadd.f32 %v245, 0.5
    %v422 = vadd.f32 %v246, 0.5
    %v423 = vadd.f32 %v247, 0.5
    %v424 = vadd.f32 %v248, 0.5
    %v425 = vadd.f32 %v249, 0.5
    %v426 = vadd.f32 %v250, 0.5
    %v427 = vadd.f32 %v251, 0.5
    %v428 = vadd.f32 %v252, 0.5
    %v429 = vadd.f32 %v253, 0.5
    %v430 = vadd.f32 %v254, 0.5
    %v431 = vadd.f32 %v255, 0.5
    %v432 = vadd.f32 %v256, 0.5
    %v433 = vadd.f32 %v257, 0.5
    %v434 = vadd.f32 %v258, 0.5
    %v435 = vadd.f32 %v259, 0.5
    %v436 = vadd.f32 %v260, 0.5
    %v437 = vadd.f32 %v261, 0.5
    %v438 = vadd.f32 %v262, 0.5
    %v439 = vadd.f32 %v263, 0.5
    %v440 = vadd.f32 %v264, 0.5
    %v441 = vadd.f32 %v265, 0.5
    %v442 = vadd.f32 %v266, 0.5
    %v443 = vadd.f32 %v267, 0.5
    %v444 = vadd.f32 %v268, 0.5
    %v445 = vadd.f32 %v269, 0.5
    %v446 = vadd.f32 %v270, 0.5
    %v447 = vadd.f32 %v271, 0.5
    %v448 = vadd.f32 %v272, 0.5
    %v449 = vadd.f32 %v273, 0.5
    %v450 = vadd.f32 %v274, 0.5
    %v451 = vadd.f32 %v275, 0.5
    %v452 = vadd.f32 %v276, 0.5
    %v453 = vadd.f32 %v277, 0.5
    %v454 = vadd.f32 %v278, 0.5
    %v455 = vadd.f32 %v279, 0.5
    %v456 = vadd.f32 %v280, 0.5
    %v457 = vadd.f32 %v281, 0.5
    %v458 = vadd.f32 %v282, 0.5
    %v459 = vadd.f32 %v283, 0.5
    %v460 = vadd.f32 %v284, 0.5
    %v461 = vadd.f32 %v285, 0.5
    %v462 = vadd.f32 %v286, 0.5
    %v463 = vadd.f32 %v287, 0.5
    %v464 = vadd.f32 %v288, 0.5
    %v465 = vadd.f32 %v289, 0.5
    %v466 = vadd.f32 %v290, 0.5
    %v467 = vadd.f32 %v291, 0.5
    %v468 = vadd.f32 %v292, 0.5
    %v469 = vadd.f32 %v293, 0.5
    %v470 = vadd.f32 %v294, 0.5
    %v471 = vadd.f32 %v295, 0.5
    %v472 = vadd.f32 %v296, 0.5
    %v473 = vadd.f32 %v297, 0.5
    %v474 = vadd.f32 %v298, 0.5
    %v475 = vadd.f32 %v299, 0.5
    %v476 = vadd.f32 %v300, 0.5
    %v477 = vadd.f32 %v301, 0.5
    %v478 = vadd.f32 %v302, 0.5
    %v479 = vadd.f32 %v303, 0.5
    %v480 = vadd.f32 %v304, 0.5
    %v481 = vadd.f32 %v305, 0.5
    %v482 = vadd.f32 %v306, 0.5
    %v483 = vadd.f32 %v307, 0.5
    %v484 = vadd.f32 %v308, 0.5
    %v485 = vadd.f32 %v309, 0.5
    %v486 = vadd.f32 %v310, 0.5
    %v487 = vadd.f32 %v311, 0.5
    %v488 = vadd.f32 %v312, 0.5
    %v489 = vadd.f32 %v313, 0.5
    %v490 = vadd.f32 %v314, 0.5
    %v491 = vadd.f32 %v315, 0.5
    %v492 = vadd.f32 %v316, 0.5
    %v493 = vadd.f32 %v317, 0.5
    %v494 = vadd.f32 %v318, 0.5
    %v495 = vadd.f32 %v319, 0.5
    %v496 = vadd.f32 %v320, 0.5
    %v497 = vadd.f32 %v321, 0.5
    %v498 = vadd.f32 %v322, 0.5
    %v499 = vadd.f32 %v323, 0.5
    %v500 = vadd.f32 %v324, 0.5
    %v501 = vadd.f32 %v325, 0.5
    %v502 = vadd.f32 %v326, 0.5
    %v503 = vadd.f32 %v327, 0.5
    %v504 = vadd.f32 %v328, 0.5
    %v505 = vadd.f32 %v329, 0.5
    %v506 = vadd.f32 %v330, 0.5
    %v507 = vadd.f32 %v331, 0.5
    %v508 = vadd.f32 %v332, 0.5
    %v509 = vadd.f32 %v333, 0.5
    %v510 = vadd.f32 %v334, 0.5
    %v511 = vadd.f32 %v335, 0.5
    %v512 = vadd.f32 %v336, 0.5
    %v513 = vadd.f32 %v337, 0.5
    %v514 = vadd.f32 %v338, 0.5
    %v515 = vadd.f32 %v339, 0.5
    %v516 = vadd.f32 %v340, 0.5
    %v517 = vadd.f32 %v341, 0.5
    %v518 = vadd.f32 %v342, 0.5
    %v519 = vadd.f32 %v343, 0.5
    %v520 = vadd.f32 %v344, 0.5
    %v521 = vadd.f32 %v345, 0.5
    %v522 = vadd.f32 %v346, 0.5
    %v523 = vadd.f32 %v347, 0.5
    %v524 = vadd.f32 %v348, 0.5
    %v525 = vadd.f32 %v349, 0.5
    %v526 = vadd.f32 %v350, 0.5
    %v527 = vadd.f32 %v351, 0.5
    %v528 = vadd.f32 %v352, 0.5
    %v529 = vadd.f32 %v353, 0.5
    %v530 = vadd.f32 %v354, 0.5
    %v531 = vadd.f32 %v355, 0.5
    %v532 = vadd.f32 %v356, 0.5
    %v533 = vadd.f32 %v357, 0.5
    %v534 = vadd.f32 %v358, 0.5
    %v535 = vadd.f32 %v359, 0.5
    %v536 = vadd.f32 %v360, 0.5
    %v537 = vadd.f32 %v361, 0.5
    %v538 = vadd.f32 %v362, 0.5
    %v539 = vadd.f32 %v363, 0.5
    %v540 = vadd.f32 %v364, 0.5
    %v541 = vadd.f32 %v365, 0.5
    %v542 = vadd.f32 %v366, 0.5
    %v543 = vadd.f32 %v367, 0.5
    %v544 = vadd.f32 %v368, 0.5
    %v545 = vadd.f32 %v369, 0.5
    %v546 = vadd.f32 %v370, 0.5
    %v547 = vadd.f32 %v371, 0.5
    %v548 = vadd.f32 %v372, 0.5
    %v549 = vadd.f32 %v373, 0.5
    %v550 = vmul.f32 %v374, 0.006666667
    %v551 = vmul.f32 %v375, 0.006666667
    %v552 = vmul.f32 %v376, 0.006666667
    %v553 = vmul.f32 %v377, 0.006666667
    %v554 = vmul.f32 %v378, 0.006666667
    %v555 = vmul.f32 %v379, 0.006666667
    %v556 = vmul.f32 %v380, 0.006666667
    %v557 = vmul.f32 %v381, 0.006666667
    %v558 = vmul.f32 %v382, 0.006666667
    %v559 = vmul.f32 %v383, 0.006666667
    %v560 = vmul.f32 %v384, 0.006666667
    %v561 = vmul.f32 %v385, 0.006666667
    %v562 = vmul.f32 %v386, 0.006666667
    %v563 = vmul.f32 %v387, 0.006666667
    %v564 = vmul.f32 %v388, 0.006666667
    %v565 = vmul.f32 %v389, 0.006666667
    %v566 = vmul.f32 %v390, 0.006666667
    %v567 = vmul.f32 %v391, 0.006666667
    %v568 = vmul.f32 %v392, 0.006666667
    %v569 = vmul.f32 %v393, 0.006666667
    %v570 = vmul.f32 %v394, 0.006666667
    %v571 = vmul.f32 %v395, 0.006666667
    %v572 = vmul.f32 %v396, 0.006666667
    %v573 = vmul.f32 %v397, 0.006666667
    %v574 = vmul.f32 %v398, 0.006666667
    %v575 = vmul.f32 %v399, 0.006666667
    %v576 = vmul.f32 %v400, 0.006666667
    %v577 = vmul.f32 %v401, 0.006666667
    %v578 = vmul.f32 %v402, 0.006666667
    %v579 = vmul.f32 %v403, 0.006666667
    %v580 = vmul.f32 %v404, 0.006666667
    %v581 = vmul.f32 %v405, 0.006666667
    %v582 = vmul.f32 %v406, 0.006666667
    %v583 = vmul.f32 %v407, 0.006666667
    %v584 = vmul.f32 %v408, 0.006666667
    %v585 = vmul.f32 %v409, 0.006666667
    %v586 = vmul.f32 %v410, 0.006666667
    %v587 = vmul.f32 %v411, 0.006666667
    %v588 = vmul.f32 %v412, 0.006666667
    %v589 = vmul.f32 %v413, 0.006666667
    %v590 = vmul.f32 %v414, 0.006666667
    %v591 = vmul.f32 %v415, 0.006666667
    %v592 = vmul.f32 %v416, 0.006666667
    %v593 = vmul.f32 %v417, 0.006666667
    %v594 = vmul.f32 %v418, 0.006666667
    %v595 = vmul.f32 %v419, 0.006666667
    %v596 = vmul.f32 %v420, 0.006666667
    %v597 = vmul.f32 %v421, 0.006666667
    %v598 = vmul.f32 %v422, 0.006666667
    %v599 = vmul.f32 %v423, 0.006666667
    %v600 = vmul.f32 %v424, 0.006666667
    %v601 = vmul.f32 %v425, 0.006666667
    %v602 = vmul.f32 %v426, 0.006666667
    %v603 = vmul.f32 %v427, 0.006666667
    %v604 = vmul.f32 %v428, 0.006666667
    %v605 = vmul.f32 %v429, 0.006666667
    %v606 = vmul.f32 %v430, 0.006666667
    %v607 = vmul.f32 %v431, 0.006666667
    %v608 = vmul.f32 %v432, 0.006666667
    %v609 = vmul.f32 %v433, 0.006666667
    %v610 = vmul.f32 %v434, 0.006666667
    %v611 = vmul.f32 %v435, 0.006666667
    %v612 = vmul.f32 %v436, 0.006666667
    %v613 = vmul.f32 %v437, 0.006666667
    %v614 = vmul.f32 %v438, 0.006666667
    %v615 = vmul.f32 %v439, 0.006666667
    %v616 = vmul.f32 %v440, 0.006666667
    %v617 = vmul.f32 %v441, 0.006666667
    %v618 = vmul.f32 %v442, 0.006666667
    %v619 = vmul.f32 %v443, 0.006666667
    %v620 = vmul.f32 %v444, 0.006666667
    %v621 = vmul.f32 %v445, 0.006666667
    %v622 = vmul.f32 %v446, 0.006666667
    %v623 = vmul.f32 %v447, 0.006666667
    %v624 = vmul.f32 %v448, 0.006666667
    %v625 = vmul.f32 %v449, 0.006666667
    %v626 = vmul.f32 %v450, 0.006666667
    %v627 = vmul.f32 %v451, 0.006666667
    %v628 = vmul.f32 %v452, 0.006666667
    %v629 = vmul.f32 %v453, 0.006666667
    %v630 = vmul.f32 %v454, 0.006666667
    %v631 = vmul.f32 %v455, 0.006666667
    %v632 = vmul.f32 %v456, 0.006666667
    %v633 = vmul.f32 %v457, 0.006666667
    %v634 = vmul.f32 %v458, 0.006666667
    %v635 = vmul.f32 %v459, 0.006666667
    %v636 = vmul.f32 %v460, 0.006666667
    %v637 = vmul.f32 %v461, 0.006666667
    %v638 = vmul.f32 %v462, 0.006666667
    %v639 = vmul.f32 %v463, 0.006666667
    %v640 = vmul.f32 %v464, 0.006666667
    %v641 = vmul.f32 %v465, 0.006666667
    %v642 = vmul.f32 %v466, 0.006666667
    %v643 = vmul.f32 %v467, 0.006666667
    %v644 = vmul.f32 %v468, 0.006666667
    %v645 = vmul.f32 %v469, 0.006666667
    %v646 = vmul.f32 %v470, 0.006666667
    %v647 = vmul.f32 %v471, 0.006666667
    %v648 = vmul.f32 %v472, 0.006666667
    %v649 = vmul.f32 %v473, 0.006666667
    %v650 = vmul.f32 %v474, 0.006666667
    %v651 = vmul.f32 %v475, 0.006666667
    %v652 = vmul.f32 %v476, 0.006666667
    %v653 = vmul.f32 %v477, 0.006666667
    %v654 = vmul.f32 %v478, 0.006666667
    %v655 = vmul.f32 %v479, 0.006666667
    %v656 = vmul.f32 %v480, 0.006666667
    %v657 = vmul.f32 %v481, 0.006666667
    %v658 = vmul.f32 %v482, 0.006666667
    %v659 = vmul.f32 %v483, 0.006666667
    %v660 = vmul.f32 %v484, 0.006666667
    %v661 = vmul.f32 %v485, 0.006666667
    %v662 = vmul.f32 %v486, 0.006666667
    %v663 = vmul.f32 %v487, 0.006666667
    %v664 = vmul.f32 %v488, 0.006666667
    %v665 = vmul.f32 %v489, 0.006666667
    %v666 = vmul.f32 %v490, 0.006666667
    %v667 = vmul.f32 %v491, 0.006666667
    %v668 = vmul.f32 %v492, 0.006666667
    %v669 = vmul.f32 %v493, 0.006666667
    %v670 = vmul.f32 %v494, 0.006666667
    %v671 = vmul.f32 %v495, 0.006666667
    %v672 = vmul.f32 %v496, 0.006666667
    %v673 = vmul.f32 %v497, 0.006666667
    %v674 = vmul.f32 %v498, 0.006666667
    %v675 = vmul.f32 %v499, 0.006666667
    %v676 = vmul.f32 %v500, 0.006666667
    %v677 = vmul.f32 %v501, 0.006666667
    %v678 = vmul.f32 %v502, 0.006666667
    %v679 = vmul.f32 %v503, 0.006666667
    %v680 = vmul.f32 %v504, 0.006666667
    %v681 = vmul.f32 %v505, 0.006666667
    %v682 = vmul.f32 %v506, 0.006666667
    %v683 = vmul.f32 %v507, 0.006666667
    %v684 = vmul.f32 %v508, 0.006666667
    %v685 = vmul.f32 %v509, 0.006666667
    %v686 = vmul.f32 %v510, 0.006666667
    %v687 = vmul.f32 %v511, 0.006666667
    %v688 = vmul.f32 %v512, 0.006666667
    %v689 = vmul.f32 %v513, 0.006666667
    %v690 = vmul.f32 %v514, 0.006666667
    %v691 = vmul.f32 %v515, 0.006666667
    %v692 = vmul.f32 %v516, 0.006666667
    %v693 = vmul.f32 %v517, 0.006666667
    %v694 = vmul.f32 %v518, 0.006666667
    %v695 = vmul.f32 %v519, 0.006666667
    %v696 = vmul.f32 %v520, 0.006666667
    %v697 = vmul.f32 %v521, 0.006666667
    %v698 = vmul.f32 %v522, 0.006666667
    %v699 = vmul.f32 %v523, 0.006666667
    %v700 = vmul.f32 %v524, 0.006666667
    %v701 = vmul.f32 %v525, 0.006666667
    %v702 = vmul.f32 %v526, 0.006666667
    %v703 = vmul.f32 %v527, 0.006666667
    %v704 = vmul.f32 %v528, 0.006666667
    %v705 = vmul.f32 %v529, 0.006666667
    %v706 = vmul.f32 %v530, 0.006666667
    %v707 = vmul.f32 %v531, 0.006666667
    %v708 = vmul.f32 %v532, 0.006666667
    %v709 = vmul.f32 %v533, 0.006666667
    %v710 = vmul.f32 %v534, 0.006666667
    %v711 = vmul.f32 %v535, 0.006666667
    %v712 = vmul.f32 %v536, 0.006666667
    %v713 = vmul.f32 %v537, 0.006666667
    %v714 = vmul.f32 %v538, 0.006666667
    %v715 = vmul.f32 %v539, 0.006666667
    %v716 = vmul.f32 %v540, 0.006666667
    %v717 = vmul.f32 %v541, 0.006666667
    %v718 = vmul.f32 %v542, 0.006666667
    %v719 = vmul.f32 %v543, 0.006666667
    %v720 = vmul.f32 %v544, 0.006666667
    %v721 = vmul.f32 %v545, 0.006666667
    %v722 = vmul.f32 %v546, 0.006666667
    %v723 = vmul.f32 %v547, 0.006666667
    %v724 = vmul.f32 %v548, 0.006666667
    %v725 = vmul.f32 %v549, 0.006666667
    %v726 = vfloor.f32 %v550
    %v727 = vfloor.f32 %v551
    %v728 = vfloor.f32 %v552
    %v729 = vfloor.f32 %v553
    %v730 = vfloor.f32 %v554
    %v731 = vfloor.f32 %v555
    %v732 = vfloor.f32 %v556
    %v733 = vfloor.f32 %v557
    %v734 = vfloor.f32 %v558
    %v735 = vfloor.f32 %v559
    %v736 = vfloor.f32 %v560
    %v737 = vfloor.f32 %v561
    %v738 = vfloor.f32 %v562
    %v739 = vfloor.f32 %v563
    %v740 = vfloor.f32 %v564
    %v741 = vfloor.f32 %v565
    %v742 = vfloor.f32 %v566
    %v743 = vfloor.f32 %v567
    %v744 = vfloor.f32 %v568
    %v745 = vfloor.f32 %v569
    %v746 = vfloor.f32 %v570
    %v747 = vfloor.f32 %v571
    %v748 = vfloor.f32 %v572
    %v749 = vfloor.f32 %v573
    %v750 = vfloor.f32 %v574
    %v751 = vfloor.f32 %v575
    %v752 = vfloor.f32 %v576
    %v753 = vfloor.f32 %v577
    %v754 = vfloor.f32 %v578
    %v755 = vfloor.f32 %v579
    %v756 = vfloor.f32 %v580
    %v757 = vfloor.f32 %v581
    %v758 = vfloor.f32 %v582
    %v759 = vfloor.f32 %v583
    %v760 = vfloor.f32 %v584
    %v761 = vfloor.f32 %v585
    %v762 = vfloor.f32 %v586
    %v763 = vfloor.f32 %v587
    %v764 = vfloor.f32 %v588
    %v765 = vfloor.f32 %v589
    %v766 = vfloor.f32 %v590
    %v767 = vfloor.f32 %v591
    %v768 = vfloor.f32 %v592
    %v769 = vfloor.f32 %v593
    %v770 = vfloor.f32 %v594
    %v771 = vfloor.f32 %v595
    %v772 = vfloor.f32 %v596
    %v773 = vfloor.f32 %v597
    %v774 = vfloor.f32 %v598
    %v775 = vfloor.f32 %v599
    %v776 = vfloor.f32 %v600
    %v777 = vfloor.f32 %v601
    %v778 = vfloor.f32 %v602
    %v779 = vfloor.f32 %v603
    %v780 = vfloor.f32 %v604
    %v781 = vfloor.f32 %v605
    %v782 = vfloor.f32 %v606
    %v783 = vfloor.f32 %v607
    %v784 = vfloor.f32 %v608
    %v785 = vfloor.f32 %v609
    %v786 = vfloor.f32 %v610
    %v787 = vfloor.f32 %v611
    %v788 = vfloor.f32 %v612
    %v789 = vfloor.f32 %v613
    %v790 = vfloor.f32 %v614
    %v791 = vfloor.f32 %v615
    %v792 = vfloor.f32 %v616
    %v793 = vfloor.f32 %v617
    %v794 = vfloor.f32 %v618
    %v795 = vfloor.f32 %v619
    %v796 = vfloor.f32 %v620
    %v797 = vfloor.f32 %v621
    %v798 = vfloor.f32 %v622
    %v799 = vfloor.f32 %v623
    %v800 = vfloor.f32 %v624
    %v801 = vfloor.f32 %v625
    %v802 = vfloor.f32 %v626
    %v803 = vfloor.f32 %v627
    %v804 = vfloor.f32 %v628
    %v805 = vfloor.f32 %v629
    %v806 = vfloor.f32 %v630
    %v807 = vfloor.f32 %v631
    %v808 = vfloor.f32 %v632
    %v809 = vfloor.f32 %v633
    %v810 = vfloor.f32 %v634
    %v811 = vfloor.f32 %v635
    %v812 = vfloor.f32 %v636
    %v813 = vfloor.f32 %v637
    %v814 = vfloor.f32 %v638
    %v815 = vfloor.f32 %v639
    %v816 = vfloor.f32 %v640
    %v817 = vfloor.f32 %v641
    %v818 = vfloor.f32 %v642
    %v819 = vfloor.f32 %v643
    %v820 = vfloor.f32 %v644
    %v821 = vfloor.f32 %v645
    %v822 = vfloor.f32 %v646
    %v823 = vfloor.f32 %v647
    %v824 = vfloor.f32 %v648
    %v825 = vfloor.f32 %v649
    %v826 = vfloor.f32 %v650
    %v827 = vfloor.f32 %v651
    %v828 = vfloor.f32 %v652
    %v829 = vfloor.f32 %v653
    %v830 = vfloor.f32 %v654
    %v831 = vfloor.f32 %v655
    %v832 = vfloor.f32 %v656
    %v833 = vfloor.f32 %v657
    %v834 = vfloor.f32 %v658
    %v835 = vfloor.f32 %v659
    %v836 = vfloor.f32 %v660
    %v837 = vfloor.f32 %v661
    %v838 = vfloor.f32 %v662
    %v839 = vfloor.f32 %v663
    %v840 = vfloor.f32 %v664
    %v841 = vfloor.f32 %v665
    %v842 = vfloor.f32 %v666
    %v843 = vfloor.f32 %v667
    %v844 = vfloor.f32 %v668
    %v845 = vfloor.f32 %v669
    %v846 = vfloor.f32 %v670
    %v847 = vfloor.f32 %v671
    %v848 = vfloor.f32 %v672
    %v849 = vfloor.f32 %v673
    %v850 = vfloor.f32 %v674
    %v851 = vfloor.f32 %v675
    %v852 = vfloor.f32 %v676
    %v853 = vfloor.f32 %v677
    %v854 = vfloor.f32 %v678
    %v855 = vfloor.f32 %v679
    %v856 = vfloor.f32 %v680
    %v857 = vfloor.f32 %v681
    %v858 = vfloor.f32 %v682
    %v859 = vfloor.f32 %v683
    %v860 = vfloor.f32 %v684
    %v861 = vfloor.f32 %v685
    %v862 = vfloor.f32 %v686
    %v863 = vfloor.f32 %v687
    %v864 = vfloor.f32 %v688
    %v865 = vfloor.f32 %v689
    %v866 = vfloor.f32 %v690
    %v867 = vfloor.f32 %v691
    %v868 = vfloor.f32 %v692
    %v869 = vfloor.f32 %v693
    %v870 = vfloor.f32 %v694
    %v871 = vfloor.f32 %v695
    %v872 = vfloor.f32 %v696
    %v873 = vfloor.f32 %v697
    %v874 = vfloor.f32 %v698
    %v875 = vfloor.f32 %v699
    %v876 = vfloor.f32 %v700
    %v877 = vfloor.f32 %v701
    %v878 = vfloor.f32 %v702
    %v879 = vfloor.f32 %v703
    %v880 = vfloor.f32 %v704
    %v881 = vfloor.f32 %v705
    %v882 = vfloor.f32 %v706
    %v883 = vfloor.f32 %v707
    %v884 = vfloor.f32 %v708
    %v885 = vfloor.f32 %v709
    %v886 = vfloor.f32 %v710
    %v887 = vfloor.f32 %v711
    %v888 = vfloor.f32 %v712
    %v889 = vfloor.f32 %v713
    %v890 = vfloor.f32 %v714
    %v891 = vfloor.f32 %v715
    %v892 = vfloor.f32 %v716
    %v893 = vfloor.f32 %v717
    %v894 = vfloor.f32 %v718
    %v895 = vfloor.f32 %v719
    %v896 = vfloor.f32 %v720
    %v897 = vfloor.f32 %v721
    %v898 = vfloor.f32 %v722
    %v899 = vfloor.f32 %v723
    %v900 = vfloor.f32 %v724
    %v901 = vfloor.f32 %v725
    %v902 = vmul.f32 %v726, 150.0
    %v903 = vmul.f32 %v727, 150.0
    %v904 = vmul.f32 %v728, 150.0
    %v905 = vmul.f32 %v729, 150.0
    %v906 = vmul.f32 %v730, 150.0
    %v907 = vmul.f32 %v731, 150.0
    %v908 = vmul.f32 %v732, 150.0
    %v909 = vmul.f32 %v733, 150.0
    %v910 = vmul.f32 %v734, 150.0
    %v911 = vmul.f32 %v735, 150.0
    %v912 = vmul.f32 %v736, 150.0
    %v913 = vmul.f32 %v737, 150.0
    %v914 = vmul.f32 %v738, 150.0
    %v915 = vmul.f32 %v739, 150.0
    %v916 = vmul.f32 %v740, 150.0
    %v917 = vmul.f32 %v741, 150.0
    %v918 = vmul.f32 %v742, 150.0
    %v919 = vmul.f32 %v743, 150.0
    %v920 = vmul.f32 %v744, 150.0
    %v921 = vmul.f32 %v745, 150.0
    %v922 = vmul.f32 %v746, 150.0
    %v923 = vmul.f32 %v747, 150.0
    %v924 = vmul.f32 %v748, 150.0
    %v925 = vmul.f32 %v749, 150.0
    %v926 = vmul.f32 %v750, 150.0
    %v927 = vmul.f32 %v751, 150.0
    %v928 = vmul.f32 %v752, 150.0
    %v929 = vmul.f32 %v753, 150.0
    %v930 = vmul.f32 %v754, 150.0
    %v931 = vmul.f32 %v755, 150.0
    %v932 = vmul.f32 %v756, 150.0
    %v933 = vmul.f32 %v757, 150.0
    %v934 = vmul.f32 %v758, 150.0
    %v935 = vmul.f32 %v759, 150.0
    %v936 = vmul.f32 %v760, 150.0
    %v937 = vmul.f32 %v761, 150.0
    %v938 = vmul.f32 %v762, 150.0
    %v939 = vmul.f32 %v763, 150.0
    %v940 = vmul.f32 %v764, 150.0
    %v941 = vmul.f32 %v765, 150.0
    %v942 = vmul.f32 %v766, 150.0
    %v943 = vmul.f32 %v767, 150.0
    %v944 = vmul.f32 %v768, 150.0
    %v945 = vmul.f32 %v769, 150.0
    %v946 = vmul.f32 %v770, 150.0
    %v947 = vmul.f32 %v771, 150.0
    %v948 = vmul.f32 %v772, 150.0
    %v949 = vmul.f32 %v773, 150.0
    %v950 = vmul.f32 %v774, 150.0
    %v951 = vmul.f32 %v775, 150.0
    %v952 = vmul.f32 %v776, 150.0
    %v953 = vmul.f32 %v777, 150.0
    %v954 = vmul.f32 %v778, 150.0
    %v955 = vmul.f32 %v779, 150.0
    %v956 = vmul.f32 %v780, 150.0
    %v957 = vmul.f32 %v781, 150.0
    %v958 = vmul.f32 %v782, 150.0
    %v959 = vmul.f32 %v783, 150.0
    %v960 = vmul.f32 %v784, 150.0
    %v961 = vmul.f32 %v785, 150.0
    %v962 = vmul.f32 %v786, 150.0
    %v963 = vmul.f32 %v787, 150.0
    %v964 = vmul.f32 %v788, 150.0
    %v965 = vmul.f32 %v789, 150.0
    %v966 = vmul.f32 %v790, 150.0
    %v967 = vmul.f32 %v791, 150.0
    %v968 = vmul.f32 %v792, 150.0
    %v969 = vmul.f32 %v793, 150.0
    %v970 = vmul.f32 %v794, 150.0
    %v971 = vmul.f32 %v795, 150.0
    %v972 = vmul.f32 %v796, 150.0
    %v973 = vmul.f32 %v797, 150.0
    %v974 = vmul.f32 %v798, 150.0
    %v975 = vmul.f32 %v799, 150.0
    %v976 = vmul.f32 %v800, 150.0
    %v977 = vmul.f32 %v801, 150.0
    %v978 = vmul.f32 %v802, 150.0
    %v979 = vmul.f32 %v803, 150.0
    %v980 = vmul.f32 %v804, 150.0
    %v981 = vmul.f32 %v805, 150.0
    %v982 = vmul.f32 %v806, 150.0
    %v983 = vmul.f32 %v807, 150.0
    %v984 = vmul.f32 %v808, 150.0
    %v985 = vmul.f32 %v809, 150.0
    %v986 = vmul.f32 %v810, 150.0
    %v987 = vmul.f32 %v811, 150.0
    %v988 = vmul.f32 %v812, 150.0
    %v989 = vmul.f32 %v813, 150.0
    %v990 = vmul.f32 %v814, 150.0
    %v991 = vmul.f32 %v815, 150.0
    %v992 = vmul.f32 %v816, 150.0
    %v993 = vmul.f32 %v817, 150.0
    %v994 = vmul.f32 %v818, 150.0
    %v995 = vmul.f32 %v819, 150.0
    %v996 = vmul.f32 %v820, 150.0
    %v997 = vmul.f32 %v821, 150.0
    %v998 = vmul.f32 %v822, 150.0
    %v999 = vmul.f32 %v823, 150.0
    %v1000 = vmul.f32 %v824, 150.0
    %v1001 = vmul.f32 %v825, 150.0
    %v1002 = vmul.f32 %v826, 150.0
    %v1003 = vmul.f32 %v827, 150.0
    %v1004 = vmul.f32 %v828, 150.0
    %v1005 = vmul.f32 %v829, 150.0
    %v1006 = vmul.f32 %v830, 150.0
    %v1007 = vmul.f32 %v831, 150.0
    %v1008 = vmul.f32 %v832, 150.0
    %v1009 = vmul.f32 %v833, 150.0
    %v1010 = vmul.f32 %v834, 150.0
    %v1011 = vmul.f32 %v835, 150.0
    %v1012 = vmul.f32 %v836, 150.0
    %v1013 = vmul.f32 %v837, 150.0
    %v1014 = vmul.f32 %v838, 150.0
    %v1015 = vmul.f32 %v839, 150.0
    %v1016 = vmul.f32 %v840, 150.0
    %v1017 = vmul.f32 %v841, 150.0
    %v1018 = vmul.f32 %v842, 150.0
    %v1019 = vmul.f32 %v843, 150.0
    %v1020 = vmul.f32 %v844, 150.0
    %v1021 = vmul.f32 %v845, 150.0
    %v1022 = vmul.f32 %v846, 150.0
    %v1023 = vmul.f32 %v847, 150.0
    %v1024 = vmul.f32 %v848, 150.0
    %v1025 = vmul.f32 %v849, 150.0
    %v1026 = vmul.f32 %v850, 150.0
    %v1027 = vmul.f32 %v851, 150.0
    %v1028 = vmul.f32 %v852, 150.0
    %v1029 = vmul.f32 %v853, 150.0
    %v1030 = vmul.f32 %v854, 150.0
    %v1031 = vmul.f32 %v855, 150.0
    %v1032 = vmul.f32 %v856, 150.0
    %v1033 = vmul.f32 %v857, 150.0
    %v1034 = vmul.f32 %v858, 150.0
    %v1035 = vmul.f32 %v859, 150.0
    %v1036 = vmul.f32 %v860, 150.0
    %v1037 = vmul.f32 %v861, 150.0
    %v1038 = vmul.f32 %v862, 150.0
    %v1039 = vmul.f32 %v863, 150.0
    %v1040 = vmul.f32 %v864, 150.0
    %v1041 = vmul.f32 %v865, 150.0
    %v1042 = vmul.f32 %v866, 150.0
    %v1043 = vmul.f32 %v867, 150.0
    %v1044 = vmul.f32 %v868, 150.0
    %v1045 = vmul.f32 %v869, 150.0
    %v1046 = vmul.f32 %v870, 150.0
    %v1047 = vmul.f32 %v871, 150.0
    %v1048 = vmul.f32 %v872, 150.0
    %v1049 = vmul.f32 %v873, 150.0
    %v1050 = vmul.f32 %v874, 150.0
    %v1051 = vmul.f32 %v875, 150.0
    %v1052 = vmul.f32 %v876, 150.0
    %v1053 = vmul.f32 %v877, 150.0
    %v1054 = vmul.f32 %v878, 150.0
    %v1055 = vmul.f32 %v879, 150.0
    %v1056 = vmul.f32 %v880, 150.0
    %v1057 = vmul.f32 %v881, 150.0
    %v1058 = vmul.f32 %v882, 150.0
    %v1059 = vmul.f32 %v883, 150.0
    %v1060 = vmul.f32 %v884, 150.0
    %v1061 = vmul.f32 %v885, 150.0
    %v1062 = vmul.f32 %v886, 150.0
    %v1063 = vmul.f32 %v887, 150.0
    %v1064 = vmul.f32 %v888, 150.0
    %v1065 = vmul.f32 %v889, 150.0
    %v1066 = vmul.f32 %v890, 150.0
    %v1067 = vmul.f32 %v891, 150.0
    %v1068 = vmul.f32 %v892, 150.0
    %v1069 = vmul.f32 %v893, 150.0
    %v1070 = vmul.f32 %v894, 150.0
    %v1071 = vmul.f32 %v895, 150.0
    %v1072 = vmul.f32 %v896, 150.0
    %v1073 = vmul.f32 %v897, 150.0
    %v1074 = vmul.f32 %v898, 150.0
    %v1075 = vmul.f32 %v899, 150.0
    %v1076 = vmul.f32 %v900, 150.0
    %v1077 = vmul.f32 %v901, 150.0
    %v1078 = vsub.f32 %v198, %v902
    %v1079 = vsub.f32 %v199, %v903
    %v1080 = vsub.f32 %v200, %v904
    %v1081 = vsub.f32 %v201, %v905
    %v1082 = vsub.f32 %v202, %v906
    %v1083 = vsub.f32 %v203, %v907
    %v1084 = vsub.f32 %v204, %v908
    %v1085 = vsub.f32 %v205, %v909
    %v1086 = vsub.f32 %v206, %v910
    %v1087 = vsub.f32 %v207, %v911
    %v1088 = vsub.f32 %v208, %v912
    %v1089 = vsub.f32 %v209, %v913
    %v1090 = vsub.f32 %v210, %v914
    %v1091 = vsub.f32 %v211, %v915
    %v1092 = vsub.f32 %v212, %v916
    %v1093 = vsub.f32 %v213, %v917
    %v1094 = vsub.f32 %v214, %v918
    %v1095 = vsub.f32 %v215, %v919
    %v1096 = vsub.f32 %v216, %v920
    %v1097 = vsub.f32 %v217, %v921
    %v1098 = vsub.f32 %v218, %v922
    %v1099 = vsub.f32 %v219, %v923
    %v1100 = vsub.f32 %v220, %v924
    %v1101 = vsub.f32 %v221, %v925
    %v1102 = vsub.f32 %v222, %v926
    %v1103 = vsub.f32 %v223, %v927
    %v1104 = vsub.f32 %v224, %v928
    %v1105 = vsub.f32 %v225, %v929
    %v1106 = vsub.f32 %v226, %v930
    %v1107 = vsub.f32 %v227, %v931
    %v1108 = vsub.f32 %v228, %v932
    %v1109 = vsub.f32 %v229, %v933
    %v1110 = vsub.f32 %v230, %v934
    %v1111 = vsub.f32 %v231, %v935
    %v1112 = vsub.f32 %v232, %v936
    %v1113 = vsub.f32 %v233, %v937
    %v1114 = vsub.f32 %v234, %v938
    %v1115 = vsub.f32 %v235, %v939
    %v1116 = vsub.f32 %v236, %v940
    %v1117 = vsub.f32 %v237, %v941
    %v1118 = vsub.f32 %v238, %v942
    %v1119 = vsub.f32 %v239, %v943
    %v1120 = vsub.f32 %v240, %v944
    %v1121 = vsub.f32 %v241, %v945
    %v1122 = vsub.f32 %v242, %v946
    %v1123 = vsub.f32 %v243, %v947
    %v1124 = vsub.f32 %v244, %v948
    %v1125 = vsub.f32 %v245, %v949
    %v1126 = vsub.f32 %v246, %v950
    %v1127 = vsub.f32 %v247, %v951
    %v1128 = vsub.f32 %v248, %v952
    %v1129 = vsub.f32 %v249, %v953
    %v1130 = vsub.f32 %v250, %v954
    %v1131 = vsub.f32 %v251, %v955
    %v1132 = vsub.f32 %v252, %v956
    %v1133 = vsub.f32 %v253, %v957
    %v1134 = vsub.f32 %v254, %v958
    %v1135 = vsub.f32 %v255, %v959
    %v1136 = vsub.f32 %v256, %v960
    %v1137 = vsub.f32 %v257, %v961
    %v1138 = vsub.f32 %v258, %v962
    %v1139 = vsub.f32 %v259, %v963
    %v1140 = vsub.f32 %v260, %v964
    %v1141 = vsub.f32 %v261, %v965
    %v1142 = vsub.f32 %v262, %v966
    %v1143 = vsub.f32 %v263, %v967
    %v1144 = vsub.f32 %v264, %v968
    %v1145 = vsub.f32 %v265, %v969
    %v1146 = vsub.f32 %v266, %v970
    %v1147 = vsub.f32 %v267, %v971
    %v1148 = vsub.f32 %v268, %v972
    %v1149 = vsub.f32 %v269, %v973
    %v1150 = vsub.f32 %v270, %v974
    %v1151 = vsub.f32 %v271, %v975
    %v1152 = vsub.f32 %v272, %v976
    %v1153 = vsub.f32 %v273, %v977
    %v1154 = vsub.f32 %v274, %v978
    %v1155 = vsub.f32 %v275, %v979
    %v1156 = vsub.f32 %v276, %v980
    %v1157 = vsub.f32 %v277, %v981
    %v1158 = vsub.f32 %v278, %v982
    %v1159 = vsub.f32 %v279, %v983
    %v1160 = vsub.f32 %v280, %v984
    %v1161 = vsub.f32 %v281, %v985
    %v1162 = vsub.f32 %v282, %v986
    %v1163 = vsub.f32 %v283, %v987
    %v1164 = vsub.f32 %v284, %v988
    %v1165 = vsub.f32 %v285, %v989
    %v1166 = vsub.f32 %v286, %v990
    %v1167 = vsub.f32 %v287, %v991
    %v1168 = vsub.f32 %v288, %v992
    %v1169 = vsub.f32 %v289, %v993
    %v1170 = vsub.f32 %v290, %v994
    %v1171 = vsub.f32 %v291, %v995
    %v1172 = vsub.f32 %v292, %v996
    %v1173 = vsub.f32 %v293, %v997
    %v1174 = vsub.f32 %v294, %v998
    %v1175 = vsub.f32 %v295, %v999
    %v1176 = vsub.f32 %v296, %v1000
    %v1177 = vsub.f32 %v297, %v1001
    %v1178 = vsub.f32 %v298, %v1002
    %v1179 = vsub.f32 %v299, %v1003
    %v1180 = vsub.f32 %v300, %v1004
    %v1181 = vsub.f32 %v301, %v1005
    %v1182 = vsub.f32 %v302, %v1006
    %v1183 = vsub.f32 %v303, %v1007
    %v1184 = vsub.f32 %v304, %v1008
    %v1185 = vsub.f32 %v305, %v1009
    %v1186 = vsub.f32 %v306, %v1010
    %v1187 = vsub.f32 %v307, %v1011
    %v1188 = vsub.f32 %v308, %v1012
    %v1189 = vsub.f32 %v309, %v1013
    %v1190 = vsub.f32 %v310, %v1014
    %v1191 = vsub.f32 %v311, %v1015
    %v1192 = vsub.f32 %v312, %v1016
    %v1193 = vsub.f32 %v313, %v1017
    %v1194 = vsub.f32 %v314, %v1018
    %v1195 = vsub.f32 %v315, %v1019
    %v1196 = vsub.f32 %v316, %v1020
    %v1197 = vsub.f32 %v317, %v1021
    %v1198 = vsub.f32 %v318, %v1022
    %v1199 = vsub.f32 %v319, %v1023
    %v1200 = vsub.f32 %v320, %v1024
    %v1201 = vsub.f32 %v321, %v1025
    %v1202 = vsub.f32 %v322, %v1026
    %v1203 = vsub.f32 %v323, %v1027
    %v1204 = vsub.f32 %v324, %v1028
    %v1205 = vsub.f32 %v325, %v1029
    %v1206 = vsub.f32 %v326, %v1030
    %v1207 = vsub.f32 %v327, %v1031
    %v1208 = vsub.f32 %v328, %v1032
    %v1209 = vsub.f32 %v329, %v1033
    %v1210 = vsub.f32 %v330, %v1034
    %v1211 = vsub.f32 %v331, %v1035
    %v1212 = vsub.f32 %v332, %v1036
    %v1213 = vsub.f32 %v333, %v1037
    %v1214 = vsub.f32 %v334, %v1038
    %v1215 = vsub.f32 %v335, %v1039
    %v1216 = vsub.f32 %v336, %v1040
    %v1217 = vsub.f32 %v337, %v1041
    %v1218 = vsub.f32 %v338, %v1042
    %v1219 = vsub.f32 %v339, %v1043
    %v1220 = vsub.f32 %v340, %v1044
    %v1221 = vsub.f32 %v341, %v1045
    %v1222 = vsub.f32 %v342, %v1046
    %v1223 = vsub.f32 %v343, %v1047
    %v1224 = vsub.f32 %v344, %v1048
    %v1225 = vsub.f32 %v345, %v1049
    %v1226 = vsub.f32 %v346, %v1050
    %v1227 = vsub.f32 %v347, %v1051
    %v1228 = vsub.f32 %v348, %v1052
    %v1229 = vsub.f32 %v349, %v1053
    %v1230 = vsub.f32 %v350, %v1054
    %v1231 = vsub.f32 %v351, %v1055
    %v1232 = vsub.f32 %v352, %v1056
    %v1233 = vsub.f32 %v353, %v1057
    %v1234 = vsub.f32 %v354, %v1058
    %v1235 = vsub.f32 %v355, %v1059
    %v1236 = vsub.f32 %v356, %v1060
    %v1237 = vsub.f32 %v357, %v1061
    %v1238 = vsub.f32 %v358, %v1062
    %v1239 = vsub.f32 %v359, %v1063
    %v1240 = vsub.f32 %v360, %v1064
    %v1241 = vsub.f32 %v361, %v1065
    %v1242 = vsub.f32 %v362, %v1066
    %v1243 = vsub.f32 %v363, %v1067
    %v1244 = vsub.f32 %v364, %v1068
    %v1245 = vsub.f32 %v365, %v1069
    %v1246 = vsub.f32 %v366, %v1070
    %v1247 = vsub.f32 %v367, %v1071
    %v1248 = vsub.f32 %v368, %v1072
    %v1249 = vsub.f32 %v369, %v1073
    %v1250 = vsub.f32 %v370, %v1074
    %v1251 = vsub.f32 %v371, %v1075
    %v1252 = vsub.f32 %v372, %v1076
    %v1253 = vsub.f32 %v373, %v1077
    %v1254 = vsub.f32 %v1078, 74.5
    %v1255 = vsub.f32 %v1079, 74.5
    %v1256 = vsub.f32 %v1080, 74.5
    %v1257 = vsub.f32 %v1081, 74.5
    %v1258 = vsub.f32 %v1082, 74.5
    %v1259 = vsub.f32 %v1083, 74.5
    %v1260 = vsub.f32 %v1084, 74.5
    %v1261 = vsub.f32 %v1085, 74.5
    %v1262 = vsub.f32 %v1086, 74.5
    %v1263 = vsub.f32 %v1087, 74.5
    %v1264 = vsub.f32 %v1088, 74.5
    %v1265 = vsub.f32 %v1089, 74.5
    %v1266 = vsub.f32 %v1090, 74.5
    %v1267 = vsub.f32 %v1091, 74.5
    %v1268 = vsub.f32 %v1092, 74.5
    %v1269 = vsub.f32 %v1093, 74.5
    %v1270 = vsub.f32 %v1094, 74.5
    %v1271 = vsub.f32 %v1095, 74.5
    %v1272 = vsub.f32 %v1096, 74.5
    %v1273 = vsub.f32 %v1097, 74.5
    %v1274 = vsub.f32 %v1098, 74.5
    %v1275 = vsub.f32 %v1099, 74.5
    %v1276 = vsub.f32 %v1100, 74.5
    %v1277 = vsub.f32 %v1101, 74.5
    %v1278 = vsub.f32 %v1102, 74.5
    %v1279 = vsub.f32 %v1103, 74.5
    %v1280 = vsub.f32 %v1104, 74.5
    %v1281 = vsub.f32 %v1105, 74.5
    %v1282 = vsub.f32 %v1106, 74.5
    %v1283 = vsub.f32 %v1107, 74.5
    %v1284 = vsub.f32 %v1108, 74.5
    %v1285 = vsub.f32 %v1109, 74.5
    %v1286 = vsub.f32 %v1110, 74.5
    %v1287 = vsub.f32 %v1111, 74.5
    %v1288 = vsub.f32 %v1112, 74.5
    %v1289 = vsub.f32 %v1113, 74.5
    %v1290 = vsub.f32 %v1114, 74.5
    %v1291 = vsub.f32 %v1115, 74.5
    %v1292 = vsub.f32 %v1116, 74.5
    %v1293 = vsub.f32 %v1117, 74.5
    %v1294 = vsub.f32 %v1118, 74.5
    %v1295 = vsub.f32 %v1119, 74.5
    %v1296 = vsub.f32 %v1120, 74.5
    %v1297 = vsub.f32 %v1121, 74.5
    %v1298 = vsub.f32 %v1122, 74.5
    %v1299 = vsub.f32 %v1123, 74.5
    %v1300 = vsub.f32 %v1124, 74.5
    %v1301 = vsub.f32 %v1125, 74.5
    %v1302 = vsub.f32 %v1126, 74.5
    %v1303 = vsub.f32 %v1127, 74.5
    %v1304 = vsub.f32 %v1128, 74.5
    %v1305 = vsub.f32 %v1129, 74.5
    %v1306 = vsub.f32 %v1130, 74.5
    %v1307 = vsub.f32 %v1131, 74.5
    %v1308 = vsub.f32 %v1132, 74.5
    %v1309 = vsub.f32 %v1133, 74.5
    %v1310 = vsub.f32 %v1134, 74.5
    %v1311 = vsub.f32 %v1135, 74.5
    %v1312 = vsub.f32 %v1136, 74.5
    %v1313 = vsub.f32 %v1137, 74.5
    %v1314 = vsub.f32 %v1138, 74.5
    %v1315 = vsub.f32 %v1139, 74.5
    %v1316 = vsub.f32 %v1140, 74.5
    %v1317 = vsub.f32 %v1141, 74.5
    %v1318 = vsub.f32 %v1142, 74.5
    %v1319 = vsub.f32 %v1143, 74.5
    %v1320 = vsub.f32 %v1144, 74.5
    %v1321 = vsub.f32 %v1145, 74.5
    %v1322 = vsub.f32 %v1146, 74.5
    %v1323 = vsub.f32 %v1147, 74.5
    %v1324 = vsub.f32 %v1148, 74.5
    %v1325 = vsub.f32 %v1149, 74.5
    %v1326 = vsub.f32 %v1150, 74.5
    %v1327 = vsub.f32 %v1151, 74.5
    %v1328 = vsub.f32 %v1152, 74.5
    %v1329 = vsub.f32 %v1153, 74.5
    %v1330 = vsub.f32 %v1154, 74.5
    %v1331 = vsub.f32 %v1155, 74.5
    %v1332 = vsub.f32 %v1156, 74.5
    %v1333 = vsub.f32 %v1157, 74.5
    %v1334 = vsub.f32 %v1158, 74.5
    %v1335 = vsub.f32 %v1159, 74.5
    %v1336 = vsub.f32 %v1160, 74.5
    %v1337 = vsub.f32 %v1161, 74.5
    %v1338 = vsub.f32 %v1162, 74.5
    %v1339 = vsub.f32 %v1163, 74.5
    %v1340 = vsub.f32 %v1164, 74.5
    %v1341 = vsub.f32 %v1165, 74.5
    %v1342 = vsub.f32 %v1166, 74.5
    %v1343 = vsub.f32 %v1167, 74.5
    %v1344 = vsub.f32 %v1168, 74.5
    %v1345 = vsub.f32 %v1169, 74.5
    %v1346 = vsub.f32 %v1170, 74.5
    %v1347 = vsub.f32 %v1171, 74.5
    %v1348 = vsub.f32 %v1172, 74.5
    %v1349 = vsub.f32 %v1173, 74.5
    %v1350 = vsub.f32 %v1174, 74.5
    %v1351 = vsub.f32 %v1175, 74.5
    %v1352 = vsub.f32 %v1176, 74.5
    %v1353 = vsub.f32 %v1177, 74.5
    %v1354 = vsub.f32 %v1178, 74.5
    %v1355 = vsub.f32 %v1179, 74.5
    %v1356 = vsub.f32 %v1180, 74.5
    %v1357 = vsub.f32 %v1181, 74.5
    %v1358 = vsub.f32 %v1182, 74.5
    %v1359 = vsub.f32 %v1183, 74.5
    %v1360 = vsub.f32 %v1184, 74.5
    %v1361 = vsub.f32 %v1185, 74.5
    %v1362 = vsub.f32 %v1186, 74.5
    %v1363 = vsub.f32 %v1187, 74.5
    %v1364 = vsub.f32 %v1188, 74.5
    %v1365 = vsub.f32 %v1189, 74.5
    %v1366 = vsub.f32 %v1190, 74.5
    %v1367 = vsub.f32 %v1191, 74.5
    %v1368 = vsub.f32 %v1192, 74.5
    %v1369 = vsub.f32 %v1193, 74.5
    %v1370 = vsub.f32 %v1194, 74.5
    %v1371 = vsub.f32 %v1195, 74.5
    %v1372 = vsub.f32 %v1196, 74.5
    %v1373 = vsub.f32 %v1197, 74.5
    %v1374 = vsub.f32 %v1198, 74.5
    %v1375 = vsub.f32 %v1199, 74.5
    %v1376 = vsub.f32 %v1200, 74.5
    %v1377 = vsub.f32 %v1201, 74.5
    %v1378 = vsub.f32 %v1202, 74.5
    %v1379 = vsub.f32 %v1203, 74.5
    %v1380 = vsub.f32 %v1204, 74.5
    %v1381 = vsub.f32 %v1205, 74.5
    %v1382 = vsub.f32 %v1206, 74.5
    %v1383 = vsub.f32 %v1207, 74.5
    %v1384 = vsub.f32 %v1208, 74.5
    %v1385 = vsub.f32 %v1209, 74.5
    %v1386 = vsub.f32 %v1210, 74.5
    %v1387 = vsub.f32 %v1211, 74.5
    %v1388 = vsub.f32 %v1212, 74.5
    %v1389 = vsub.f32 %v1213, 74.5
    %v1390 = vsub.f32 %v1214, 74.5
    %v1391 = vsub.f32 %v1215, 74.5
    %v1392 = vsub.f32 %v1216, 74.5
    %v1393 = vsub.f32 %v1217, 74.5
    %v1394 = vsub.f32 %v1218, 74.5
    %v1395 = vsub.f32 %v1219, 74.5
    %v1396 = vsub.f32 %v1220, 74.5
    %v1397 = vsub.f32 %v1221, 74.5
    %v1398 = vsub.f32 %v1222, 74.5
    %v1399 = vsub.f32 %v1223, 74.5
    %v1400 = vsub.f32 %v1224, 74.5
    %v1401 = vsub.f32 %v1225, 74.5
    %v1402 = vsub.f32 %v1226, 74.5
    %v1403 = vsub.f32 %v1227, 74.5
    %v1404 = vsub.f32 %v1228, 74.5
    %v1405 = vsub.f32 %v1229, 74.5
    %v1406 = vsub.f32 %v1230, 74.5
    %v1407 = vsub.f32 %v1231, 74.5
    %v1408 = vsub.f32 %v1232, 74.5
    %v1409 = vsub.f32 %v1233, 74.5
    %v1410 = vsub.f32 %v1234, 74.5
    %v1411 = vsub.f32 %v1235, 74.5
    %v1412 = vsub.f32 %v1236, 74.5
    %v1413 = vsub.f32 %v1237, 74.5
    %v1414 = vsub.f32 %v1238, 74.5
    %v1415 = vsub.f32 %v1239, 74.5
    %v1416 = vsub.f32 %v1240, 74.5
    %v1417 = vsub.f32 %v1241, 74.5
    %v1418 = vsub.f32 %v1242, 74.5
    %v1419 = vsub.f32 %v1243, 74.5
    %v1420 = vsub.f32 %v1244, 74.5
    %v1421 = vsub.f32 %v1245, 74.5
    %v1422 = vsub.f32 %v1246, 74.5
    %v1423 = vsub.f32 %v1247, 74.5
    %v1424 = vsub.f32 %v1248, 74.5
    %v1425 = vsub.f32 %v1249, 74.5
    %v1426 = vsub.f32 %v1250, 74.5
    %v1427 = vsub.f32 %v1251, 74.5
    %v1428 = vsub.f32 %v1252, 74.5
    %v1429 = vsub.f32 %v1253, 74.5
    %v1430 = vmul.f32 %v1254, 0.013422819
    %v1431 = vmul.f32 %v1255, 0.013422819
    %v1432 = vmul.f32 %v1256, 0.013422819
    %v1433 = vmul.f32 %v1257, 0.013422819
    %v1434 = vmul.f32 %v1258, 0.013422819
    %v1435 = vmul.f32 %v1259, 0.013422819
    %v1436 = vmul.f32 %v1260, 0.013422819
    %v1437 = vmul.f32 %v1261, 0.013422819
    %v1438 = vmul.f32 %v1262, 0.013422819
    %v1439 = vmul.f32 %v1263, 0.013422819
    %v1440 = vmul.f32 %v1264, 0.013422819
    %v1441 = vmul.f32 %v1265, 0.013422819
    %v1442 = vmul.f32 %v1266, 0.013422819
    %v1443 = vmul.f32 %v1267, 0.013422819
    %v1444 = vmul.f32 %v1268, 0.013422819
    %v1445 = vmul.f32 %v1269, 0.013422819
    %v1446 = vmul.f32 %v1270, 0.013422819
    %v1447 = vmul.f32 %v1271, 0.013422819
    %v1448 = vmul.f32 %v1272, 0.013422819
    %v1449 = vmul.f32 %v1273, 0.013422819
    %v1450 = vmul.f32 %v1274, 0.013422819
    %v1451 = vmul.f32 %v1275, 0.013422819
    %v1452 = vmul.f32 %v1276, 0.013422819
    %v1453 = vmul.f32 %v1277, 0.013422819
    %v1454 = vmul.f32 %v1278, 0.013422819
    %v1455 = vmul.f32 %v1279, 0.013422819
    %v1456 = vmul.f32 %v1280, 0.013422819
    %v1457 = vmul.f32 %v1281, 0.013422819
    %v1458 = vmul.f32 %v1282, 0.013422819
    %v1459 = vmul.f32 %v1283, 0.013422819
    %v1460 = vmul.f32 %v1284, 0.013422819
    %v1461 = vmul.f32 %v1285, 0.013422819
    %v1462 = vmul.f32 %v1286, 0.013422819
    %v1463 = vmul.f32 %v1287, 0.013422819
    %v1464 = vmul.f32 %v1288, 0.013422819
    %v1465 = vmul.f32 %v1289, 0.013422819
    %v1466 = vmul.f32 %v1290, 0.013422819
    %v1467 = vmul.f32 %v1291, 0.013422819
    %v1468 = vmul.f32 %v1292, 0.013422819
    %v1469 = vmul.f32 %v1293, 0.013422819
    %v1470 = vmul.f32 %v1294, 0.013422819
    %v1471 = vmul.f32 %v1295, 0.013422819
    %v1472 = vmul.f32 %v1296, 0.013422819
    %v1473 = vmul.f32 %v1297, 0.013422819
    %v1474 = vmul.f32 %v1298, 0.013422819
    %v1475 = vmul.f32 %v1299, 0.013422819
    %v1476 = vmul.f32 %v1300, 0.013422819
    %v1477 = vmul.f32 %v1301, 0.013422819
    %v1478 = vmul.f32 %v1302, 0.013422819
    %v1479 = vmul.f32 %v1303, 0.013422819
    %v1480 = vmul.f32 %v1304, 0.013422819
    %v1481 = vmul.f32 %v1305, 0.013422819
    %v1482 = vmul.f32 %v1306, 0.013422819
    %v1483 = vmul.f32 %v1307, 0.013422819
    %v1484 = vmul.f32 %v1308, 0.013422819
    %v1485 = vmul.f32 %v1309, 0.013422819
    %v1486 = vmul.f32 %v1310, 0.013422819
    %v1487 = vmul.f32 %v1311, 0.013422819
    %v1488 = vmul.f32 %v1312, 0.013422819
    %v1489 = vmul.f32 %v1313, 0.013422819
    %v1490 = vmul.f32 %v1314, 0.013422819
    %v1491 = vmul.f32 %v1315, 0.013422819
    %v1492 = vmul.f32 %v1316, 0.013422819
    %v1493 = vmul.f32 %v1317, 0.013422819
    %v1494 = vmul.f32 %v1318, 0.013422819
    %v1495 = vmul.f32 %v1319, 0.013422819
    %v1496 = vmul.f32 %v1320, 0.013422819
    %v1497 = vmul.f32 %v1321, 0.013422819
    %v1498 = vmul.f32 %v1322, 0.013422819
    %v1499 = vmul.f32 %v1323, 0.013422819
    %v1500 = vmul.f32 %v1324, 0.013422819
    %v1501 = vmul.f32 %v1325, 0.013422819
    %v1502 = vmul.f32 %v1326, 0.013422819
    %v1503 = vmul.f32 %v1327, 0.013422819
    %v1504 = vmul.f32 %v1328, 0.013422819
    %v1505 = vmul.f32 %v1329, 0.013422819
    %v1506 = vmul.f32 %v1330, 0.013422819
    %v1507 = vmul.f32 %v1331, 0.013422819
    %v1508 = vmul.f32 %v1332, 0.013422819
    %v1509 = vmul.f32 %v1333, 0.013422819
    %v1510 = vmul.f32 %v1334, 0.013422819
    %v1511 = vmul.f32 %v1335, 0.013422819
    %v1512 = vmul.f32 %v1336, 0.013422819
    %v1513 = vmul.f32 %v1337, 0.013422819
    %v1514 = vmul.f32 %v1338, 0.013422819
    %v1515 = vmul.f32 %v1339, 0.013422819
    %v1516 = vmul.f32 %v1340, 0.013422819
    %v1517 = vmul.f32 %v1341, 0.013422819
    %v1518 = vmul.f32 %v1342, 0.013422819
    %v1519 = vmul.f32 %v1343, 0.013422819
    %v1520 = vmul.f32 %v1344, 0.013422819
    %v1521 = vmul.f32 %v1345, 0.013422819
    %v1522 = vmul.f32 %v1346, 0.013422819
    %v1523 = vmul.f32 %v1347, 0.013422819
    %v1524 = vmul.f32 %v1348, 0.013422819
    %v1525 = vmul.f32 %v1349, 0.013422819
    %v1526 = vmul.f32 %v1350, 0.013422819
    %v1527 = vmul.f32 %v1351, 0.013422819
    %v1528 = vmul.f32 %v1352, 0.013422819
    %v1529 = vmul.f32 %v1353, 0.013422819
    %v1530 = vmul.f32 %v1354, 0.013422819
    %v1531 = vmul.f32 %v1355, 0.013422819
    %v1532 = vmul.f32 %v1356, 0.013422819
    %v1533 = vmul.f32 %v1357, 0.013422819
    %v1534 = vmul.f32 %v1358, 0.013422819
    %v1535 = vmul.f32 %v1359, 0.013422819
    %v1536 = vmul.f32 %v1360, 0.013422819
    %v1537 = vmul.f32 %v1361, 0.013422819
    %v1538 = vmul.f32 %v1362, 0.013422819
    %v1539 = vmul.f32 %v1363, 0.013422819
    %v1540 = vmul.f32 %v1364, 0.013422819
    %v1541 = vmul.f32 %v1365, 0.013422819
    %v1542 = vmul.f32 %v1366, 0.013422819
    %v1543 = vmul.f32 %v1367, 0.013422819
    %v1544 = vmul.f32 %v1368, 0.013422819
    %v1545 = vmul.f32 %v1369, 0.013422819
    %v1546 = vmul.f32 %v1370, 0.013422819
    %v1547 = vmul.f32 %v1371, 0.013422819
    %v1548 = vmul.f32 %v1372, 0.013422819
    %v1549 = vmul.f32 %v1373, 0.013422819
    %v1550 = vmul.f32 %v1374, 0.013422819
    %v1551 = vmul.f32 %v1375, 0.013422819
    %v1552 = vmul.f32 %v1376, 0.013422819
    %v1553 = vmul.f32 %v1377, 0.013422819
    %v1554 = vmul.f32 %v1378, 0.013422819
    %v1555 = vmul.f32 %v1379, 0.013422819
    %v1556 = vmul.f32 %v1380, 0.013422819
    %v1557 = vmul.f32 %v1381, 0.013422819
    %v1558 = vmul.f32 %v1382, 0.013422819
    %v1559 = vmul.f32 %v1383, 0.013422819
    %v1560 = vmul.f32 %v1384, 0.013422819
    %v1561 = vmul.f32 %v1385, 0.013422819
    %v1562 = vmul.f32 %v1386, 0.013422819
    %v1563 = vmul.f32 %v1387, 0.013422819
    %v1564 = vmul.f32 %v1388, 0.013422819
    %v1565 = vmul.f32 %v1389, 0.013422819
    %v1566 = vmul.f32 %v1390, 0.013422819
    %v1567 = vmul.f32 %v1391, 0.013422819
    %v1568 = vmul.f32 %v1392, 0.013422819
    %v1569 = vmul.f32 %v1393, 0.013422819
    %v1570 = vmul.f32 %v1394, 0.013422819
    %v1571 = vmul.f32 %v1395, 0.013422819
    %v1572 = vmul.f32 %v1396, 0.013422819
    %v1573 = vmul.f32 %v1397, 0.013422819
    %v1574 = vmul.f32 %v1398, 0.013422819
    %v1575 = vmul.f32 %v1399, 0.013422819
    %v1576 = vmul.f32 %v1400, 0.013422819
    %v1577 = vmul.f32 %v1401, 0.013422819
    %v1578 = vmul.f32 %v1402, 0.013422819
    %v1579 = vmul.f32 %v1403, 0.013422819
    %v1580 = vmul.f32 %v1404, 0.013422819
    %v1581 = vmul.f32 %v1405, 0.013422819
    %v1582 = vmul.f32 %v1406, 0.013422819
    %v1583 = vmul.f32 %v1407, 0.013422819
    %v1584 = vmul.f32 %v1408, 0.013422819
    %v1585 = vmul.f32 %v1409, 0.013422819
    %v1586 = vmul.f32 %v1410, 0.013422819
    %v1587 = vmul.f32 %v1411, 0.013422819
    %v1588 = vmul.f32 %v1412, 0.013422819
    %v1589 = vmul.f32 %v1413, 0.013422819
    %v1590 = vmul.f32 %v1414, 0.013422819
    %v1591 = vmul.f32 %v1415, 0.013422819
    %v1592 = vmul.f32 %v1416, 0.013422819
    %v1593 = vmul.f32 %v1417, 0.013422819
    %v1594 = vmul.f32 %v1418, 0.013422819
    %v1595 = vmul.f32 %v1419, 0.013422819
    %v1596 = vmul.f32 %v1420, 0.013422819
    %v1597 = vmul.f32 %v1421, 0.013422819
    %v1598 = vmul.f32 %v1422, 0.013422819
    %v1599 = vmul.f32 %v1423, 0.013422819
    %v1600 = vmul.f32 %v1424, 0.013422819
    %v1601 = vmul.f32 %v1425, 0.013422819
    %v1602 = vmul.f32 %v1426, 0.013422819
    %v1603 = vmul.f32 %v1427, 0.013422819
    %v1604 = vmul.f32 %v1428, 0.013422819
    %v1605 = vmul.f32 %v1429, 0.013422819
    %v1606 = vsub.f32 %v726, 74.5
    %v1607 = vsub.f32 %v727, 74.5
    %v1608 = vsub.f32 %v728, 74.5
    %v1609 = vsub.f32 %v729, 74.5
    %v1610 = vsub.f32 %v730, 74.5
    %v1611 = vsub.f32 %v731, 74.5
    %v1612 = vsub.f32 %v732, 74.5
    %v1613 = vsub.f32 %v733, 74.5
    %v1614 = vsub.f32 %v734, 74.5
    %v1615 = vsub.f32 %v735, 74.5
    %v1616 = vsub.f32 %v736, 74.5
    %v1617 = vsub.f32 %v737, 74.5
    %v1618 = vsub.f32 %v738, 74.5
    %v1619 = vsub.f32 %v739, 74.5
    %v1620 = vsub.f32 %v740, 74.5
    %v1621 = vsub.f32 %v741, 74.5
    %v1622 = vsub.f32 %v742, 74.5
    %v1623 = vsub.f32 %v743, 74.5
    %v1624 = vsub.f32 %v744, 74.5
    %v1625 = vsub.f32 %v745, 74.5
    %v1626 = vsub.f32 %v746, 74.5
    %v1627 = vsub.f32 %v747, 74.5
    %v1628 = vsub.f32 %v748, 74.5
    %v1629 = vsub.f32 %v749, 74.5
    %v1630 = vsub.f32 %v750, 74.5
    %v1631 = vsub.f32 %v751, 74.5
    %v1632 = vsub.f32 %v752, 74.5
    %v1633 = vsub.f32 %v753, 74.5
    %v1634 = vsub.f32 %v754, 74.5
    %v1635 = vsub.f32 %v755, 74.5
    %v1636 = vsub.f32 %v756, 74.5
    %v1637 = vsub.f32 %v757, 74.5
    %v1638 = vsub.f32 %v758, 74.5
    %v1639 = vsub.f32 %v759, 74.5
    %v1640 = vsub.f32 %v760, 74.5
    %v1641 = vsub.f32 %v761, 74.5
    %v1642 = vsub.f32 %v762, 74.5
    %v1643 = vsub.f32 %v763, 74.5
    %v1644 = vsub.f32 %v764, 74.5
    %v1645 = vsub.f32 %v765, 74.5
    %v1646 = vsub.f32 %v766, 74.5
    %v1647 = vsub.f32 %v767, 74.5
    %v1648 = vsub.f32 %v768, 74.5
    %v1649 = vsub.f32 %v769, 74.5
    %v1650 = vsub.f32 %v770, 74.5
    %v1651 = vsub.f32 %v771, 74.5
    %v1652 = vsub.f32 %v772, 74.5
    %v1653 = vsub.f32 %v773, 74.5
    %v1654 = vsub.f32 %v774, 74.5
    %v1655 = vsub.f32 %v775, 74.5
    %v1656 = vsub.f32 %v776, 74.5
    %v1657 = vsub.f32 %v777, 74.5
    %v1658 = vsub.f32 %v778, 74.5
    %v1659 = vsub.f32 %v779, 74.5
    %v1660 = vsub.f32 %v780, 74.5
    %v1661 = vsub.f32 %v781, 74.5
    %v1662 = vsub.f32 %v782, 74.5
    %v1663 = vsub.f32 %v783, 74.5
    %v1664 = vsub.f32 %v784, 74.5
    %v1665 = vsub.f32 %v785, 74.5
    %v1666 = vsub.f32 %v786, 74.5
    %v1667 = vsub.f32 %v787, 74.5
    %v1668 = vsub.f32 %v788, 74.5
    %v1669 = vsub.f32 %v789, 74.5
    %v1670 = vsub.f32 %v790, 74.5
    %v1671 = vsub.f32 %v791, 74.5
    %v1672 = vsub.f32 %v792, 74.5
    %v1673 = vsub.f32 %v793, 74.5
    %v1674 = vsub.f32 %v794, 74.5
    %v1675 = vsub.f32 %v795, 74.5
    %v1676 = vsub.f32 %v796, 74.5
    %v1677 = vsub.f32 %v797, 74.5
    %v1678 = vsub.f32 %v798, 74.5
    %v1679 = vsub.f32 %v799, 74.5
    %v1680 = vsub.f32 %v800, 74.5
    %v1681 = vsub.f32 %v801, 74.5
    %v1682 = vsub.f32 %v802, 74.5
    %v1683 = vsub.f32 %v803, 74.5
    %v1684 = vsub.f32 %v804, 74.5
    %v1685 = vsub.f32 %v805, 74.5
    %v1686 = vsub.f32 %v806, 74.5
    %v1687 = vsub.f32 %v807, 74.5
    %v1688 = vsub.f32 %v808, 74.5
    %v1689 = vsub.f32 %v809, 74.5
    %v1690 = vsub.f32 %v810, 74.5
    %v1691 = vsub.f32 %v811, 74.5
    %v1692 = vsub.f32 %v812, 74.5
    %v1693 = vsub.f32 %v813, 74.5
    %v1694 = vsub.f32 %v814, 74.5
    %v1695 = vsub.f32 %v815, 74.5
    %v1696 = vsub.f32 %v816, 74.5
    %v1697 = vsub.f32 %v817, 74.5
    %v1698 = vsub.f32 %v818, 74.5
    %v1699 = vsub.f32 %v819, 74.5
    %v1700 = vsub.f32 %v820, 74.5
    %v1701 = vsub.f32 %v821, 74.5
    %v1702 = vsub.f32 %v822, 74.5
    %v1703 = vsub.f32 %v823, 74.5
    %v1704 = vsub.f32 %v824, 74.5
    %v1705 = vsub.f32 %v825, 74.5
    %v1706 = vsub.f32 %v826, 74.5
    %v1707 = vsub.f32 %v827, 74.5
    %v1708 = vsub.f32 %v828, 74.5
    %v1709 = vsub.f32 %v829, 74.5
    %v1710 = vsub.f32 %v830, 74.5
    %v1711 = vsub.f32 %v831, 74.5
    %v1712 = vsub.f32 %v832, 74.5
    %v1713 = vsub.f32 %v833, 74.5
    %v1714 = vsub.f32 %v834, 74.5
    %v1715 = vsub.f32 %v835, 74.5
    %v1716 = vsub.f32 %v836, 74.5
    %v1717 = vsub.f32 %v837, 74.5
    %v1718 = vsub.f32 %v838, 74.5
    %v1719 = vsub.f32 %v839, 74.5
    %v1720 = vsub.f32 %v840, 74.5
    %v1721 = vsub.f32 %v841, 74.5
    %v1722 = vsub.f32 %v842, 74.5
    %v1723 = vsub.f32 %v843, 74.5
    %v1724 = vsub.f32 %v844, 74.5
    %v1725 = vsub.f32 %v845, 74.5
    %v1726 = vsub.f32 %v846, 74.5
    %v1727 = vsub.f32 %v847, 74.5
    %v1728 = vsub.f32 %v848, 74.5
    %v1729 = vsub.f32 %v849, 74.5
    %v1730 = vsub.f32 %v850, 74.5
    %v1731 = vsub.f32 %v851, 74.5
    %v1732 = vsub.f32 %v852, 74.5
    %v1733 = vsub.f32 %v853, 74.5
    %v1734 = vsub.f32 %v854, 74.5
    %v1735 = vsub.f32 %v855, 74.5
    %v1736 = vsub.f32 %v856, 74.5
    %v1737 = vsub.f32 %v857, 74.5
    %v1738 = vsub.f32 %v858, 74.5
    %v1739 = vsub.f32 %v859, 74.5
    %v1740 = vsub.f32 %v860, 74.5
    %v1741 = vsub.f32 %v861, 74.5
    %v1742 = vsub.f32 %v862, 74.5
    %v1743 = vsub.f32 %v863, 74.5
    %v1744 = vsub.f32 %v864, 74.5
    %v1745 = vsub.f32 %v865, 74.5
    %v1746 = vsub.f32 %v866, 74.5
    %v1747 = vsub.f32 %v867, 74.5
    %v1748 = vsub.f32 %v868, 74.5
    %v1749 = vsub.f32 %v869, 74.5
    %v1750 = vsub.f32 %v870, 74.5
    %v1751 = vsub.f32 %v871, 74.5
    %v1752 = vsub.f32 %v872, 74.5
    %v1753 = vsub.f32 %v873, 74.5
    %v1754 = vsub.f32 %v874, 74.5
    %v1755 = vsub.f32 %v875, 74.5
    %v1756 = vsub.f32 %v876, 74.5
    %v1757 = vsub.f32 %v877, 74.5
    %v1758 = vsub.f32 %v878, 74.5
    %v1759 = vsub.f32 %v879, 74.5
    %v1760 = vsub.f32 %v880, 74.5
    %v1761 = vsub.f32 %v881, 74.5
    %v1762 = vsub.f32 %v882, 74.5
    %v1763 = vsub.f32 %v883, 74.5
    %v1764 = vsub.f32 %v884, 74.5
    %v1765 = vsub.f32 %v885, 74.5
    %v1766 = vsub.f32 %v886, 74.5
    %v1767 = vsub.f32 %v887, 74.5
    %v1768 = vsub.f32 %v888, 74.5
    %v1769 = vsub.f32 %v889, 74.5
    %v1770 = vsub.f32 %v890, 74.5
    %v1771 = vsub.f32 %v891, 74.5
    %v1772 = vsub.f32 %v892, 74.5
    %v1773 = vsub.f32 %v893, 74.5
    %v1774 = vsub.f32 %v894, 74.5
    %v1775 = vsub.f32 %v895, 74.5
    %v1776 = vsub.f32 %v896, 74.5
    %v1777 = vsub.f32 %v897, 74.5
    %v1778 = vsub.f32 %v898, 74.5
    %v1779 = vsub.f32 %v899, 74.5
    %v1780 = vsub.f32 %v900, 74.5
    %v1781 = vsub.f32 %v901, 74.5
    %v1782 = vmul.f32 %v1606, 0.013422819
    %v1783 = vmul.f32 %v1607, 0.013422819
    %v1784 = vmul.f32 %v1608, 0.013422819
    %v1785 = vmul.f32 %v1609, 0.013422819
    %v1786 = vmul.f32 %v1610, 0.013422819
    %v1787 = vmul.f32 %v1611, 0.013422819
    %v1788 = vmul.f32 %v1612, 0.013422819
    %v1789 = vmul.f32 %v1613, 0.013422819
    %v1790 = vmul.f32 %v1614, 0.013422819
    %v1791 = vmul.f32 %v1615, 0.013422819
    %v1792 = vmul.f32 %v1616, 0.013422819
    %v1793 = vmul.f32 %v1617, 0.013422819
    %v1794 = vmul.f32 %v1618, 0.013422819
    %v1795 = vmul.f32 %v1619, 0.013422819
    %v1796 = vmul.f32 %v1620, 0.013422819
    %v1797 = vmul.f32 %v1621, 0.013422819
    %v1798 = vmul.f32 %v1622, 0.013422819
    %v1799 = vmul.f32 %v1623, 0.013422819
    %v1800 = vmul.f32 %v1624, 0.013422819
    %v1801 = vmul.f32 %v1625, 0.013422819
    %v1802 = vmul.f32 %v1626, 0.013422819
    %v1803 = vmul.f32 %v1627, 0.013422819
    %v1804 = vmul.f32 %v1628, 0.013422819
    %v1805 = vmul.f32 %v1629, 0.013422819
    %v1806 = vmul.f32 %v1630, 0.013422819
    %v1807 = vmul.f32 %v1631, 0.013422819
    %v1808 = vmul.f32 %v1632, 0.013422819
    %v1809 = vmul.f32 %v1633, 0.013422819
    %v1810 = vmul.f32 %v1634, 0.013422819
    %v1811 = vmul.f32 %v1635, 0.013422819
    %v1812 = vmul.f32 %v1636, 0.013422819
    %v1813 = vmul.f32 %v1637, 0.013422819
    %v1814 = vmul.f32 %v1638, 0.013422819
    %v1815 = vmul.f32 %v1639, 0.013422819
    %v1816 = vmul.f32 %v1640, 0.013422819
    %v1817 = vmul.f32 %v1641, 0.013422819
    %v1818 = vmul.f32 %v1642, 0.013422819
    %v1819 = vmul.f32 %v1643, 0.013422819
    %v1820 = vmul.f32 %v1644, 0.013422819
    %v1821 = vmul.f32 %v1645, 0.013422819
    %v1822 = vmul.f32 %v1646, 0.013422819
    %v1823 = vmul.f32 %v1647, 0.013422819
    %v1824 = vmul.f32 %v1648, 0.013422819
    %v1825 = vmul.f32 %v1649, 0.013422819
    %v1826 = vmul.f32 %v1650, 0.013422819
    %v1827 = vmul.f32 %v1651, 0.013422819
    %v1828 = vmul.f32 %v1652, 0.013422819
    %v1829 = vmul.f32 %v1653, 0.013422819
    %v1830 = vmul.f32 %v1654, 0.013422819
    %v1831 = vmul.f32 %v1655, 0.013422819
    %v1832 = vmul.f32 %v1656, 0.013422819
    %v1833 = vmul.f32 %v1657, 0.013422819
    %v1834 = vmul.f32 %v1658, 0.013422819
    %v1835 = vmul.f32 %v1659, 0.013422819
    %v1836 = vmul.f32 %v1660, 0.013422819
    %v1837 = vmul.f32 %v1661, 0.013422819
    %v1838 = vmul.f32 %v1662, 0.013422819
    %v1839 = vmul.f32 %v1663, 0.013422819
    %v1840 = vmul.f32 %v1664, 0.013422819
    %v1841 = vmul.f32 %v1665, 0.013422819
    %v1842 = vmul.f32 %v1666, 0.013422819
    %v1843 = vmul.f32 %v1667, 0.013422819
    %v1844 = vmul.f32 %v1668, 0.013422819
    %v1845 = vmul.f32 %v1669, 0.013422819
    %v1846 = vmul.f32 %v1670, 0.013422819
    %v1847 = vmul.f32 %v1671, 0.013422819
    %v1848 = vmul.f32 %v1672, 0.013422819
    %v1849 = vmul.f32 %v1673, 0.013422819
    %v1850 = vmul.f32 %v1674, 0.013422819
    %v1851 = vmul.f32 %v1675, 0.013422819
    %v1852 = vmul.f32 %v1676, 0.013422819
    %v1853 = vmul.f32 %v1677, 0.013422819
    %v1854 = vmul.f32 %v1678, 0.013422819
    %v1855 = vmul.f32 %v1679, 0.013422819
    %v1856 = vmul.f32 %v1680, 0.013422819
    %v1857 = vmul.f32 %v1681, 0.013422819
    %v1858 = vmul.f32 %v1682, 0.013422819
    %v1859 = vmul.f32 %v1683, 0.013422819
    %v1860 = vmul.f32 %v1684, 0.013422819
    %v1861 = vmul.f32 %v1685, 0.013422819
    %v1862 = vmul.f32 %v1686, 0.013422819
    %v1863 = vmul.f32 %v1687, 0.013422819
    %v1864 = vmul.f32 %v1688, 0.013422819
    %v1865 = vmul.f32 %v1689, 0.013422819
    %v1866 = vmul.f32 %v1690, 0.013422819
    %v1867 = vmul.f32 %v1691, 0.013422819
    %v1868 = vmul.f32 %v1692, 0.013422819
    %v1869 = vmul.f32 %v1693, 0.013422819
    %v1870 = vmul.f32 %v1694, 0.013422819
    %v1871 = vmul.f32 %v1695, 0.013422819
    %v1872 = vmul.f32 %v1696, 0.013422819
    %v1873 = vmul.f32 %v1697, 0.013422819
    %v1874 = vmul.f32 %v1698, 0.013422819
    %v1875 = vmul.f32 %v1699, 0.013422819
    %v1876 = vmul.f32 %v1700, 0.013422819
    %v1877 = vmul.f32 %v1701, 0.013422819
    %v1878 = vmul.f32 %v1702, 0.013422819
    %v1879 = vmul.f32 %v1703, 0.013422819
    %v1880 = vmul.f32 %v1704, 0.013422819
    %v1881 = vmul.f32 %v1705, 0.013422819
    %v1882 = vmul.f32 %v1706, 0.013422819
    %v1883 = vmul.f32 %v1707, 0.013422819
    %v1884 = vmul.f32 %v1708, 0.013422819
    %v1885 = vmul.f32 %v1709, 0.013422819
    %v1886 = vmul.f32 %v1710, 0.013422819
    %v1887 = vmul.f32 %v1711, 0.013422819
    %v1888 = vmul.f32 %v1712, 0.013422819
    %v1889 = vmul.f32 %v1713, 0.013422819
    %v1890 = vmul.f32 %v1714, 0.013422819
    %v1891 = vmul.f32 %v1715, 0.013422819
    %v1892 = vmul.f32 %v1716, 0.013422819
    %v1893 = vmul.f32 %v1717, 0.013422819
    %v1894 = vmul.f32 %v1718, 0.013422819
    %v1895 = vmul.f32 %v1719, 0.013422819
    %v1896 = vmul.f32 %v1720, 0.013422819
    %v1897 = vmul.f32 %v1721, 0.013422819
    %v1898 = vmul.f32 %v1722, 0.013422819
    %v1899 = vmul.f32 %v1723, 0.013422819
    %v1900 = vmul.f32 %v1724, 0.013422819
    %v1901 = vmul.f32 %v1725, 0.013422819
    %v1902 = vmul.f32 %v1726, 0.013422819
    %v1903 = vmul.f32 %v1727, 0.013422819
    %v1904 = vmul.f32 %v1728, 0.013422819
    %v1905 = vmul.f32 %v1729, 0.013422819
    %v1906 = vmul.f32 %v1730, 0.013422819
    %v1907 = vmul.f32 %v1731, 0.013422819
    %v1908 = vmul.f32 %v1732, 0.013422819
    %v1909 = vmul.f32 %v1733, 0.013422819
    %v1910 = vmul.f32 %v1734, 0.013422819
    %v1911 = vmul.f32 %v1735, 0.013422819
    %v1912 = vmul.f32 %v1736, 0.013422819
    %v1913 = vmul.f32 %v1737, 0.013422819
    %v1914 = vmul.f32 %v1738, 0.013422819
    %v1915 = vmul.f32 %v1739, 0.013422819
    %v1916 = vmul.f32 %v1740, 0.013422819
    %v1917 = vmul.f32 %v1741, 0.013422819
    %v1918 = vmul.f32 %v1742, 0.013422819
    %v1919 = vmul.f32 %v1743, 0.013422819
    %v1920 = vmul.f32 %v1744, 0.013422819
    %v1921 = vmul.f32 %v1745, 0.013422819
    %v1922 = vmul.f32 %v1746, 0.013422819
    %v1923 = vmul.f32 %v1747, 0.013422819
    %v1924 = vmul.f32 %v1748, 0.013422819
    %v1925 = vmul.f32 %v1749, 0.013422819
    %v1926 = vmul.f32 %v1750, 0.013422819
    %v1927 = vmul.f32 %v1751, 0.013422819
    %v1928 = vmul.f32 %v1752, 0.013422819
    %v1929 = vmul.f32 %v1753, 0.013422819
    %v1930 = vmul.f32 %v1754, 0.013422819
    %v1931 = vmul.f32 %v1755, 0.013422819
    %v1932 = vmul.f32 %v1756, 0.013422819
    %v1933 = vmul.f32 %v1757, 0.013422819
    %v1934 = vmul.f32 %v1758, 0.013422819
    %v1935 = vmul.f32 %v1759, 0.013422819
    %v1936 = vmul.f32 %v1760, 0.013422819
    %v1937 = vmul.f32 %v1761, 0.013422819
    %v1938 = vmul.f32 %v1762, 0.013422819
    %v1939 = vmul.f32 %v1763, 0.013422819
    %v1940 = vmul.f32 %v1764, 0.013422819
    %v1941 = vmul.f32 %v1765, 0.013422819
    %v1942 = vmul.f32 %v1766, 0.013422819
    %v1943 = vmul.f32 %v1767, 0.013422819
    %v1944 = vmul.f32 %v1768, 0.013422819
    %v1945 = vmul.f32 %v1769, 0.013422819
    %v1946 = vmul.f32 %v1770, 0.013422819
    %v1947 = vmul.f32 %v1771, 0.013422819
    %v1948 = vmul.f32 %v1772, 0.013422819
    %v1949 = vmul.f32 %v1773, 0.013422819
    %v1950 = vmul.f32 %v1774, 0.013422819
    %v1951 = vmul.f32 %v1775, 0.013422819
    %v1952 = vmul.f32 %v1776, 0.013422819
    %v1953 = vmul.f32 %v1777, 0.013422819
    %v1954 = vmul.f32 %v1778, 0.013422819
    %v1955 = vmul.f32 %v1779, 0.013422819
    %v1956 = vmul.f32 %v1780, 0.013422819
    %v1957 = vmul.f32 %v1781, 0.013422819
    %v1958 = vmul.f32 %v1430, %v1430
    %v1959 = vmul.f32 %v1431, %v1431
    %v1960 = vmul.f32 %v1432, %v1432
    %v1961 = vmul.f32 %v1433, %v1433
    %v1962 = vmul.f32 %v1434, %v1434
    %v1963 = vmul.f32 %v1435, %v1435
    %v1964 = vmul.f32 %v1436, %v1436
    %v1965 = vmul.f32 %v1437, %v1437
    %v1966 = vmul.f32 %v1438, %v1438
    %v1967 = vmul.f32 %v1439, %v1439
    %v1968 = vmul.f32 %v1440, %v1440
    %v1969 = vmul.f32 %v1441, %v1441
    %v1970 = vmul.f32 %v1442, %v1442
    %v1971 = vmul.f32 %v1443, %v1443
    %v1972 = vmul.f32 %v1444, %v1444
    %v1973 = vmul.f32 %v1445, %v1445
    %v1974 = vmul.f32 %v1446, %v1446
    %v1975 = vmul.f32 %v1447, %v1447
    %v1976 = vmul.f32 %v1448, %v1448
    %v1977 = vmul.f32 %v1449, %v1449
    %v1978 = vmul.f32 %v1450, %v1450
    %v1979 = vmul.f32 %v1451, %v1451
    %v1980 = vmul.f32 %v1452, %v1452
    %v1981 = vmul.f32 %v1453, %v1453
    %v1982 = vmul.f32 %v1454, %v1454
    %v1983 = vmul.f32 %v1455, %v1455
    %v1984 = vmul.f32 %v1456, %v1456
    %v1985 = vmul.f32 %v1457, %v1457
    %v1986 = vmul.f32 %v1458, %v1458
    %v1987 = vmul.f32 %v1459, %v1459
    %v1988 = vmul.f32 %v1460, %v1460
    %v1989 = vmul.f32 %v1461, %v1461
    %v1990 = vmul.f32 %v1462, %v1462
    %v1991 = vmul.f32 %v1463, %v1463
    %v1992 = vmul.f32 %v1464, %v1464
    %v1993 = vmul.f32 %v1465, %v1465
    %v1994 = vmul.f32 %v1466, %v1466
    %v1995 = vmul.f32 %v1467, %v1467
    %v1996 = vmul.f32 %v1468, %v1468
    %v1997 = vmul.f32 %v1469, %v1469
    %v1998 = vmul.f32 %v1470, %v1470
    %v1999 = vmul.f32 %v1471, %v1471
    %v2000 = vmul.f32 %v1472, %v1472
    %v2001 = vmul.f32 %v1473, %v1473
    %v2002 = vmul.f32 %v1474, %v1474
    %v2003 = vmul.f32 %v1475, %v1475
    %v2004 = vmul.f32 %v1476, %v1476
    %v2005 = vmul.f32 %v1477, %v1477
    %v2006 = vmul.f32 %v1478, %v1478
    %v2007 = vmul.f32 %v1479, %v1479
    %v2008 = vmul.f32 %v1480, %v1480
    %v2009 = vmul.f32 %v1481, %v1481
    %v2010 = vmul.f32 %v1482, %v1482
    %v2011 = vmul.f32 %v1483, %v1483
    %v2012 = vmul.f32 %v1484, %v1484
    %v2013 = vmul.f32 %v1485, %v1485
    %v2014 = vmul.f32 %v1486, %v1486
    %v2015 = vmul.f32 %v1487, %v1487
    %v2016 = vmul.f32 %v1488, %v1488
    %v2017 = vmul.f32 %v1489, %v1489
    %v2018 = vmul.f32 %v1490, %v1490
    %v2019 = vmul.f32 %v1491, %v1491
    %v2020 = vmul.f32 %v1492, %v1492
    %v2021 = vmul.f32 %v1493, %v1493
    %v2022 = vmul.f32 %v1494, %v1494
    %v2023 = vmul.f32 %v1495, %v1495
    %v2024 = vmul.f32 %v1496, %v1496
    %v2025 = vmul.f32 %v1497, %v1497
    %v2026 = vmul.f32 %v1498, %v1498
    %v2027 = vmul.f32 %v1499, %v1499
    %v2028 = vmul.f32 %v1500, %v1500
    %v2029 = vmul.f32 %v1501, %v1501
    %v2030 = vmul.f32 %v1502, %v1502
    %v2031 = vmul.f32 %v1503, %v1503
    %v2032 = vmul.f32 %v1504, %v1504
    %v2033 = vmul.f32 %v1505, %v1505
    %v2034 = vmul.f32 %v1506, %v1506
    %v2035 = vmul.f32 %v1507, %v1507
    %v2036 = vmul.f32 %v1508, %v1508
    %v2037 = vmul.f32 %v1509, %v1509
    %v2038 = vmul.f32 %v1510, %v1510
    %v2039 = vmul.f32 %v1511, %v1511
    %v2040 = vmul.f32 %v1512, %v1512
    %v2041 = vmul.f32 %v1513, %v1513
    %v2042 = vmul.f32 %v1514, %v1514
    %v2043 = vmul.f32 %v1515, %v1515
    %v2044 = vmul.f32 %v1516, %v1516
    %v2045 = vmul.f32 %v1517, %v1517
    %v2046 = vmul.f32 %v1518, %v1518
    %v2047 = vmul.f32 %v1519, %v1519
    %v2048 = vmul.f32 %v1520, %v1520
    %v2049 = vmul.f32 %v1521, %v1521
    %v2050 = vmul.f32 %v1522, %v1522
    %v2051 = vmul.f32 %v1523, %v1523
    %v2052 = vmul.f32 %v1524, %v1524
    %v2053 = vmul.f32 %v1525, %v1525
    %v2054 = vmul.f32 %v1526, %v1526
    %v2055 = vmul.f32 %v1527, %v1527
    %v2056 = vmul.f32 %v1528, %v1528
    %v2057 = vmul.f32 %v1529, %v1529
    %v2058 = vmul.f32 %v1530, %v1530
    %v2059 = vmul.f32 %v1531, %v1531
    %v2060 = vmul.f32 %v1532, %v1532
    %v2061 = vmul.f32 %v1533, %v1533
    %v2062 = vmul.f32 %v1534, %v1534
    %v2063 = vmul.f32 %v1535, %v1535
    %v2064 = vmul.f32 %v1536, %v1536
    %v2065 = vmul.f32 %v1537, %v1537
    %v2066 = vmul.f32 %v1538, %v1538
    %v2067 = vmul.f32 %v1539, %v1539
    %v2068 = vmul.f32 %v1540, %v1540
    %v2069 = vmul.f32 %v1541, %v1541
    %v2070 = vmul.f32 %v1542, %v1542
    %v2071 = vmul.f32 %v1543, %v1543
    %v2072 = vmul.f32 %v1544, %v1544
    %v2073 = vmul.f32 %v1545, %v1545
    %v2074 = vmul.f32 %v1546, %v1546
    %v2075 = vmul.f32 %v1547, %v1547
    %v2076 = vmul.f32 %v1548, %v1548
    %v2077 = vmul.f32 %v1549, %v1549
    %v2078 = vmul.f32 %v1550, %v1550
    %v2079 = vmul.f32 %v1551, %v1551
    %v2080 = vmul.f32 %v1552, %v1552
    %v2081 = vmul.f32 %v1553, %v1553
    %v2082 = vmul.f32 %v1554, %v1554
    %v2083 = vmul.f32 %v1555, %v1555
    %v2084 = vmul.f32 %v1556, %v1556
    %v2085 = vmul.f32 %v1557, %v1557
    %v2086 = vmul.f32 %v1558, %v1558
    %v2087 = vmul.f32 %v1559, %v1559
    %v2088 = vmul.f32 %v1560, %v1560
    %v2089 = vmul.f32 %v1561, %v1561
    %v2090 = vmul.f32 %v1562, %v1562
    %v2091 = vmul.f32 %v1563, %v1563
    %v2092 = vmul.f32 %v1564, %v1564
    %v2093 = vmul.f32 %v1565, %v1565
    %v2094 = vmul.f32 %v1566, %v1566
    %v2095 = vmul.f32 %v1567, %v1567
    %v2096 = vmul.f32 %v1568, %v1568
    %v2097 = vmul.f32 %v1569, %v1569
    %v2098 = vmul.f32 %v1570, %v1570
    %v2099 = vmul.f32 %v1571, %v1571
    %v2100 = vmul.f32 %v1572, %v1572
    %v2101 = vmul.f32 %v1573, %v1573
    %v2102 = vmul.f32 %v1574, %v1574
    %v2103 = vmul.f32 %v1575, %v1575
    %v2104 = vmul.f32 %v1576, %v1576
    %v2105 = vmul.f32 %v1577, %v1577
    %v2106 = vmul.f32 %v1578, %v1578
    %v2107 = vmul.f32 %v1579, %v1579
    %v2108 = vmul.f32 %v1580, %v1580
    %v2109 = vmul.f32 %v1581, %v1581
    %v2110 = vmul.f32 %v1582, %v1582
    %v2111 = vmul.f32 %v1583, %v1583
    %v2112 = vmul.f32 %v1584, %v1584
    %v2113 = vmul.f32 %v1585, %v1585
    %v2114 = vmul.f32 %v1586, %v1586
    %v2115 = vmul.f32 %v1587, %v1587
    %v2116 = vmul.f32 %v1588, %v1588
    %v2117 = vmul.f32 %v1589, %v1589
    %v2118 = vmul.f32 %v1590, %v1590
    %v2119 = vmul.f32 %v1591, %v1591
    %v2120 = vmul.f32 %v1592, %v1592
    %v2121 = vmul.f32 %v1593, %v1593
    %v2122 = vmul.f32 %v1594, %v1594
    %v2123 = vmul.f32 %v1595, %v1595
    %v2124 = vmul.f32 %v1596, %v1596
    %v2125 = vmul.f32 %v1597, %v1597
    %v2126 = vmul.f32 %v1598, %v1598
    %v2127 = vmul.f32 %v1599, %v1599
    %v2128 = vmul.f32 %v1600, %v1600
    %v2129 = vmul.f32 %v1601, %v1601
    %v2130 = vmul.f32 %v1602, %v1602
    %v2131 = vmul.f32 %v1603, %v1603
    %v2132 = vmul.f32 %v1604, %v1604
    %v2133 = vmul.f32 %v1605, %v1605
    %v2134 = vmul.f32 %v1782, %v1782
    %v2135 = vmul.f32 %v1783, %v1783
    %v2136 = vmul.f32 %v1784, %v1784
    %v2137 = vmul.f32 %v1785, %v1785
    %v2138 = vmul.f32 %v1786, %v1786
    %v2139 = vmul.f32 %v1787, %v1787
    %v2140 = vmul.f32 %v1788, %v1788
    %v2141 = vmul.f32 %v1789, %v1789
    %v2142 = vmul.f32 %v1790, %v1790
    %v2143 = vmul.f32 %v1791, %v1791
    %v2144 = vmul.f32 %v1792, %v1792
    %v2145 = vmul.f32 %v1793, %v1793
    %v2146 = vmul.f32 %v1794, %v1794
    %v2147 = vmul.f32 %v1795, %v1795
    %v2148 = vmul.f32 %v1796, %v1796
    %v2149 = vmul.f32 %v1797, %v1797
    %v2150 = vmul.f32 %v1798, %v1798
    %v2151 = vmul.f32 %v1799, %v1799
    %v2152 = vmul.f32 %v1800, %v1800
    %v2153 = vmul.f32 %v1801, %v1801
    %v2154 = vmul.f32 %v1802, %v1802
    %v2155 = vmul.f32 %v1803, %v1803
    %v2156 = vmul.f32 %v1804, %v1804
    %v2157 = vmul.f32 %v1805, %v1805
    %v2158 = vmul.f32 %v1806, %v1806
    %v2159 = vmul.f32 %v1807, %v1807
    %v2160 = vmul.f32 %v1808, %v1808
    %v2161 = vmul.f32 %v1809, %v1809
    %v2162 = vmul.f32 %v1810, %v1810
    %v2163 = vmul.f32 %v1811, %v1811
    %v2164 = vmul.f32 %v1812, %v1812
    %v2165 = vmul.f32 %v1813, %v1813
    %v2166 = vmul.f32 %v1814, %v1814
    %v2167 = vmul.f32 %v1815, %v1815
    %v2168 = vmul.f32 %v1816, %v1816
    %v2169 = vmul.f32 %v1817, %v1817
    %v2170 = vmul.f32 %v1818, %v1818
    %v2171 = vmul.f32 %v1819, %v1819
    %v2172 = vmul.f32 %v1820, %v1820
    %v2173 = vmul.f32 %v1821, %v1821
    %v2174 = vmul.f32 %v1822, %v1822
    %v2175 = vmul.f32 %v1823, %v1823
    %v2176 = vmul.f32 %v1824, %v1824
    %v2177 = vmul.f32 %v1825, %v1825
    %v2178 = vmul.f32 %v1826, %v1826
    %v2179 = vmul.f32 %v1827, %v1827
    %v2180 = vmul.f32 %v1828, %v1828
    %v2181 = vmul.f32 %v1829, %v1829
    %v2182 = vmul.f32 %v1830, %v1830
    %v2183 = vmul.f32 %v1831, %v1831
    %v2184 = vmul.f32 %v1832, %v1832
    %v2185 = vmul.f32 %v1833, %v1833
    %v2186 = vmul.f32 %v1834, %v1834
    %v2187 = vmul.f32 %v1835, %v1835
    %v2188 = vmul.f32 %v1836, %v1836
    %v2189 = vmul.f32 %v1837, %v1837
    %v2190 = vmul.f32 %v1838, %v1838
    %v2191 = vmul.f32 %v1839, %v1839
    %v2192 = vmul.f32 %v1840, %v1840
    %v2193 = vmul.f32 %v1841, %v1841
    %v2194 = vmul.f32 %v1842, %v1842
    %v2195 = vmul.f32 %v1843, %v1843
    %v2196 = vmul.f32 %v1844, %v1844
    %v2197 = vmul.f32 %v1845, %v1845
    %v2198 = vmul.f32 %v1846, %v1846
    %v2199 = vmul.f32 %v1847, %v1847
    %v2200 = vmul.f32 %v1848, %v1848
    %v2201 = vmul.f32 %v1849, %v1849
    %v2202 = vmul.f32 %v1850, %v1850
    %v2203 = vmul.f32 %v1851, %v1851
    %v2204 = vmul.f32 %v1852, %v1852
    %v2205 = vmul.f32 %v1853, %v1853
    %v2206 = vmul.f32 %v1854, %v1854
    %v2207 = vmul.f32 %v1855, %v1855
    %v2208 = vmul.f32 %v1856, %v1856
    %v2209 = vmul.f32 %v1857, %v1857
    %v2210 = vmul.f32 %v1858, %v1858
    %v2211 = vmul.f32 %v1859, %v1859
    %v2212 = vmul.f32 %v1860, %v1860
    %v2213 = vmul.f32 %v1861, %v1861
    %v2214 = vmul.f32 %v1862, %v1862
    %v2215 = vmul.f32 %v1863, %v1863
    %v2216 = vmul.f32 %v1864, %v1864
    %v2217 = vmul.f32 %v1865, %v1865
    %v2218 = vmul.f32 %v1866, %v1866
    %v2219 = vmul.f32 %v1867, %v1867
    %v2220 = vmul.f32 %v1868, %v1868
    %v2221 = vmul.f32 %v1869, %v1869
    %v2222 = vmul.f32 %v1870, %v1870
    %v2223 = vmul.f32 %v1871, %v1871
    %v2224 = vmul.f32 %v1872, %v1872
    %v2225 = vmul.f32 %v1873, %v1873
    %v2226 = vmul.f32 %v1874, %v1874
    %v2227 = vmul.f32 %v1875, %v1875
    %v2228 = vmul.f32 %v1876, %v1876
    %v2229 = vmul.f32 %v1877, %v1877
    %v2230 = vmul.f32 %v1878, %v1878
    %v2231 = vmul.f32 %v1879, %v1879
    %v2232 = vmul.f32 %v1880, %v1880
    %v2233 = vmul.f32 %v1881, %v1881
    %v2234 = vmul.f32 %v1882, %v1882
    %v2235 = vmul.f32 %v1883, %v1883
    %v2236 = vmul.f32 %v1884, %v1884
    %v2237 = vmul.f32 %v1885, %v1885
    %v2238 = vmul.f32 %v1886, %v1886
    %v2239 = vmul.f32 %v1887, %v1887
    %v2240 = vmul.f32 %v1888, %v1888
    %v2241 = vmul.f32 %v1889, %v1889
    %v2242 = vmul.f32 %v1890, %v1890
    %v2243 = vmul.f32 %v1891, %v1891
    %v2244 = vmul.f32 %v1892, %v1892
    %v2245 = vmul.f32 %v1893, %v1893
    %v2246 = vmul.f32 %v1894, %v1894
    %v2247 = vmul.f32 %v1895, %v1895
    %v2248 = vmul.f32 %v1896, %v1896
    %v2249 = vmul.f32 %v1897, %v1897
    %v2250 = vmul.f32 %v1898, %v1898
    %v2251 = vmul.f32 %v1899, %v1899
    %v2252 = vmul.f32 %v1900, %v1900
    %v2253 = vmul.f32 %v1901, %v1901
    %v2254 = vmul.f32 %v1902, %v1902
    %v2255 = vmul.f32 %v1903, %v1903
    %v2256 = vmul.f32 %v1904, %v1904
    %v2257 = vmul.f32 %v1905, %v1905
    %v2258 = vmul.f32 %v1906, %v1906
    %v2259 = vmul.f32 %v1907, %v1907
    %v2260 = vmul.f32 %v1908, %v1908
    %v2261 = vmul.f32 %v1909, %v1909
    %v2262 = vmul.f32 %v1910, %v1910
    %v2263 = vmul.f32 %v1911, %v1911
    %v2264 = vmul.f32 %v1912, %v1912
    %v2265 = vmul.f32 %v1913, %v1913
    %v2266 = vmul.f32 %v1914, %v1914
    %v2267 = vmul.f32 %v1915, %v1915
    %v2268 = vmul.f32 %v1916, %v1916
    %v2269 = vmul.f32 %v1917, %v1917
    %v2270 = vmul.f32 %v1918, %v1918
    %v2271 = vmul.f32 %v1919, %v1919
    %v2272 = vmul.f32 %v1920, %v1920
    %v2273 = vmul.f32 %v1921, %v1921
    %v2274 = vmul.f32 %v1922, %v1922
    %v2275 = vmul.f32 %v1923, %v1923
    %v2276 = vmul.f32 %v1924, %v1924
    %v2277 = vmul.f32 %v1925, %v1925
    %v2278 = vmul.f32 %v1926, %v1926
    %v2279 = vmul.f32 %v1927, %v1927
    %v2280 = vmul.f32 %v1928, %v1928
    %v2281 = vmul.f32 %v1929, %v1929
    %v2282 = vmul.f32 %v1930, %v1930
    %v2283 = vmul.f32 %v1931, %v1931
    %v2284 = vmul.f32 %v1932, %v1932
    %v2285 = vmul.f32 %v1933, %v1933
    %v2286 = vmul.f32 %v1934, %v1934
    %v2287 = vmul.f32 %v1935, %v1935
    %v2288 = vmul.f32 %v1936, %v1936
    %v2289 = vmul.f32 %v1937, %v1937
    %v2290 = vmul.f32 %v1938, %v1938
    %v2291 = vmul.f32 %v1939, %v1939
    %v2292 = vmul.f32 %v1940, %v1940
    %v2293 = vmul.f32 %v1941, %v1941
    %v2294 = vmul.f32 %v1942, %v1942
    %v2295 = vmul.f32 %v1943, %v1943
    %v2296 = vmul.f32 %v1944, %v1944
    %v2297 = vmul.f32 %v1945, %v1945
    %v2298 = vmul.f32 %v1946, %v1946
    %v2299 = vmul.f32 %v1947, %v1947
    %v2300 = vmul.f32 %v1948, %v1948
    %v2301 = vmul.f32 %v1949, %v1949
    %v2302 = vmul.f32 %v1950, %v1950
    %v2303 = vmul.f32 %v1951, %v1951
    %v2304 = vmul.f32 %v1952, %v1952
    %v2305 = vmul.f32 %v1953, %v1953
    %v2306 = vmul.f32 %v1954, %v1954
    %v2307 = vmul.f32 %v1955, %v1955
    %v2308 = vmul.f32 %v1956, %v1956
    %v2309 = vmul.f32 %v1957, %v1957
    %v2310 = vadd.f32 %v1958, %v2134
    %v2311 = vadd.f32 %v1959, %v2135
    %v2312 = vadd.f32 %v1960, %v2136
    %v2313 = vadd.f32 %v1961, %v2137
    %v2314 = vadd.f32 %v1962, %v2138
    %v2315 = vadd.f32 %v1963, %v2139
    %v2316 = vadd.f32 %v1964, %v2140
    %v2317 = vadd.f32 %v1965, %v2141
    %v2318 = vadd.f32 %v1966, %v2142
    %v2319 = vadd.f32 %v1967, %v2143
    %v2320 = vadd.f32 %v1968, %v2144
    %v2321 = vadd.f32 %v1969, %v2145
    %v2322 = vadd.f32 %v1970, %v2146
    %v2323 = vadd.f32 %v1971, %v2147
    %v2324 = vadd.f32 %v1972, %v2148
    %v2325 = vadd.f32 %v1973, %v2149
    %v2326 = vadd.f32 %v1974, %v2150
    %v2327 = vadd.f32 %v1975, %v2151
    %v2328 = vadd.f32 %v1976, %v2152
    %v2329 = vadd.f32 %v1977, %v2153
    %v2330 = vadd.f32 %v1978, %v2154
    %v2331 = vadd.f32 %v1979, %v2155
    %v2332 = vadd.f32 %v1980, %v2156
    %v2333 = vadd.f32 %v1981, %v2157
    %v2334 = vadd.f32 %v1982, %v2158
    %v2335 = vadd.f32 %v1983, %v2159
    %v2336 = vadd.f32 %v1984, %v2160
    %v2337 = vadd.f32 %v1985, %v2161
    %v2338 = vadd.f32 %v1986, %v2162
    %v2339 = vadd.f32 %v1987, %v2163
    %v2340 = vadd.f32 %v1988, %v2164
    %v2341 = vadd.f32 %v1989, %v2165
    %v2342 = vadd.f32 %v1990, %v2166
    %v2343 = vadd.f32 %v1991, %v2167
    %v2344 = vadd.f32 %v1992, %v2168
    %v2345 = vadd.f32 %v1993, %v2169
    %v2346 = vadd.f32 %v1994, %v2170
    %v2347 = vadd.f32 %v1995, %v2171
    %v2348 = vadd.f32 %v1996, %v2172
    %v2349 = vadd.f32 %v1997, %v2173
    %v2350 = vadd.f32 %v1998, %v2174
    %v2351 = vadd.f32 %v1999, %v2175
    %v2352 = vadd.f32 %v2000, %v2176
    %v2353 = vadd.f32 %v2001, %v2177
    %v2354 = vadd.f32 %v2002, %v2178
    %v2355 = vadd.f32 %v2003, %v2179
    %v2356 = vadd.f32 %v2004, %v2180
    %v2357 = vadd.f32 %v2005, %v2181
    %v2358 = vadd.f32 %v2006, %v2182
    %v2359 = vadd.f32 %v2007, %v2183
    %v2360 = vadd.f32 %v2008, %v2184
    %v2361 = vadd.f32 %v2009, %v2185
    %v2362 = vadd.f32 %v2010, %v2186
    %v2363 = vadd.f32 %v2011, %v2187
    %v2364 = vadd.f32 %v2012, %v2188
    %v2365 = vadd.f32 %v2013, %v2189
    %v2366 = vadd.f32 %v2014, %v2190
    %v2367 = vadd.f32 %v2015, %v2191
    %v2368 = vadd.f32 %v2016, %v2192
    %v2369 = vadd.f32 %v2017, %v2193
    %v2370 = vadd.f32 %v2018, %v2194
    %v2371 = vadd.f32 %v2019, %v2195
    %v2372 = vadd.f32 %v2020, %v2196
    %v2373 = vadd.f32 %v2021, %v2197
    %v2374 = vadd.f32 %v2022, %v2198
    %v2375 = vadd.f32 %v2023, %v2199
    %v2376 = vadd.f32 %v2024, %v2200
    %v2377 = vadd.f32 %v2025, %v2201
    %v2378 = vadd.f32 %v2026, %v2202
    %v2379 = vadd.f32 %v2027, %v2203
    %v2380 = vadd.f32 %v2028, %v2204
    %v2381 = vadd.f32 %v2029, %v2205
    %v2382 = vadd.f32 %v2030, %v2206
    %v2383 = vadd.f32 %v2031, %v2207
    %v2384 = vadd.f32 %v2032, %v2208
    %v2385 = vadd.f32 %v2033, %v2209
    %v2386 = vadd.f32 %v2034, %v2210
    %v2387 = vadd.f32 %v2035, %v2211
    %v2388 = vadd.f32 %v2036, %v2212
    %v2389 = vadd.f32 %v2037, %v2213
    %v2390 = vadd.f32 %v2038, %v2214
    %v2391 = vadd.f32 %v2039, %v2215
    %v2392 = vadd.f32 %v2040, %v2216
    %v2393 = vadd.f32 %v2041, %v2217
    %v2394 = vadd.f32 %v2042, %v2218
    %v2395 = vadd.f32 %v2043, %v2219
    %v2396 = vadd.f32 %v2044, %v2220
    %v2397 = vadd.f32 %v2045, %v2221
    %v2398 = vadd.f32 %v2046, %v2222
    %v2399 = vadd.f32 %v2047, %v2223
    %v2400 = vadd.f32 %v2048, %v2224
    %v2401 = vadd.f32 %v2049, %v2225
    %v2402 = vadd.f32 %v2050, %v2226
    %v2403 = vadd.f32 %v2051, %v2227
    %v2404 = vadd.f32 %v2052, %v2228
    %v2405 = vadd.f32 %v2053, %v2229
    %v2406 = vadd.f32 %v2054, %v2230
    %v2407 = vadd.f32 %v2055, %v2231
    %v2408 = vadd.f32 %v2056, %v2232
    %v2409 = vadd.f32 %v2057, %v2233
    %v2410 = vadd.f32 %v2058, %v2234
    %v2411 = vadd.f32 %v2059, %v2235
    %v2412 = vadd.f32 %v2060, %v2236
    %v2413 = vadd.f32 %v2061, %v2237
    %v2414 = vadd.f32 %v2062, %v2238
    %v2415 = vadd.f32 %v2063, %v2239
    %v2416 = vadd.f32 %v2064, %v2240
    %v2417 = vadd.f32 %v2065, %v2241
    %v2418 = vadd.f32 %v2066, %v2242
    %v2419 = vadd.f32 %v2067, %v2243
    %v2420 = vadd.f32 %v2068, %v2244
    %v2421 = vadd.f32 %v2069, %v2245
    %v2422 = vadd.f32 %v2070, %v2246
    %v2423 = vadd.f32 %v2071, %v2247
    %v2424 = vadd.f32 %v2072, %v2248
    %v2425 = vadd.f32 %v2073, %v2249
    %v2426 = vadd.f32 %v2074, %v2250
    %v2427 = vadd.f32 %v2075, %v2251
    %v2428 = vadd.f32 %v2076, %v2252
    %v2429 = vadd.f32 %v2077, %v2253
    %v2430 = vadd.f32 %v2078, %v2254
    %v2431 = vadd.f32 %v2079, %v2255
    %v2432 = vadd.f32 %v2080, %v2256
    %v2433 = vadd.f32 %v2081, %v2257
    %v2434 = vadd.f32 %v2082, %v2258
    %v2435 = vadd.f32 %v2083, %v2259
    %v2436 = vadd.f32 %v2084, %v2260
    %v2437 = vadd.f32 %v2085, %v2261
    %v2438 = vadd.f32 %v2086, %v2262
    %v2439 = vadd.f32 %v2087, %v2263
    %v2440 = vadd.f32 %v2088, %v2264
    %v2441 = vadd.f32 %v2089, %v2265
    %v2442 = vadd.f32 %v2090, %v2266
    %v2443 = vadd.f32 %v2091, %v2267
    %v2444 = vadd.f32 %v2092, %v2268
    %v2445 = vadd.f32 %v2093, %v2269
    %v2446 = vadd.f32 %v2094, %v2270
    %v2447 = vadd.f32 %v2095, %v2271
    %v2448 = vadd.f32 %v2096, %v2272
    %v2449 = vadd.f32 %v2097, %v2273
    %v2450 = vadd.f32 %v2098, %v2274
    %v2451 = vadd.f32 %v2099, %v2275
    %v2452 = vadd.f32 %v2100, %v2276
    %v2453 = vadd.f32 %v2101, %v2277
    %v2454 = vadd.f32 %v2102, %v2278
    %v2455 = vadd.f32 %v2103, %v2279
    %v2456 = vadd.f32 %v2104, %v2280
    %v2457 = vadd.f32 %v2105, %v2281
    %v2458 = vadd.f32 %v2106, %v2282
    %v2459 = vadd.f32 %v2107, %v2283
    %v2460 = vadd.f32 %v2108, %v2284
    %v2461 = vadd.f32 %v2109, %v2285
    %v2462 = vadd.f32 %v2110, %v2286
    %v2463 = vadd.f32 %v2111, %v2287
    %v2464 = vadd.f32 %v2112, %v2288
    %v2465 = vadd.f32 %v2113, %v2289
    %v2466 = vadd.f32 %v2114, %v2290
    %v2467 = vadd.f32 %v2115, %v2291
    %v2468 = vadd.f32 %v2116, %v2292
    %v2469 = vadd.f32 %v2117, %v2293
    %v2470 = vadd.f32 %v2118, %v2294
    %v2471 = vadd.f32 %v2119, %v2295
    %v2472 = vadd.f32 %v2120, %v2296
    %v2473 = vadd.f32 %v2121, %v2297
    %v2474 = vadd.f32 %v2122, %v2298
    %v2475 = vadd.f32 %v2123, %v2299
    %v2476 = vadd.f32 %v2124, %v2300
    %v2477 = vadd.f32 %v2125, %v2301
    %v2478 = vadd.f32 %v2126, %v2302
    %v2479 = vadd.f32 %v2127, %v2303
    %v2480 = vadd.f32 %v2128, %v2304
    %v2481 = vadd.f32 %v2129, %v2305
    %v2482 = vadd.f32 %v2130, %v2306
    %v2483 = vadd.f32 %v2131, %v2307
    %v2484 = vadd.f32 %v2132, %v2308
    %v2485 = vadd.f32 %v2133, %v2309
    %vm2486 = vcmp.le.f32.partialorder %v2310, 0.5
    %vm2487 = vcmp.le.f32.partialorder %v2311, 0.5
    %vm2488 = vcmp.le.f32.partialorder %v2312, 0.5
    %vm2489 = vcmp.le.f32.partialorder %v2313, 0.5
    %vm2490 = vcmp.le.f32.partialorder %v2314, 0.5
    %vm2491 = vcmp.le.f32.partialorder %v2315, 0.5
    %vm2492 = vcmp.le.f32.partialorder %v2316, 0.5
    %vm2493 = vcmp.le.f32.partialorder %v2317, 0.5
    %vm2494 = vcmp.le.f32.partialorder %v2318, 0.5
    %vm2495 = vcmp.le.f32.partialorder %v2319, 0.5
    %vm2496 = vcmp.le.f32.partialorder %v2320, 0.5
    %vm2497 = vcmp.le.f32.partialorder %v2321, 0.5
    %vm2498 = vcmp.le.f32.partialorder %v2322, 0.5
    %vm2499 = vcmp.le.f32.partialorder %v2323, 0.5
    %vm2500 = vcmp.le.f32.partialorder %v2324, 0.5
    %vm2501 = vcmp.le.f32.partialorder %v2325, 0.5
    %vm2502 = vcmp.le.f32.partialorder %v2326, 0.5
    %vm2503 = vcmp.le.f32.partialorder %v2327, 0.5
    %vm2504 = vcmp.le.f32.partialorder %v2328, 0.5
    %vm2505 = vcmp.le.f32.partialorder %v2329, 0.5
    %vm2506 = vcmp.le.f32.partialorder %v2330, 0.5
    %vm2507 = vcmp.le.f32.partialorder %v2331, 0.5
    %vm2508 = vcmp.le.f32.partialorder %v2332, 0.5
    %vm2509 = vcmp.le.f32.partialorder %v2333, 0.5
    %vm2510 = vcmp.le.f32.partialorder %v2334, 0.5
    %vm2511 = vcmp.le.f32.partialorder %v2335, 0.5
    %vm2512 = vcmp.le.f32.partialorder %v2336, 0.5
    %vm2513 = vcmp.le.f32.partialorder %v2337, 0.5
    %vm2514 = vcmp.le.f32.partialorder %v2338, 0.5
    %vm2515 = vcmp.le.f32.partialorder %v2339, 0.5
    %vm2516 = vcmp.le.f32.partialorder %v2340, 0.5
    %vm2517 = vcmp.le.f32.partialorder %v2341, 0.5
    %vm2518 = vcmp.le.f32.partialorder %v2342, 0.5
    %vm2519 = vcmp.le.f32.partialorder %v2343, 0.5
    %vm2520 = vcmp.le.f32.partialorder %v2344, 0.5
    %vm2521 = vcmp.le.f32.partialorder %v2345, 0.5
    %vm2522 = vcmp.le.f32.partialorder %v2346, 0.5
    %vm2523 = vcmp.le.f32.partialorder %v2347, 0.5
    %vm2524 = vcmp.le.f32.partialorder %v2348, 0.5
    %vm2525 = vcmp.le.f32.partialorder %v2349, 0.5
    %vm2526 = vcmp.le.f32.partialorder %v2350, 0.5
    %vm2527 = vcmp.le.f32.partialorder %v2351, 0.5
    %vm2528 = vcmp.le.f32.partialorder %v2352, 0.5
    %vm2529 = vcmp.le.f32.partialorder %v2353, 0.5
    %vm2530 = vcmp.le.f32.partialorder %v2354, 0.5
    %vm2531 = vcmp.le.f32.partialorder %v2355, 0.5
    %vm2532 = vcmp.le.f32.partialorder %v2356, 0.5
    %vm2533 = vcmp.le.f32.partialorder %v2357, 0.5
    %vm2534 = vcmp.le.f32.partialorder %v2358, 0.5
    %vm2535 = vcmp.le.f32.partialorder %v2359, 0.5
    %vm2536 = vcmp.le.f32.partialorder %v2360, 0.5
    %vm2537 = vcmp.le.f32.partialorder %v2361, 0.5
    %vm2538 = vcmp.le.f32.partialorder %v2362, 0.5
    %vm2539 = vcmp.le.f32.partialorder %v2363, 0.5
    %vm2540 = vcmp.le.f32.partialorder %v2364, 0.5
    %vm2541 = vcmp.le.f32.partialorder %v2365, 0.5
    %vm2542 = vcmp.le.f32.partialorder %v2366, 0.5
    %vm2543 = vcmp.le.f32.partialorder %v2367, 0.5
    %vm2544 = vcmp.le.f32.partialorder %v2368, 0.5
    %vm2545 = vcmp.le.f32.partialorder %v2369, 0.5
    %vm2546 = vcmp.le.f32.partialorder %v2370, 0.5
    %vm2547 = vcmp.le.f32.partialorder %v2371, 0.5
    %vm2548 = vcmp.le.f32.partialorder %v2372, 0.5
    %vm2549 = vcmp.le.f32.partialorder %v2373, 0.5
    %vm2550 = vcmp.le.f32.partialorder %v2374, 0.5
    %vm2551 = vcmp.le.f32.partialorder %v2375, 0.5
    %vm2552 = vcmp.le.f32.partialorder %v2376, 0.5
    %vm2553 = vcmp.le.f32.partialorder %v2377, 0.5
    %vm2554 = vcmp.le.f32.partialorder %v2378, 0.5
    %vm2555 = vcmp.le.f32.partialorder %v2379, 0.5
    %vm2556 = vcmp.le.f32.partialorder %v2380, 0.5
    %vm2557 = vcmp.le.f32.partialorder %v2381, 0.5
    %vm2558 = vcmp.le.f32.partialorder %v2382, 0.5
    %vm2559 = vcmp.le.f32.partialorder %v2383, 0.5
    %vm2560 = vcmp.le.f32.partialorder %v2384, 0.5
    %vm2561 = vcmp.le.f32.partialorder %v2385, 0.5
    %vm2562 = vcmp.le.f32.partialorder %v2386, 0.5
    %vm2563 = vcmp.le.f32.partialorder %v2387, 0.5
    %vm2564 = vcmp.le.f32.partialorder %v2388, 0.5
    %vm2565 = vcmp.le.f32.partialorder %v2389, 0.5
    %vm2566 = vcmp.le.f32.partialorder %v2390, 0.5
    %vm2567 = vcmp.le.f32.partialorder %v2391, 0.5
    %vm2568 = vcmp.le.f32.partialorder %v2392, 0.5
    %vm2569 = vcmp.le.f32.partialorder %v2393, 0.5
    %vm2570 = vcmp.le.f32.partialorder %v2394, 0.5
    %vm2571 = vcmp.le.f32.partialorder %v2395, 0.5
    %vm2572 = vcmp.le.f32.partialorder %v2396, 0.5
    %vm2573 = vcmp.le.f32.partialorder %v2397, 0.5
    %vm2574 = vcmp.le.f32.partialorder %v2398, 0.5
    %vm2575 = vcmp.le.f32.partialorder %v2399, 0.5
    %vm2576 = vcmp.le.f32.partialorder %v2400, 0.5
    %vm2577 = vcmp.le.f32.partialorder %v2401, 0.5
    %vm2578 = vcmp.le.f32.partialorder %v2402, 0.5
    %vm2579 = vcmp.le.f32.partialorder %v2403, 0.5
    %vm2580 = vcmp.le.f32.partialorder %v2404, 0.5
    %vm2581 = vcmp.le.f32.partialorder %v2405, 0.5
    %vm2582 = vcmp.le.f32.partialorder %v2406, 0.5
    %vm2583 = vcmp.le.f32.partialorder %v2407, 0.5
    %vm2584 = vcmp.le.f32.partialorder %v2408, 0.5
    %vm2585 = vcmp.le.f32.partialorder %v2409, 0.5
    %vm2586 = vcmp.le.f32.partialorder %v2410, 0.5
    %vm2587 = vcmp.le.f32.partialorder %v2411, 0.5
    %vm2588 = vcmp.le.f32.partialorder %v2412, 0.5
    %vm2589 = vcmp.le.f32.partialorder %v2413, 0.5
    %vm2590 = vcmp.le.f32.partialorder %v2414, 0.5
    %vm2591 = vcmp.le.f32.partialorder %v2415, 0.5
    %vm2592 = vcmp.le.f32.partialorder %v2416, 0.5
    %vm2593 = vcmp.le.f32.partialorder %v2417, 0.5
    %vm2594 = vcmp.le.f32.partialorder %v2418, 0.5
    %vm2595 = vcmp.le.f32.partialorder %v2419, 0.5
    %vm2596 = vcmp.le.f32.partialorder %v2420, 0.5
    %vm2597 = vcmp.le.f32.partialorder %v2421, 0.5
    %vm2598 = vcmp.le.f32.partialorder %v2422, 0.5
    %vm2599 = vcmp.le.f32.partialorder %v2423, 0.5
    %vm2600 = vcmp.le.f32.partialorder %v2424, 0.5
    %vm2601 = vcmp.le.f32.partialorder %v2425, 0.5
    %vm2602 = vcmp.le.f32.partialorder %v2426, 0.5
    %vm2603 = vcmp.le.f32.partialorder %v2427, 0.5
    %vm2604 = vcmp.le.f32.partialorder %v2428, 0.5
    %vm2605 = vcmp.le.f32.partialorder %v2429, 0.5
    %vm2606 = vcmp.le.f32.partialorder %v2430, 0.5
    %vm2607 = vcmp.le.f32.partialorder %v2431, 0.5
    %vm2608 = vcmp.le.f32.partialorder %v2432, 0.5
    %vm2609 = vcmp.le.f32.partialorder %v2433, 0.5
    %vm2610 = vcmp.le.f32.partialorder %v2434, 0.5
    %vm2611 = vcmp.le.f32.partialorder %v2435, 0.5
    %vm2612 = vcmp.le.f32.partialorder %v2436, 0.5
    %vm2613 = vcmp.le.f32.partialorder %v2437, 0.5
    %vm2614 = vcmp.le.f32.partialorder %v2438, 0.5
    %vm2615 = vcmp.le.f32.partialorder %v2439, 0.5
    %vm2616 = vcmp.le.f32.partialorder %v2440, 0.5
    %vm2617 = vcmp.le.f32.partialorder %v2441, 0.5
    %vm2618 = vcmp.le.f32.partialorder %v2442, 0.5
    %vm2619 = vcmp.le.f32.partialorder %v2443, 0.5
    %vm2620 = vcmp.le.f32.partialorder %v2444, 0.5
    %vm2621 = vcmp.le.f32.partialorder %v2445, 0.5
    %vm2622 = vcmp.le.f32.partialorder %v2446, 0.5
    %vm2623 = vcmp.le.f32.partialorder %v2447, 0.5
    %vm2624 = vcmp.le.f32.partialorder %v2448, 0.5
    %vm2625 = vcmp.le.f32.partialorder %v2449, 0.5
    %vm2626 = vcmp.le.f32.partialorder %v2450, 0.5
    %vm2627 = vcmp.le.f32.partialorder %v2451, 0.5
    %vm2628 = vcmp.le.f32.partialorder %v2452, 0.5
    %vm2629 = vcmp.le.f32.partialorder %v2453, 0.5
    %vm2630 = vcmp.le.f32.partialorder %v2454, 0.5
    %vm2631 = vcmp.le.f32.partialorder %v2455, 0.5
    %vm2632 = vcmp.le.f32.partialorder %v2456, 0.5
    %vm2633 = vcmp.le.f32.partialorder %v2457, 0.5
    %vm2634 = vcmp.le.f32.partialorder %v2458, 0.5
    %vm2635 = vcmp.le.f32.partialorder %v2459, 0.5
    %vm2636 = vcmp.le.f32.partialorder %v2460, 0.5
    %vm2637 = vcmp.le.f32.partialorder %v2461, 0.5
    %vm2638 = vcmp.le.f32.partialorder %v2462, 0.5
    %vm2639 = vcmp.le.f32.partialorder %v2463, 0.5
    %vm2640 = vcmp.le.f32.partialorder %v2464, 0.5
    %vm2641 = vcmp.le.f32.partialorder %v2465, 0.5
    %vm2642 = vcmp.le.f32.partialorder %v2466, 0.5
    %vm2643 = vcmp.le.f32.partialorder %v2467, 0.5
    %vm2644 = vcmp.le.f32.partialorder %v2468, 0.5
    %vm2645 = vcmp.le.f32.partialorder %v2469, 0.5
    %vm2646 = vcmp.le.f32.partialorder %v2470, 0.5
    %vm2647 = vcmp.le.f32.partialorder %v2471, 0.5
    %vm2648 = vcmp.le.f32.partialorder %v2472, 0.5
    %vm2649 = vcmp.le.f32.partialorder %v2473, 0.5
    %vm2650 = vcmp.le.f32.partialorder %v2474, 0.5
    %vm2651 = vcmp.le.f32.partialorder %v2475, 0.5
    %vm2652 = vcmp.le.f32.partialorder %v2476, 0.5
    %vm2653 = vcmp.le.f32.partialorder %v2477, 0.5
    %vm2654 = vcmp.le.f32.partialorder %v2478, 0.5
    %vm2655 = vcmp.le.f32.partialorder %v2479, 0.5
    %vm2656 = vcmp.le.f32.partialorder %v2480, 0.5
    %vm2657 = vcmp.le.f32.partialorder %v2481, 0.5
    %vm2658 = vcmp.le.f32.partialorder %v2482, 0.5
    %vm2659 = vcmp.le.f32.partialorder %v2483, 0.5
    %vm2660 = vcmp.le.f32.partialorder %v2484, 0.5
    %vm2661 = vcmp.le.f32.partialorder %v2485, 0.5
    %v2662 = vld [vmem:[#allocation2] sm:$0xff]
    %v2663 = vld [vmem:[#allocation2 + $0x8] sm:$0xff]
    %v2664 = vld [vmem:[#allocation2 + $0x10] sm:$0xff]
    %v2665 = vld [vmem:[#allocation2 + $0x18] sm:$0xff]
    %v2666 = vld [vmem:[#allocation2 + $0x20] sm:$0xff]
    %v2667 = vld [vmem:[#allocation2 + $0x28] sm:$0xff]
    %v2668 = vld [vmem:[#allocation2 + $0x30] sm:$0xff]
    %v2669 = vld [vmem:[#allocation2 + $0x38] sm:$0xff]
    %v2670 = vld [vmem:[#allocation2 + $0x40] sm:$0xff]
    %v2671 = vld [vmem:[#allocation2 + $0x48] sm:$0xff]
    %v2672 = vld [vmem:[#allocation2 + $0x50] sm:$0xff]
    %v2673 = vld [vmem:[#allocation2 + $0x58] sm:$0xff]
    %v2674 = vld [vmem:[#allocation2 + $0x60] sm:$0xff]
    %v2675 = vld [vmem:[#allocation2 + $0x68] sm:$0xff]
    %v2676 = vld [vmem:[#allocation2 + $0x70] sm:$0xff]
    %v2677 = vld [vmem:[#allocation2 + $0x78] sm:$0xff]
    %v2678 = vld [vmem:[#allocation2 + $0x80] sm:$0xff]
    %v2679 = vld [vmem:[#allocation2 + $0x88] sm:$0xff]
    %v2680 = vld [vmem:[#allocation2 + $0x90] sm:$0xff]
    %v2681 = vld [vmem:[#allocation2 + $0x98] sm:$0xff]
    %v2682 = vld [vmem:[#allocation2 + $0xa0] sm:$0xff]
    %v2683 = vld [vmem:[#allocation2 + $0xa8] sm:$0xff]
    %v2706 = vlaneseq
    %v2707 = vshrl.u32 %v2706, 7
    %v2708 = vsub.s32 0, %v2707
    %v2709 = vrot.slane %v2662, %v2708
    %v2710 = vlaneseq
    %v2711 = vshrl.u32 %v2710, 7
    %v2712 = vsub.s32 1, %v2711
    %v2713 = vrot.slane %v2662, %v2712
    %v2714 = vlaneseq
    %v2715 = vshrl.u32 %v2714, 7
    %v2716 = vsub.s32 2, %v2715
    %v2717 = vrot.slane %v2662, %v2716
    %v2718 = vlaneseq
    %v2719 = vshrl.u32 %v2718, 7
    %v2720 = vsub.s32 3, %v2719
    %v2721 = vrot.slane %v2662, %v2720
    %v2722 = vlaneseq
    %v2723 = vshrl.u32 %v2722, 7
    %v2724 = vsub.s32 4, %v2723
    %v2725 = vrot.slane %v2662, %v2724
    %v2726 = vlaneseq
    %v2727 = vshrl.u32 %v2726, 7
    %v2728 = vsub.s32 5, %v2727
    %v2729 = vrot.slane %v2662, %v2728
    %v2730 = vlaneseq
    %v2731 = vshrl.u32 %v2730, 7
    %v2732 = vsub.s32 6, %v2731
    %v2733 = vrot.slane %v2662, %v2732
    %v2734 = vlaneseq
    %v2735 = vshrl.u32 %v2734, 7
    %v2736 = vsub.s32 7, %v2735
    %v2737 = vrot.slane %v2662, %v2736
    %v2738 = vlaneseq
    %v2739 = vshrl.u32 %v2738, 7
    %v2740 = vsub.s32 0, %v2739
    %v2741 = vrot.slane %v2663, %v2740
    %v2742 = vlaneseq
    %v2743 = vshrl.u32 %v2742, 7
    %v2744 = vsub.s32 1, %v2743
    %v2745 = vrot.slane %v2663, %v2744
    %v2746 = vlaneseq
    %v2747 = vshrl.u32 %v2746, 7
    %v2748 = vsub.s32 2, %v2747
    %v2749 = vrot.slane %v2663, %v2748
    %v2750 = vlaneseq
    %v2751 = vshrl.u32 %v2750, 7
    %v2752 = vsub.s32 3, %v2751
    %v2753 = vrot.slane %v2663, %v2752
    %v2754 = vlaneseq
    %v2755 = vshrl.u32 %v2754, 7
    %v2756 = vsub.s32 4, %v2755
    %v2757 = vrot.slane %v2663, %v2756
    %v2758 = vlaneseq
    %v2759 = vshrl.u32 %v2758, 7
    %v2760 = vsub.s32 5, %v2759
    %v2761 = vrot.slane %v2663, %v2760
    %v2762 = vlaneseq
    %v2763 = vshrl.u32 %v2762, 7
    %v2764 = vsub.s32 6, %v2763
    %v2765 = vrot.slane %v2663, %v2764
    %v2766 = vlaneseq
    %v2767 = vshrl.u32 %v2766, 7
    %v2768 = vsub.s32 7, %v2767
    %v2769 = vrot.slane %v2663, %v2768
    %v2770 = vlaneseq
    %v2771 = vshrl.u32 %v2770, 7
    %v2772 = vsub.s32 0, %v2771
    %v2773 = vrot.slane %v2664, %v2772
    %v2774 = vlaneseq
    %v2775 = vshrl.u32 %v2774, 7
    %v2776 = vsub.s32 1, %v2775
    %v2777 = vrot.slane %v2664, %v2776
    %v2778 = vlaneseq
    %v2779 = vshrl.u32 %v2778, 7
    %v2780 = vsub.s32 2, %v2779
    %v2781 = vrot.slane %v2664, %v2780
    %v2782 = vlaneseq
    %v2783 = vshrl.u32 %v2782, 7
    %v2784 = vsub.s32 3, %v2783
    %v2785 = vrot.slane %v2664, %v2784
    %v2786 = vlaneseq
    %v2787 = vshrl.u32 %v2786, 7
    %v2788 = vsub.s32 4, %v2787
    %v2789 = vrot.slane %v2664, %v2788
    %v2790 = vlaneseq
    %v2791 = vshrl.u32 %v2790, 7
    %v2792 = vsub.s32 5, %v2791
    %v2793 = vrot.slane %v2664, %v2792
    %v2794 = vlaneseq
    %v2795 = vshrl.u32 %v2794, 7
    %v2796 = vsub.s32 6, %v2795
    %v2797 = vrot.slane %v2664, %v2796
    %v2798 = vlaneseq
    %v2799 = vshrl.u32 %v2798, 7
    %v2800 = vsub.s32 7, %v2799
    %v2801 = vrot.slane %v2664, %v2800
    %v2802 = vlaneseq
    %v2803 = vshrl.u32 %v2802, 7
    %v2804 = vsub.s32 0, %v2803
    %v2805 = vrot.slane %v2665, %v2804
    %v2806 = vlaneseq
    %v2807 = vshrl.u32 %v2806, 7
    %v2808 = vsub.s32 1, %v2807
    %v2809 = vrot.slane %v2665, %v2808
    %v2810 = vlaneseq
    %v2811 = vshrl.u32 %v2810, 7
    %v2812 = vsub.s32 2, %v2811
    %v2813 = vrot.slane %v2665, %v2812
    %v2814 = vlaneseq
    %v2815 = vshrl.u32 %v2814, 7
    %v2816 = vsub.s32 3, %v2815
    %v2817 = vrot.slane %v2665, %v2816
    %v2818 = vlaneseq
    %v2819 = vshrl.u32 %v2818, 7
    %v2820 = vsub.s32 4, %v2819
    %v2821 = vrot.slane %v2665, %v2820
    %v2822 = vlaneseq
    %v2823 = vshrl.u32 %v2822, 7
    %v2824 = vsub.s32 5, %v2823
    %v2825 = vrot.slane %v2665, %v2824
    %v2826 = vlaneseq
    %v2827 = vshrl.u32 %v2826, 7
    %v2828 = vsub.s32 6, %v2827
    %v2829 = vrot.slane %v2665, %v2828
    %v2830 = vlaneseq
    %v2831 = vshrl.u32 %v2830, 7
    %v2832 = vsub.s32 7, %v2831
    %v2833 = vrot.slane %v2665, %v2832
    %v2834 = vlaneseq
    %v2835 = vshrl.u32 %v2834, 7
    %v2836 = vsub.s32 0, %v2835
    %v2837 = vrot.slane %v2666, %v2836
    %v2838 = vlaneseq
    %v2839 = vshrl.u32 %v2838, 7
    %v2840 = vsub.s32 1, %v2839
    %v2841 = vrot.slane %v2666, %v2840
    %v2842 = vlaneseq
    %v2843 = vshrl.u32 %v2842, 7
    %v2844 = vsub.s32 2, %v2843
    %v2845 = vrot.slane %v2666, %v2844
    %v2846 = vlaneseq
    %v2847 = vshrl.u32 %v2846, 7
    %v2848 = vsub.s32 3, %v2847
    %v2849 = vrot.slane %v2666, %v2848
    %v2850 = vlaneseq
    %v2851 = vshrl.u32 %v2850, 7
    %v2852 = vsub.s32 4, %v2851
    %v2853 = vrot.slane %v2666, %v2852
    %v2854 = vlaneseq
    %v2855 = vshrl.u32 %v2854, 7
    %v2856 = vsub.s32 5, %v2855
    %v2857 = vrot.slane %v2666, %v2856
    %v2858 = vlaneseq
    %v2859 = vshrl.u32 %v2858, 7
    %v2860 = vsub.s32 6, %v2859
    %v2861 = vrot.slane %v2666, %v2860
    %v2862 = vlaneseq
    %v2863 = vshrl.u32 %v2862, 7
    %v2864 = vsub.s32 7, %v2863
    %v2865 = vrot.slane %v2666, %v2864
    %v2866 = vlaneseq
    %v2867 = vshrl.u32 %v2866, 7
    %v2868 = vsub.s32 0, %v2867
    %v2869 = vrot.slane %v2667, %v2868
    %v2870 = vlaneseq
    %v2871 = vshrl.u32 %v2870, 7
    %v2872 = vsub.s32 1, %v2871
    %v2873 = vrot.slane %v2667, %v2872
    %v2874 = vlaneseq
    %v2875 = vshrl.u32 %v2874, 7
    %v2876 = vsub.s32 2, %v2875
    %v2877 = vrot.slane %v2667, %v2876
    %v2878 = vlaneseq
    %v2879 = vshrl.u32 %v2878, 7
    %v2880 = vsub.s32 3, %v2879
    %v2881 = vrot.slane %v2667, %v2880
    %v2882 = vlaneseq
    %v2883 = vshrl.u32 %v2882, 7
    %v2884 = vsub.s32 4, %v2883
    %v2885 = vrot.slane %v2667, %v2884
    %v2886 = vlaneseq
    %v2887 = vshrl.u32 %v2886, 7
    %v2888 = vsub.s32 5, %v2887
    %v2889 = vrot.slane %v2667, %v2888
    %v2890 = vlaneseq
    %v2891 = vshrl.u32 %v2890, 7
    %v2892 = vsub.s32 6, %v2891
    %v2893 = vrot.slane %v2667, %v2892
    %v2894 = vlaneseq
    %v2895 = vshrl.u32 %v2894, 7
    %v2896 = vsub.s32 7, %v2895
    %v2897 = vrot.slane %v2667, %v2896
    %v2898 = vlaneseq
    %v2899 = vshrl.u32 %v2898, 7
    %v2900 = vsub.s32 0, %v2899
    %v2901 = vrot.slane %v2668, %v2900
    %v2902 = vlaneseq
    %v2903 = vshrl.u32 %v2902, 7
    %v2904 = vsub.s32 1, %v2903
    %v2905 = vrot.slane %v2668, %v2904
    %v2906 = vlaneseq
    %v2907 = vshrl.u32 %v2906, 7
    %v2908 = vsub.s32 2, %v2907
    %v2909 = vrot.slane %v2668, %v2908
    %v2910 = vlaneseq
    %v2911 = vshrl.u32 %v2910, 7
    %v2912 = vsub.s32 3, %v2911
    %v2913 = vrot.slane %v2668, %v2912
    %v2914 = vlaneseq
    %v2915 = vshrl.u32 %v2914, 7
    %v2916 = vsub.s32 4, %v2915
    %v2917 = vrot.slane %v2668, %v2916
    %v2918 = vlaneseq
    %v2919 = vshrl.u32 %v2918, 7
    %v2920 = vsub.s32 5, %v2919
    %v2921 = vrot.slane %v2668, %v2920
    %v2922 = vlaneseq
    %v2923 = vshrl.u32 %v2922, 7
    %v2924 = vsub.s32 6, %v2923
    %v2925 = vrot.slane %v2668, %v2924
    %v2926 = vlaneseq
    %v2927 = vshrl.u32 %v2926, 7
    %v2928 = vsub.s32 7, %v2927
    %v2929 = vrot.slane %v2668, %v2928
    %v2930 = vlaneseq
    %v2931 = vshrl.u32 %v2930, 7
    %v2932 = vsub.s32 0, %v2931
    %v2933 = vrot.slane %v2669, %v2932
    %v2934 = vlaneseq
    %v2935 = vshrl.u32 %v2934, 7
    %v2936 = vsub.s32 1, %v2935
    %v2937 = vrot.slane %v2669, %v2936
    %v2938 = vlaneseq
    %v2939 = vshrl.u32 %v2938, 7
    %v2940 = vsub.s32 2, %v2939
    %v2941 = vrot.slane %v2669, %v2940
    %v2942 = vlaneseq
    %v2943 = vshrl.u32 %v2942, 7
    %v2944 = vsub.s32 3, %v2943
    %v2945 = vrot.slane %v2669, %v2944
    %v2946 = vlaneseq
    %v2947 = vshrl.u32 %v2946, 7
    %v2948 = vsub.s32 4, %v2947
    %v2949 = vrot.slane %v2669, %v2948
    %v2950 = vlaneseq
    %v2951 = vshrl.u32 %v2950, 7
    %v2952 = vsub.s32 5, %v2951
    %v2953 = vrot.slane %v2669, %v2952
    %v2954 = vlaneseq
    %v2955 = vshrl.u32 %v2954, 7
    %v2956 = vsub.s32 6, %v2955
    %v2957 = vrot.slane %v2669, %v2956
    %v2958 = vlaneseq
    %v2959 = vshrl.u32 %v2958, 7
    %v2960 = vsub.s32 7, %v2959
    %v2961 = vrot.slane %v2669, %v2960
    %v2962 = vlaneseq
    %v2963 = vshrl.u32 %v2962, 7
    %v2964 = vsub.s32 0, %v2963
    %v2965 = vrot.slane %v2670, %v2964
    %v2966 = vlaneseq
    %v2967 = vshrl.u32 %v2966, 7
    %v2968 = vsub.s32 1, %v2967
    %v2969 = vrot.slane %v2670, %v2968
    %v2970 = vlaneseq
    %v2971 = vshrl.u32 %v2970, 7
    %v2972 = vsub.s32 2, %v2971
    %v2973 = vrot.slane %v2670, %v2972
    %v2974 = vlaneseq
    %v2975 = vshrl.u32 %v2974, 7
    %v2976 = vsub.s32 3, %v2975
    %v2977 = vrot.slane %v2670, %v2976
    %v2978 = vlaneseq
    %v2979 = vshrl.u32 %v2978, 7
    %v2980 = vsub.s32 4, %v2979
    %v2981 = vrot.slane %v2670, %v2980
    %v2982 = vlaneseq
    %v2983 = vshrl.u32 %v2982, 7
    %v2984 = vsub.s32 5, %v2983
    %v2985 = vrot.slane %v2670, %v2984
    %v2986 = vlaneseq
    %v2987 = vshrl.u32 %v2986, 7
    %v2988 = vsub.s32 6, %v2987
    %v2989 = vrot.slane %v2670, %v2988
    %v2990 = vlaneseq
    %v2991 = vshrl.u32 %v2990, 7
    %v2992 = vsub.s32 7, %v2991
    %v2993 = vrot.slane %v2670, %v2992
    %v2994 = vlaneseq
    %v2995 = vshrl.u32 %v2994, 7
    %v2996 = vsub.s32 0, %v2995
    %v2997 = vrot.slane %v2671, %v2996
    %v2998 = vlaneseq
    %v2999 = vshrl.u32 %v2998, 7
    %v3000 = vsub.s32 1, %v2999
    %v3001 = vrot.slane %v2671, %v3000
    %v3002 = vlaneseq
    %v3003 = vshrl.u32 %v3002, 7
    %v3004 = vsub.s32 2, %v3003
    %v3005 = vrot.slane %v2671, %v3004
    %v3006 = vlaneseq
    %v3007 = vshrl.u32 %v3006, 7
    %v3008 = vsub.s32 3, %v3007
    %v3009 = vrot.slane %v2671, %v3008
    %v3010 = vlaneseq
    %v3011 = vshrl.u32 %v3010, 7
    %v3012 = vsub.s32 4, %v3011
    %v3013 = vrot.slane %v2671, %v3012
    %v3014 = vlaneseq
    %v3015 = vshrl.u32 %v3014, 7
    %v3016 = vsub.s32 5, %v3015
    %v3017 = vrot.slane %v2671, %v3016
    %v3018 = vlaneseq
    %v3019 = vshrl.u32 %v3018, 7
    %v3020 = vsub.s32 6, %v3019
    %v3021 = vrot.slane %v2671, %v3020
    %v3022 = vlaneseq
    %v3023 = vshrl.u32 %v3022, 7
    %v3024 = vsub.s32 7, %v3023
    %v3025 = vrot.slane %v2671, %v3024
    %v3026 = vlaneseq
    %v3027 = vshrl.u32 %v3026, 7
    %v3028 = vsub.s32 0, %v3027
    %v3029 = vrot.slane %v2672, %v3028
    %v3030 = vlaneseq
    %v3031 = vshrl.u32 %v3030, 7
    %v3032 = vsub.s32 1, %v3031
    %v3033 = vrot.slane %v2672, %v3032
    %v3034 = vlaneseq
    %v3035 = vshrl.u32 %v3034, 7
    %v3036 = vsub.s32 2, %v3035
    %v3037 = vrot.slane %v2672, %v3036
    %v3038 = vlaneseq
    %v3039 = vshrl.u32 %v3038, 7
    %v3040 = vsub.s32 3, %v3039
    %v3041 = vrot.slane %v2672, %v3040
    %v3042 = vlaneseq
    %v3043 = vshrl.u32 %v3042, 7
    %v3044 = vsub.s32 4, %v3043
    %v3045 = vrot.slane %v2672, %v3044
    %v3046 = vlaneseq
    %v3047 = vshrl.u32 %v3046, 7
    %v3048 = vsub.s32 5, %v3047
    %v3049 = vrot.slane %v2672, %v3048
    %v3050 = vlaneseq
    %v3051 = vshrl.u32 %v3050, 7
    %v3052 = vsub.s32 6, %v3051
    %v3053 = vrot.slane %v2672, %v3052
    %v3054 = vlaneseq
    %v3055 = vshrl.u32 %v3054, 7
    %v3056 = vsub.s32 7, %v3055
    %v3057 = vrot.slane %v2672, %v3056
    %v3058 = vlaneseq
    %v3059 = vshrl.u32 %v3058, 7
    %v3060 = vsub.s32 0, %v3059
    %v3061 = vrot.slane %v2673, %v3060
    %v3062 = vlaneseq
    %v3063 = vshrl.u32 %v3062, 7
    %v3064 = vsub.s32 1, %v3063
    %v3065 = vrot.slane %v2673, %v3064
    %v3066 = vlaneseq
    %v3067 = vshrl.u32 %v3066, 7
    %v3068 = vsub.s32 2, %v3067
    %v3069 = vrot.slane %v2673, %v3068
    %v3070 = vlaneseq
    %v3071 = vshrl.u32 %v3070, 7
    %v3072 = vsub.s32 3, %v3071
    %v3073 = vrot.slane %v2673, %v3072
    %v3074 = vlaneseq
    %v3075 = vshrl.u32 %v3074, 7
    %v3076 = vsub.s32 4, %v3075
    %v3077 = vrot.slane %v2673, %v3076
    %v3078 = vlaneseq
    %v3079 = vshrl.u32 %v3078, 7
    %v3080 = vsub.s32 5, %v3079
    %v3081 = vrot.slane %v2673, %v3080
    %v3082 = vlaneseq
    %v3083 = vshrl.u32 %v3082, 7
    %v3084 = vsub.s32 6, %v3083
    %v3085 = vrot.slane %v2673, %v3084
    %v3086 = vlaneseq
    %v3087 = vshrl.u32 %v3086, 7
    %v3088 = vsub.s32 7, %v3087
    %v3089 = vrot.slane %v2673, %v3088
    %v3090 = vlaneseq
    %v3091 = vshrl.u32 %v3090, 7
    %v3092 = vsub.s32 0, %v3091
    %v3093 = vrot.slane %v2674, %v3092
    %v3094 = vlaneseq
    %v3095 = vshrl.u32 %v3094, 7
    %v3096 = vsub.s32 1, %v3095
    %v3097 = vrot.slane %v2674, %v3096
    %v3098 = vlaneseq
    %v3099 = vshrl.u32 %v3098, 7
    %v3100 = vsub.s32 2, %v3099
    %v3101 = vrot.slane %v2674, %v3100
    %v3102 = vlaneseq
    %v3103 = vshrl.u32 %v3102, 7
    %v3104 = vsub.s32 3, %v3103
    %v3105 = vrot.slane %v2674, %v3104
    %v3106 = vlaneseq
    %v3107 = vshrl.u32 %v3106, 7
    %v3108 = vsub.s32 4, %v3107
    %v3109 = vrot.slane %v2674, %v3108
    %v3110 = vlaneseq
    %v3111 = vshrl.u32 %v3110, 7
    %v3112 = vsub.s32 5, %v3111
    %v3113 = vrot.slane %v2674, %v3112
    %v3114 = vlaneseq
    %v3115 = vshrl.u32 %v3114, 7
    %v3116 = vsub.s32 6, %v3115
    %v3117 = vrot.slane %v2674, %v3116
    %v3118 = vlaneseq
    %v3119 = vshrl.u32 %v3118, 7
    %v3120 = vsub.s32 7, %v3119
    %v3121 = vrot.slane %v2674, %v3120
    %v3122 = vlaneseq
    %v3123 = vshrl.u32 %v3122, 7
    %v3124 = vsub.s32 0, %v3123
    %v3125 = vrot.slane %v2675, %v3124
    %v3126 = vlaneseq
    %v3127 = vshrl.u32 %v3126, 7
    %v3128 = vsub.s32 1, %v3127
    %v3129 = vrot.slane %v2675, %v3128
    %v3130 = vlaneseq
    %v3131 = vshrl.u32 %v3130, 7
    %v3132 = vsub.s32 2, %v3131
    %v3133 = vrot.slane %v2675, %v3132
    %v3134 = vlaneseq
    %v3135 = vshrl.u32 %v3134, 7
    %v3136 = vsub.s32 3, %v3135
    %v3137 = vrot.slane %v2675, %v3136
    %v3138 = vlaneseq
    %v3139 = vshrl.u32 %v3138, 7
    %v3140 = vsub.s32 4, %v3139
    %v3141 = vrot.slane %v2675, %v3140
    %v3142 = vlaneseq
    %v3143 = vshrl.u32 %v3142, 7
    %v3144 = vsub.s32 5, %v3143
    %v3145 = vrot.slane %v2675, %v3144
    %v3146 = vlaneseq
    %v3147 = vshrl.u32 %v3146, 7
    %v3148 = vsub.s32 6, %v3147
    %v3149 = vrot.slane %v2675, %v3148
    %v3150 = vlaneseq
    %v3151 = vshrl.u32 %v3150, 7
    %v3152 = vsub.s32 7, %v3151
    %v3153 = vrot.slane %v2675, %v3152
    %v3154 = vlaneseq
    %v3155 = vshrl.u32 %v3154, 7
    %v3156 = vsub.s32 0, %v3155
    %v3157 = vrot.slane %v2676, %v3156
    %v3158 = vlaneseq
    %v3159 = vshrl.u32 %v3158, 7
    %v3160 = vsub.s32 1, %v3159
    %v3161 = vrot.slane %v2676, %v3160
    %v3162 = vlaneseq
    %v3163 = vshrl.u32 %v3162, 7
    %v3164 = vsub.s32 2, %v3163
    %v3165 = vrot.slane %v2676, %v3164
    %v3166 = vlaneseq
    %v3167 = vshrl.u32 %v3166, 7
    %v3168 = vsub.s32 3, %v3167
    %v3169 = vrot.slane %v2676, %v3168
    %v3170 = vlaneseq
    %v3171 = vshrl.u32 %v3170, 7
    %v3172 = vsub.s32 4, %v3171
    %v3173 = vrot.slane %v2676, %v3172
    %v3174 = vlaneseq
    %v3175 = vshrl.u32 %v3174, 7
    %v3176 = vsub.s32 5, %v3175
    %v3177 = vrot.slane %v2676, %v3176
    %v3178 = vlaneseq
    %v3179 = vshrl.u32 %v3178, 7
    %v3180 = vsub.s32 6, %v3179
    %v3181 = vrot.slane %v2676, %v3180
    %v3182 = vlaneseq
    %v3183 = vshrl.u32 %v3182, 7
    %v3184 = vsub.s32 7, %v3183
    %v3185 = vrot.slane %v2676, %v3184
    %v3186 = vlaneseq
    %v3187 = vshrl.u32 %v3186, 7
    %v3188 = vsub.s32 0, %v3187
    %v3189 = vrot.slane %v2677, %v3188
    %v3190 = vlaneseq
    %v3191 = vshrl.u32 %v3190, 7
    %v3192 = vsub.s32 1, %v3191
    %v3193 = vrot.slane %v2677, %v3192
    %v3194 = vlaneseq
    %v3195 = vshrl.u32 %v3194, 7
    %v3196 = vsub.s32 2, %v3195
    %v3197 = vrot.slane %v2677, %v3196
    %v3198 = vlaneseq
    %v3199 = vshrl.u32 %v3198, 7
    %v3200 = vsub.s32 3, %v3199
    %v3201 = vrot.slane %v2677, %v3200
    %v3202 = vlaneseq
    %v3203 = vshrl.u32 %v3202, 7
    %v3204 = vsub.s32 4, %v3203
    %v3205 = vrot.slane %v2677, %v3204
    %v3206 = vlaneseq
    %v3207 = vshrl.u32 %v3206, 7
    %v3208 = vsub.s32 5, %v3207
    %v3209 = vrot.slane %v2677, %v3208
    %v3210 = vlaneseq
    %v3211 = vshrl.u32 %v3210, 7
    %v3212 = vsub.s32 6, %v3211
    %v3213 = vrot.slane %v2677, %v3212
    %v3214 = vlaneseq
    %v3215 = vshrl.u32 %v3214, 7
    %v3216 = vsub.s32 7, %v3215
    %v3217 = vrot.slane %v2677, %v3216
    %v3218 = vlaneseq
    %v3219 = vshrl.u32 %v3218, 7
    %v3220 = vsub.s32 0, %v3219
    %v3221 = vrot.slane %v2678, %v3220
    %v3222 = vlaneseq
    %v3223 = vshrl.u32 %v3222, 7
    %v3224 = vsub.s32 1, %v3223
    %v3225 = vrot.slane %v2678, %v3224
    %v3226 = vlaneseq
    %v3227 = vshrl.u32 %v3226, 7
    %v3228 = vsub.s32 2, %v3227
    %v3229 = vrot.slane %v2678, %v3228
    %v3230 = vlaneseq
    %v3231 = vshrl.u32 %v3230, 7
    %v3232 = vsub.s32 3, %v3231
    %v3233 = vrot.slane %v2678, %v3232
    %v3234 = vlaneseq
    %v3235 = vshrl.u32 %v3234, 7
    %v3236 = vsub.s32 4, %v3235
    %v3237 = vrot.slane %v2678, %v3236
    %v3238 = vlaneseq
    %v3239 = vshrl.u32 %v3238, 7
    %v3240 = vsub.s32 5, %v3239
    %v3241 = vrot.slane %v2678, %v3240
    %v3242 = vlaneseq
    %v3243 = vshrl.u32 %v3242, 7
    %v3244 = vsub.s32 6, %v3243
    %v3245 = vrot.slane %v2678, %v3244
    %v3246 = vlaneseq
    %v3247 = vshrl.u32 %v3246, 7
    %v3248 = vsub.s32 7, %v3247
    %v3249 = vrot.slane %v2678, %v3248
    %v3250 = vlaneseq
    %v3251 = vshrl.u32 %v3250, 7
    %v3252 = vsub.s32 0, %v3251
    %v3253 = vrot.slane %v2679, %v3252
    %v3254 = vlaneseq
    %v3255 = vshrl.u32 %v3254, 7
    %v3256 = vsub.s32 1, %v3255
    %v3257 = vrot.slane %v2679, %v3256
    %v3258 = vlaneseq
    %v3259 = vshrl.u32 %v3258, 7
    %v3260 = vsub.s32 2, %v3259
    %v3261 = vrot.slane %v2679, %v3260
    %v3262 = vlaneseq
    %v3263 = vshrl.u32 %v3262, 7
    %v3264 = vsub.s32 3, %v3263
    %v3265 = vrot.slane %v2679, %v3264
    %v3266 = vlaneseq
    %v3267 = vshrl.u32 %v3266, 7
    %v3268 = vsub.s32 4, %v3267
    %v3269 = vrot.slane %v2679, %v3268
    %v3270 = vlaneseq
    %v3271 = vshrl.u32 %v3270, 7
    %v3272 = vsub.s32 5, %v3271
    %v3273 = vrot.slane %v2679, %v3272
    %v3274 = vlaneseq
    %v3275 = vshrl.u32 %v3274, 7
    %v3276 = vsub.s32 6, %v3275
    %v3277 = vrot.slane %v2679, %v3276
    %v3278 = vlaneseq
    %v3279 = vshrl.u32 %v3278, 7
    %v3280 = vsub.s32 7, %v3279
    %v3281 = vrot.slane %v2679, %v3280
    %v3282 = vlaneseq
    %v3283 = vshrl.u32 %v3282, 7
    %v3284 = vsub.s32 0, %v3283
    %v3285 = vrot.slane %v2680, %v3284
    %v3286 = vlaneseq
    %v3287 = vshrl.u32 %v3286, 7
    %v3288 = vsub.s32 1, %v3287
    %v3289 = vrot.slane %v2680, %v3288
    %v3290 = vlaneseq
    %v3291 = vshrl.u32 %v3290, 7
    %v3292 = vsub.s32 2, %v3291
    %v3293 = vrot.slane %v2680, %v3292
    %v3294 = vlaneseq
    %v3295 = vshrl.u32 %v3294, 7
    %v3296 = vsub.s32 3, %v3295
    %v3297 = vrot.slane %v2680, %v3296
    %v3298 = vlaneseq
    %v3299 = vshrl.u32 %v3298, 7
    %v3300 = vsub.s32 4, %v3299
    %v3301 = vrot.slane %v2680, %v3300
    %v3302 = vlaneseq
    %v3303 = vshrl.u32 %v3302, 7
    %v3304 = vsub.s32 5, %v3303
    %v3305 = vrot.slane %v2680, %v3304
    %v3306 = vlaneseq
    %v3307 = vshrl.u32 %v3306, 7
    %v3308 = vsub.s32 6, %v3307
    %v3309 = vrot.slane %v2680, %v3308
    %v3310 = vlaneseq
    %v3311 = vshrl.u32 %v3310, 7
    %v3312 = vsub.s32 7, %v3311
    %v3313 = vrot.slane %v2680, %v3312
    %v3314 = vlaneseq
    %v3315 = vshrl.u32 %v3314, 7
    %v3316 = vsub.s32 0, %v3315
    %v3317 = vrot.slane %v2681, %v3316
    %v3318 = vlaneseq
    %v3319 = vshrl.u32 %v3318, 7
    %v3320 = vsub.s32 1, %v3319
    %v3321 = vrot.slane %v2681, %v3320
    %v3322 = vlaneseq
    %v3323 = vshrl.u32 %v3322, 7
    %v3324 = vsub.s32 2, %v3323
    %v3325 = vrot.slane %v2681, %v3324
    %v3326 = vlaneseq
    %v3327 = vshrl.u32 %v3326, 7
    %v3328 = vsub.s32 3, %v3327
    %v3329 = vrot.slane %v2681, %v3328
    %v3330 = vlaneseq
    %v3331 = vshrl.u32 %v3330, 7
    %v3332 = vsub.s32 4, %v3331
    %v3333 = vrot.slane %v2681, %v3332
    %v3334 = vlaneseq
    %v3335 = vshrl.u32 %v3334, 7
    %v3336 = vsub.s32 5, %v3335
    %v3337 = vrot.slane %v2681, %v3336
    %v3338 = vlaneseq
    %v3339 = vshrl.u32 %v3338, 7
    %v3340 = vsub.s32 6, %v3339
    %v3341 = vrot.slane %v2681, %v3340
    %v3342 = vlaneseq
    %v3343 = vshrl.u32 %v3342, 7
    %v3344 = vsub.s32 7, %v3343
    %v3345 = vrot.slane %v2681, %v3344
    %v3346 = vlaneseq
    %v3347 = vshrl.u32 %v3346, 7
    %v3348 = vsub.s32 0, %v3347
    %v3349 = vrot.slane %v2682, %v3348
    %v3350 = vlaneseq
    %v3351 = vshrl.u32 %v3350, 7
    %v3352 = vsub.s32 1, %v3351
    %v3353 = vrot.slane %v2682, %v3352
    %v3354 = vlaneseq
    %v3355 = vshrl.u32 %v3354, 7
    %v3356 = vsub.s32 2, %v3355
    %v3357 = vrot.slane %v2682, %v3356
    %v3358 = vlaneseq
    %v3359 = vshrl.u32 %v3358, 7
    %v3360 = vsub.s32 3, %v3359
    %v3361 = vrot.slane %v2682, %v3360
    %v3362 = vlaneseq
    %v3363 = vshrl.u32 %v3362, 7
    %v3364 = vsub.s32 4, %v3363
    %v3365 = vrot.slane %v2682, %v3364
    %v3366 = vlaneseq
    %v3367 = vshrl.u32 %v3366, 7
    %v3368 = vsub.s32 5, %v3367
    %v3369 = vrot.slane %v2682, %v3368
    %v3370 = vlaneseq
    %v3371 = vshrl.u32 %v3370, 7
    %v3372 = vsub.s32 6, %v3371
    %v3373 = vrot.slane %v2682, %v3372
    %v3374 = vlaneseq
    %v3375 = vshrl.u32 %v3374, 7
    %v3376 = vsub.s32 7, %v3375
    %v3377 = vrot.slane %v2682, %v3376
    %v3378 = vlaneseq
    %v3379 = vshrl.u32 %v3378, 7
    %v3380 = vsub.s32 0, %v3379
    %v3381 = vrot.slane %v2683, %v3380
    %v3382 = vlaneseq
    %v3383 = vshrl.u32 %v3382, 7
    %v3384 = vsub.s32 1, %v3383
    %v3385 = vrot.slane %v2683, %v3384
    %v3386 = vlaneseq
    %v3387 = vshrl.u32 %v3386, 7
    %v3388 = vsub.s32 2, %v3387
    %v3389 = vrot.slane %v2683, %v3388
    %v3390 = vlaneseq
    %v3391 = vshrl.u32 %v3390, 7
    %v3392 = vsub.s32 3, %v3391
    %v3393 = vrot.slane %v2683, %v3392
    %v3394 = vlaneseq
    %v3395 = vshrl.u32 %v3394, 7
    %v3396 = vsub.s32 4, %v3395
    %v3397 = vrot.slane %v2683, %v3396
    %v3398 = vlaneseq
    %v3399 = vshrl.u32 %v3398, 7
    %v3400 = vsub.s32 5, %v3399
    %v3401 = vrot.slane %v2683, %v3400
    %v3402 = vlaneseq
    %v3403 = vshrl.u32 %v3402, 7
    %v3404 = vsub.s32 6, %v3403
    %v3405 = vrot.slane %v2683, %v3404
    %v3406 = vlaneseq
    %v3407 = vshrl.u32 %v3406, 7
    %v3408 = vsub.s32 7, %v3407
    %v3409 = vrot.slane %v2683, %v3408
    %v3586 = vsel %vm2486, %v2709, 0.0
    %v3587 = vsel %vm2487, %v2713, 0.0
    %v3588 = vsel %vm2488, %v2717, 0.0
    %v3589 = vsel %vm2489, %v2721, 0.0
    %v3590 = vsel %vm2490, %v2725, 0.0
    %v3591 = vsel %vm2491, %v2729, 0.0
    %v3592 = vsel %vm2492, %v2733, 0.0
    %v3593 = vsel %vm2493, %v2737, 0.0
    %v3594 = vsel %vm2494, %v2741, 0.0
    %v3595 = vsel %vm2495, %v2745, 0.0
    %v3596 = vsel %vm2496, %v2749, 0.0
    %v3597 = vsel %vm2497, %v2753, 0.0
    %v3598 = vsel %vm2498, %v2757, 0.0
    %v3599 = vsel %vm2499, %v2761, 0.0
    %v3600 = vsel %vm2500, %v2765, 0.0
    %v3601 = vsel %vm2501, %v2769, 0.0
    %v3602 = vsel %vm2502, %v2773, 0.0
    %v3603 = vsel %vm2503, %v2777, 0.0
    %v3604 = vsel %vm2504, %v2781, 0.0
    %v3605 = vsel %vm2505, %v2785, 0.0
    %v3606 = vsel %vm2506, %v2789, 0.0
    %v3607 = vsel %vm2507, %v2793, 0.0
    %v3608 = vsel %vm2508, %v2797, 0.0
    %v3609 = vsel %vm2509, %v2801, 0.0
    %v3610 = vsel %vm2510, %v2805, 0.0
    %v3611 = vsel %vm2511, %v2809, 0.0
    %v3612 = vsel %vm2512, %v2813, 0.0
    %v3613 = vsel %vm2513, %v2817, 0.0
    %v3614 = vsel %vm2514, %v2821, 0.0
    %v3615 = vsel %vm2515, %v2825, 0.0
    %v3616 = vsel %vm2516, %v2829, 0.0
    %v3617 = vsel %vm2517, %v2833, 0.0
    %v3618 = vsel %vm2518, %v2837, 0.0
    %v3619 = vsel %vm2519, %v2841, 0.0
    %v3620 = vsel %vm2520, %v2845, 0.0
    %v3621 = vsel %vm2521, %v2849, 0.0
    %v3622 = vsel %vm2522, %v2853, 0.0
    %v3623 = vsel %vm2523, %v2857, 0.0
    %v3624 = vsel %vm2524, %v2861, 0.0
    %v3625 = vsel %vm2525, %v2865, 0.0
    %v3626 = vsel %vm2526, %v2869, 0.0
    %v3627 = vsel %vm2527, %v2873, 0.0
    %v3628 = vsel %vm2528, %v2877, 0.0
    %v3629 = vsel %vm2529, %v2881, 0.0
    %v3630 = vsel %vm2530, %v2885, 0.0
    %v3631 = vsel %vm2531, %v2889, 0.0
    %v3632 = vsel %vm2532, %v2893, 0.0
    %v3633 = vsel %vm2533, %v2897, 0.0
    %v3634 = vsel %vm2534, %v2901, 0.0
    %v3635 = vsel %vm2535, %v2905, 0.0
    %v3636 = vsel %vm2536, %v2909, 0.0
    %v3637 = vsel %vm2537, %v2913, 0.0
    %v3638 = vsel %vm2538, %v2917, 0.0
    %v3639 = vsel %vm2539, %v2921, 0.0
    %v3640 = vsel %vm2540, %v2925, 0.0
    %v3641 = vsel %vm2541, %v2929, 0.0
    %v3642 = vsel %vm2542, %v2933, 0.0
    %v3643 = vsel %vm2543, %v2937, 0.0
    %v3644 = vsel %vm2544, %v2941, 0.0
    %v3645 = vsel %vm2545, %v2945, 0.0
    %v3646 = vsel %vm2546, %v2949, 0.0
    %v3647 = vsel %vm2547, %v2953, 0.0
    %v3648 = vsel %vm2548, %v2957, 0.0
    %v3649 = vsel %vm2549, %v2961, 0.0
    %v3650 = vsel %vm2550, %v2965, 0.0
    %v3651 = vsel %vm2551, %v2969, 0.0
    %v3652 = vsel %vm2552, %v2973, 0.0
    %v3653 = vsel %vm2553, %v2977, 0.0
    %v3654 = vsel %vm2554, %v2981, 0.0
    %v3655 = vsel %vm2555, %v2985, 0.0
    %v3656 = vsel %vm2556, %v2989, 0.0
    %v3657 = vsel %vm2557, %v2993, 0.0
    %v3658 = vsel %vm2558, %v2997, 0.0
    %v3659 = vsel %vm2559, %v3001, 0.0
    %v3660 = vsel %vm2560, %v3005, 0.0
    %v3661 = vsel %vm2561, %v3009, 0.0
    %v3662 = vsel %vm2562, %v3013, 0.0
    %v3663 = vsel %vm2563, %v3017, 0.0
    %v3664 = vsel %vm2564, %v3021, 0.0
    %v3665 = vsel %vm2565, %v3025, 0.0
    %v3666 = vsel %vm2566, %v3029, 0.0
    %v3667 = vsel %vm2567, %v3033, 0.0
    %v3668 = vsel %vm2568, %v3037, 0.0
    %v3669 = vsel %vm2569, %v3041, 0.0
    %v3670 = vsel %vm2570, %v3045, 0.0
    %v3671 = vsel %vm2571, %v3049, 0.0
    %v3672 = vsel %vm2572, %v3053, 0.0
    %v3673 = vsel %vm2573, %v3057, 0.0
    %v3674 = vsel %vm2574, %v3061, 0.0
    %v3675 = vsel %vm2575, %v3065, 0.0
    %v3676 = vsel %vm2576, %v3069, 0.0
    %v3677 = vsel %vm2577, %v3073, 0.0
    %v3678 = vsel %vm2578, %v3077, 0.0
    %v3679 = vsel %vm2579, %v3081, 0.0
    %v3680 = vsel %vm2580, %v3085, 0.0
    %v3681 = vsel %vm2581, %v3089, 0.0
    %v3682 = vsel %vm2582, %v3093, 0.0
    %v3683 = vsel %vm2583, %v3097, 0.0
    %v3684 = vsel %vm2584, %v3101, 0.0
    %v3685 = vsel %vm2585, %v3105, 0.0
    %v3686 = vsel %vm2586, %v3109, 0.0
    %v3687 = vsel %vm2587, %v3113, 0.0
    %v3688 = vsel %vm2588, %v3117, 0.0
    %v3689 = vsel %vm2589, %v3121, 0.0
    %v3690 = vsel %vm2590, %v3125, 0.0
    %v3691 = vsel %vm2591, %v3129, 0.0
    %v3692 = vsel %vm2592, %v3133, 0.0
    %v3693 = vsel %vm2593, %v3137, 0.0
    %v3694 = vsel %vm2594, %v3141, 0.0
    %v3695 = vsel %vm2595, %v3145, 0.0
    %v3696 = vsel %vm2596, %v3149, 0.0
    %v3697 = vsel %vm2597, %v3153, 0.0
    %v3698 = vsel %vm2598, %v3157, 0.0
    %v3699 = vsel %vm2599, %v3161, 0.0
    %v3700 = vsel %vm2600, %v3165, 0.0
    %v3701 = vsel %vm2601, %v3169, 0.0
    %v3702 = vsel %vm2602, %v3173, 0.0
    %v3703 = vsel %vm2603, %v3177, 0.0
    %v3704 = vsel %vm2604, %v3181, 0.0
    %v3705 = vsel %vm2605, %v3185, 0.0
    %v3706 = vsel %vm2606, %v3189, 0.0
    %v3707 = vsel %vm2607, %v3193, 0.0
    %v3708 = vsel %vm2608, %v3197, 0.0
    %v3709 = vsel %vm2609, %v3201, 0.0
    %v3710 = vsel %vm2610, %v3205, 0.0
    %v3711 = vsel %vm2611, %v3209, 0.0
    %v3712 = vsel %vm2612, %v3213, 0.0
    %v3713 = vsel %vm2613, %v3217, 0.0
    %v3714 = vsel %vm2614, %v3221, 0.0
    %v3715 = vsel %vm2615, %v3225, 0.0
    %v3716 = vsel %vm2616, %v3229, 0.0
    %v3717 = vsel %vm2617, %v3233, 0.0
    %v3718 = vsel %vm2618, %v3237, 0.0
    %v3719 = vsel %vm2619, %v3241, 0.0
    %v3720 = vsel %vm2620, %v3245, 0.0
    %v3721 = vsel %vm2621, %v3249, 0.0
    %v3722 = vsel %vm2622, %v3253, 0.0
    %v3723 = vsel %vm2623, %v3257, 0.0
    %v3724 = vsel %vm2624, %v3261, 0.0
    %v3725 = vsel %vm2625, %v3265, 0.0
    %v3726 = vsel %vm2626, %v3269, 0.0
    %v3727 = vsel %vm2627, %v3273, 0.0
    %v3728 = vsel %vm2628, %v3277, 0.0
    %v3729 = vsel %vm2629, %v3281, 0.0
    %v3730 = vsel %vm2630, %v3285, 0.0
    %v3731 = vsel %vm2631, %v3289, 0.0
    %v3732 = vsel %vm2632, %v3293, 0.0
    %v3733 = vsel %vm2633, %v3297, 0.0
    %v3734 = vsel %vm2634, %v3301, 0.0
    %v3735 = vsel %vm2635, %v3305, 0.0
    %v3736 = vsel %vm2636, %v3309, 0.0
    %v3737 = vsel %vm2637, %v3313, 0.0
    %v3738 = vsel %vm2638, %v3317, 0.0
    %v3739 = vsel %vm2639, %v3321, 0.0
    %v3740 = vsel %vm2640, %v3325, 0.0
    %v3741 = vsel %vm2641, %v3329, 0.0
    %v3742 = vsel %vm2642, %v3333, 0.0
    %v3743 = vsel %vm2643, %v3337, 0.0
    %v3744 = vsel %vm2644, %v3341, 0.0
    %v3745 = vsel %vm2645, %v3345, 0.0
    %v3746 = vsel %vm2646, %v3349, 0.0
    %v3747 = vsel %vm2647, %v3353, 0.0
    %v3748 = vsel %vm2648, %v3357, 0.0
    %v3749 = vsel %vm2649, %v3361, 0.0
    %v3750 = vsel %vm2650, %v3365, 0.0
    %v3751 = vsel %vm2651, %v3369, 0.0
    %v3752 = vsel %vm2652, %v3373, 0.0
    %v3753 = vsel %vm2653, %v3377, 0.0
    %v3754 = vsel %vm2654, %v3381, 0.0
    %v3755 = vsel %vm2655, %v3385, 0.0
    %v3756 = vsel %vm2656, %v3389, 0.0
    %v3757 = vsel %vm2657, %v3393, 0.0
    %v3758 = vsel %vm2658, %v3397, 0.0
    %v3759 = vsel %vm2659, %v3401, 0.0
    %v3760 = vsel %vm2660, %v3405, 0.0
    %v3761 = vsel %vm2661, %v3409, 0.0
    %v3938 = vcombine.low %v3586, %v3587
    %v3939 = vcombine.low %v3588, %v3589
    %v3940 = vcombine.low %v3590, %v3591
    %v3941 = vcombine.low %v3592, %v3593
    %v3943 = vunpack.c.l.s4 1966171168
    %v3944 = vunpack.c.0.s8 %v3943
    %v3945 = vlaneseq
    %v3946 = vshrl.u32 %v3945, 7
    %v3947 = vsub.s32 %v3944, %v3946
    %v3948 = vrot.slane %v3938, %v3947
    %v3950 = vunpack.c.l.s4 1966171168
    %v3951 = vunpack.c.0.s8 %v3950
    %v3952 = vlaneseq
    %v3953 = vshrl.u32 %v3952, 7
    %v3954 = vsub.s32 %v3951, %v3953
    %v3955 = vrot.slane %v3939, %v3954
    %v3957 = vunpack.c.l.s4 1966171168
    %v3958 = vunpack.c.0.s8 %v3957
    %v3959 = vlaneseq
    %v3960 = vshrl.u32 %v3959, 7
    %v3961 = vsub.s32 %v3958, %v3960
    %v3962 = vrot.slane %v3940, %v3961
    %v3964 = vunpack.c.l.s4 1966171168
    %v3965 = vunpack.c.0.s8 %v3964
    %v3966 = vlaneseq
    %v3967 = vshrl.u32 %v3966, 7
    %v3968 = vsub.s32 %v3965, %v3967
    %v3969 = vrot.slane %v3941, %v3968
    %v3970 = vcombine.low %v3948, %v3955
    %v3971 = vcombine.low %v3962, %v3969
    %v3973 = vunpack.c.l.s4 1966171168
    %v3974 = vunpack.c.0.s8 %v3973
    %v3975 = vlaneseq
    %v3976 = vshrl.u32 %v3975, 7
    %v3977 = vsub.s32 %v3974, %v3976
    %v3978 = vrot.slane %v3970, %v3977
    %v3980 = vunpack.c.l.s4 1966171168
    %v3981 = vunpack.c.0.s8 %v3980
    %v3982 = vlaneseq
    %v3983 = vshrl.u32 %v3982, 7
    %v3984 = vsub.s32 %v3981, %v3983
    %v3985 = vrot.slane %v3971, %v3984
    %v3986 = vcombine.low %v3978, %v3985
    %v3987 = vcombine.low %v3594, %v3595
    %v3988 = vcombine.low %v3596, %v3597
    %v3989 = vcombine.low %v3598, %v3599
    %v3990 = vcombine.low %v3600, %v3601
    %v3992 = vunpack.c.l.s4 1966171168
    %v3993 = vunpack.c.0.s8 %v3992
    %v3994 = vlaneseq
    %v3995 = vshrl.u32 %v3994, 7
    %v3996 = vsub.s32 %v3993, %v3995
    %v3997 = vrot.slane %v3987, %v3996
    %v3999 = vunpack.c.l.s4 1966171168
    %v4000 = vunpack.c.0.s8 %v3999
    %v4001 = vlaneseq
    %v4002 = vshrl.u32 %v4001, 7
    %v4003 = vsub.s32 %v4000, %v4002
    %v4004 = vrot.slane %v3988, %v4003
    %v4006 = vunpack.c.l.s4 1966171168
    %v4007 = vunpack.c.0.s8 %v4006
    %v4008 = vlaneseq
    %v4009 = vshrl.u32 %v4008, 7
    %v4010 = vsub.s32 %v4007, %v4009
    %v4011 = vrot.slane %v3989, %v4010
    %v4013 = vunpack.c.l.s4 1966171168
    %v4014 = vunpack.c.0.s8 %v4013
    %v4015 = vlaneseq
    %v4016 = vshrl.u32 %v4015, 7
    %v4017 = vsub.s32 %v4014, %v4016
    %v4018 = vrot.slane %v3990, %v4017
    %v4019 = vcombine.low %v3997, %v4004
    %v4020 = vcombine.low %v4011, %v4018
    %v4022 = vunpack.c.l.s4 1966171168
    %v4023 = vunpack.c.0.s8 %v4022
    %v4024 = vlaneseq
    %v4025 = vshrl.u32 %v4024, 7
    %v4026 = vsub.s32 %v4023, %v4025
    %v4027 = vrot.slane %v4019, %v4026
    %v4029 = vunpack.c.l.s4 1966171168
    %v4030 = vunpack.c.0.s8 %v4029
    %v4031 = vlaneseq
    %v4032 = vshrl.u32 %v4031, 7
    %v4033 = vsub.s32 %v4030, %v4032
    %v4034 = vrot.slane %v4020, %v4033
    %v4035 = vcombine.low %v4027, %v4034
    %v4036 = vcombine.low %v3602, %v3603
    %v4037 = vcombine.low %v3604, %v3605
    %v4038 = vcombine.low %v3606, %v3607
    %v4039 = vcombine.low %v3608, %v3609
    %v4041 = vunpack.c.l.s4 1966171168
    %v4042 = vunpack.c.0.s8 %v4041
    %v4043 = vlaneseq
    %v4044 = vshrl.u32 %v4043, 7
    %v4045 = vsub.s32 %v4042, %v4044
    %v4046 = vrot.slane %v4036, %v4045
    %v4048 = vunpack.c.l.s4 1966171168
    %v4049 = vunpack.c.0.s8 %v4048
    %v4050 = vlaneseq
    %v4051 = vshrl.u32 %v4050, 7
    %v4052 = vsub.s32 %v4049, %v4051
    %v4053 = vrot.slane %v4037, %v4052
    %v4055 = vunpack.c.l.s4 1966171168
    %v4056 = vunpack.c.0.s8 %v4055
    %v4057 = vlaneseq
    %v4058 = vshrl.u32 %v4057, 7
    %v4059 = vsub.s32 %v4056, %v4058
    %v4060 = vrot.slane %v4038, %v4059
    %v4062 = vunpack.c.l.s4 1966171168
    %v4063 = vunpack.c.0.s8 %v4062
    %v4064 = vlaneseq
    %v4065 = vshrl.u32 %v4064, 7
    %v4066 = vsub.s32 %v4063, %v4065
    %v4067 = vrot.slane %v4039, %v4066
    %v4068 = vcombine.low %v4046, %v4053
    %v4069 = vcombine.low %v4060, %v4067
    %v4071 = vunpack.c.l.s4 1966171168
    %v4072 = vunpack.c.0.s8 %v4071
    %v4073 = vlaneseq
    %v4074 = vshrl.u32 %v4073, 7
    %v4075 = vsub.s32 %v4072, %v4074
    %v4076 = vrot.slane %v4068, %v4075
    %v4078 = vunpack.c.l.s4 1966171168
    %v4079 = vunpack.c.0.s8 %v4078
    %v4080 = vlaneseq
    %v4081 = vshrl.u32 %v4080, 7
    %v4082 = vsub.s32 %v4079, %v4081
    %v4083 = vrot.slane %v4069, %v4082
    %v4084 = vcombine.low %v4076, %v4083
    %v4085 = vcombine.low %v3610, %v3611
    %v4086 = vcombine.low %v3612, %v3613
    %v4087 = vcombine.low %v3614, %v3615
    %v4088 = vcombine.low %v3616, %v3617
    %v4090 = vunpack.c.l.s4 1966171168
    %v4091 = vunpack.c.0.s8 %v4090
    %v4092 = vlaneseq
    %v4093 = vshrl.u32 %v4092, 7
    %v4094 = vsub.s32 %v4091, %v4093
    %v4095 = vrot.slane %v4085, %v4094
    %v4097 = vunpack.c.l.s4 1966171168
    %v4098 = vunpack.c.0.s8 %v4097
    %v4099 = vlaneseq
    %v4100 = vshrl.u32 %v4099, 7
    %v4101 = vsub.s32 %v4098, %v4100
    %v4102 = vrot.slane %v4086, %v4101
    %v4104 = vunpack.c.l.s4 1966171168
    %v4105 = vunpack.c.0.s8 %v4104
    %v4106 = vlaneseq
    %v4107 = vshrl.u32 %v4106, 7
    %v4108 = vsub.s32 %v4105, %v4107
    %v4109 = vrot.slane %v4087, %v4108
    %v4111 = vunpack.c.l.s4 1966171168
    %v4112 = vunpack.c.0.s8 %v4111
    %v4113 = vlaneseq
    %v4114 = vshrl.u32 %v4113, 7
    %v4115 = vsub.s32 %v4112, %v4114
    %v4116 = vrot.slane %v4088, %v4115
    %v4117 = vcombine.low %v4095, %v4102
    %v4118 = vcombine.low %v4109, %v4116
    %v4120 = vunpack.c.l.s4 1966171168
    %v4121 = vunpack.c.0.s8 %v4120
    %v4122 = vlaneseq
    %v4123 = vshrl.u32 %v4122, 7
    %v4124 = vsub.s32 %v4121, %v4123
    %v4125 = vrot.slane %v4117, %v4124
    %v4127 = vunpack.c.l.s4 1966171168
    %v4128 = vunpack.c.0.s8 %v4127
    %v4129 = vlaneseq
    %v4130 = vshrl.u32 %v4129, 7
    %v4131 = vsub.s32 %v4128, %v4130
    %v4132 = vrot.slane %v4118, %v4131
    %v4133 = vcombine.low %v4125, %v4132
    %v4134 = vcombine.low %v3618, %v3619
    %v4135 = vcombine.low %v3620, %v3621
    %v4136 = vcombine.low %v3622, %v3623
    %v4137 = vcombine.low %v3624, %v3625
    %v4139 = vunpack.c.l.s4 1966171168
    %v4140 = vunpack.c.0.s8 %v4139
    %v4141 = vlaneseq
    %v4142 = vshrl.u32 %v4141, 7
    %v4143 = vsub.s32 %v4140, %v4142
    %v4144 = vrot.slane %v4134, %v4143
    %v4146 = vunpack.c.l.s4 1966171168
    %v4147 = vunpack.c.0.s8 %v4146
    %v4148 = vlaneseq
    %v4149 = vshrl.u32 %v4148, 7
    %v4150 = vsub.s32 %v4147, %v4149
    %v4151 = vrot.slane %v4135, %v4150
    %v4153 = vunpack.c.l.s4 1966171168
    %v4154 = vunpack.c.0.s8 %v4153
    %v4155 = vlaneseq
    %v4156 = vshrl.u32 %v4155, 7
    %v4157 = vsub.s32 %v4154, %v4156
    %v4158 = vrot.slane %v4136, %v4157
    %v4160 = vunpack.c.l.s4 1966171168
    %v4161 = vunpack.c.0.s8 %v4160
    %v4162 = vlaneseq
    %v4163 = vshrl.u32 %v4162, 7
    %v4164 = vsub.s32 %v4161, %v4163
    %v4165 = vrot.slane %v4137, %v4164
    %v4166 = vcombine.low %v4144, %v4151
    %v4167 = vcombine.low %v4158, %v4165
    %v4169 = vunpack.c.l.s4 1966171168
    %v4170 = vunpack.c.0.s8 %v4169
    %v4171 = vlaneseq
    %v4172 = vshrl.u32 %v4171, 7
    %v4173 = vsub.s32 %v4170, %v4172
    %v4174 = vrot.slane %v4166, %v4173
    %v4176 = vunpack.c.l.s4 1966171168
    %v4177 = vunpack.c.0.s8 %v4176
    %v4178 = vlaneseq
    %v4179 = vshrl.u32 %v4178, 7
    %v4180 = vsub.s32 %v4177, %v4179
    %v4181 = vrot.slane %v4167, %v4180
    %v4182 = vcombine.low %v4174, %v4181
    %v4183 = vcombine.low %v3626, %v3627
    %v4184 = vcombine.low %v3628, %v3629
    %v4185 = vcombine.low %v3630, %v3631
    %v4186 = vcombine.low %v3632, %v3633
    %v4188 = vunpack.c.l.s4 1966171168
    %v4189 = vunpack.c.0.s8 %v4188
    %v4190 = vlaneseq
    %v4191 = vshrl.u32 %v4190, 7
    %v4192 = vsub.s32 %v4189, %v4191
    %v4193 = vrot.slane %v4183, %v4192
    %v4195 = vunpack.c.l.s4 1966171168
    %v4196 = vunpack.c.0.s8 %v4195
    %v4197 = vlaneseq
    %v4198 = vshrl.u32 %v4197, 7
    %v4199 = vsub.s32 %v4196, %v4198
    %v4200 = vrot.slane %v4184, %v4199
    %v4202 = vunpack.c.l.s4 1966171168
    %v4203 = vunpack.c.0.s8 %v4202
    %v4204 = vlaneseq
    %v4205 = vshrl.u32 %v4204, 7
    %v4206 = vsub.s32 %v4203, %v4205
    %v4207 = vrot.slane %v4185, %v4206
    %v4209 = vunpack.c.l.s4 1966171168
    %v4210 = vunpack.c.0.s8 %v4209
    %v4211 = vlaneseq
    %v4212 = vshrl.u32 %v4211, 7
    %v4213 = vsub.s32 %v4210, %v4212
    %v4214 = vrot.slane %v4186, %v4213
    %v4215 = vcombine.low %v4193, %v4200
    %v4216 = vcombine.low %v4207, %v4214
    %v4218 = vunpack.c.l.s4 1966171168
    %v4219 = vunpack.c.0.s8 %v4218
    %v4220 = vlaneseq
    %v4221 = vshrl.u32 %v4220, 7
    %v4222 = vsub.s32 %v4219, %v4221
    %v4223 = vrot.slane %v4215, %v4222
    %v4225 = vunpack.c.l.s4 1966171168
    %v4226 = vunpack.c.0.s8 %v4225
    %v4227 = vlaneseq
    %v4228 = vshrl.u32 %v4227, 7
    %v4229 = vsub.s32 %v4226, %v4228
    %v4230 = vrot.slane %v4216, %v4229
    %v4231 = vcombine.low %v4223, %v4230
    %v4232 = vcombine.low %v3634, %v3635
    %v4233 = vcombine.low %v3636, %v3637
    %v4234 = vcombine.low %v3638, %v3639
    %v4235 = vcombine.low %v3640, %v3641
    %v4237 = vunpack.c.l.s4 1966171168
    %v4238 = vunpack.c.0.s8 %v4237
    %v4239 = vlaneseq
    %v4240 = vshrl.u32 %v4239, 7
    %v4241 = vsub.s32 %v4238, %v4240
    %v4242 = vrot.slane %v4232, %v4241
    %v4244 = vunpack.c.l.s4 1966171168
    %v4245 = vunpack.c.0.s8 %v4244
    %v4246 = vlaneseq
    %v4247 = vshrl.u32 %v4246, 7
    %v4248 = vsub.s32 %v4245, %v4247
    %v4249 = vrot.slane %v4233, %v4248
    %v4251 = vunpack.c.l.s4 1966171168
    %v4252 = vunpack.c.0.s8 %v4251
    %v4253 = vlaneseq
    %v4254 = vshrl.u32 %v4253, 7
    %v4255 = vsub.s32 %v4252, %v4254
    %v4256 = vrot.slane %v4234, %v4255
    %v4258 = vunpack.c.l.s4 1966171168
    %v4259 = vunpack.c.0.s8 %v4258
    %v4260 = vlaneseq
    %v4261 = vshrl.u32 %v4260, 7
    %v4262 = vsub.s32 %v4259, %v4261
    %v4263 = vrot.slane %v4235, %v4262
    %v4264 = vcombine.low %v4242, %v4249
    %v4265 = vcombine.low %v4256, %v4263
    %v4267 = vunpack.c.l.s4 1966171168
    %v4268 = vunpack.c.0.s8 %v4267
    %v4269 = vlaneseq
    %v4270 = vshrl.u32 %v4269, 7
    %v4271 = vsub.s32 %v4268, %v4270
    %v4272 = vrot.slane %v4264, %v4271
    %v4274 = vunpack.c.l.s4 1966171168
    %v4275 = vunpack.c.0.s8 %v4274
    %v4276 = vlaneseq
    %v4277 = vshrl.u32 %v4276, 7
    %v4278 = vsub.s32 %v4275, %v4277
    %v4279 = vrot.slane %v4265, %v4278
    %v4280 = vcombine.low %v4272, %v4279
    %v4281 = vcombine.low %v3642, %v3643
    %v4282 = vcombine.low %v3644, %v3645
    %v4283 = vcombine.low %v3646, %v3647
    %v4284 = vcombine.low %v3648, %v3649
    %v4286 = vunpack.c.l.s4 1966171168
    %v4287 = vunpack.c.0.s8 %v4286
    %v4288 = vlaneseq
    %v4289 = vshrl.u32 %v4288, 7
    %v4290 = vsub.s32 %v4287, %v4289
    %v4291 = vrot.slane %v4281, %v4290
    %v4293 = vunpack.c.l.s4 1966171168
    %v4294 = vunpack.c.0.s8 %v4293
    %v4295 = vlaneseq
    %v4296 = vshrl.u32 %v4295, 7
    %v4297 = vsub.s32 %v4294, %v4296
    %v4298 = vrot.slane %v4282, %v4297
    %v4300 = vunpack.c.l.s4 1966171168
    %v4301 = vunpack.c.0.s8 %v4300
    %v4302 = vlaneseq
    %v4303 = vshrl.u32 %v4302, 7
    %v4304 = vsub.s32 %v4301, %v4303
    %v4305 = vrot.slane %v4283, %v4304
    %v4307 = vunpack.c.l.s4 1966171168
    %v4308 = vunpack.c.0.s8 %v4307
    %v4309 = vlaneseq
    %v4310 = vshrl.u32 %v4309, 7
    %v4311 = vsub.s32 %v4308, %v4310
    %v4312 = vrot.slane %v4284, %v4311
    %v4313 = vcombine.low %v4291, %v4298
    %v4314 = vcombine.low %v4305, %v4312
    %v4316 = vunpack.c.l.s4 1966171168
    %v4317 = vunpack.c.0.s8 %v4316
    %v4318 = vlaneseq
    %v4319 = vshrl.u32 %v4318, 7
    %v4320 = vsub.s32 %v4317, %v4319
    %v4321 = vrot.slane %v4313, %v4320
    %v4323 = vunpack.c.l.s4 1966171168
    %v4324 = vunpack.c.0.s8 %v4323
    %v4325 = vlaneseq
    %v4326 = vshrl.u32 %v4325, 7
    %v4327 = vsub.s32 %v4324, %v4326
    %v4328 = vrot.slane %v4314, %v4327
    %v4329 = vcombine.low %v4321, %v4328
    %v4330 = vcombine.low %v3650, %v3651
    %v4331 = vcombine.low %v3652, %v3653
    %v4332 = vcombine.low %v3654, %v3655
    %v4333 = vcombine.low %v3656, %v3657
    %v4335 = vunpack.c.l.s4 1966171168
    %v4336 = vunpack.c.0.s8 %v4335
    %v4337 = vlaneseq
    %v4338 = vshrl.u32 %v4337, 7
    %v4339 = vsub.s32 %v4336, %v4338
    %v4340 = vrot.slane %v4330, %v4339
    %v4342 = vunpack.c.l.s4 1966171168
    %v4343 = vunpack.c.0.s8 %v4342
    %v4344 = vlaneseq
    %v4345 = vshrl.u32 %v4344, 7
    %v4346 = vsub.s32 %v4343, %v4345
    %v4347 = vrot.slane %v4331, %v4346
    %v4349 = vunpack.c.l.s4 1966171168
    %v4350 = vunpack.c.0.s8 %v4349
    %v4351 = vlaneseq
    %v4352 = vshrl.u32 %v4351, 7
    %v4353 = vsub.s32 %v4350, %v4352
    %v4354 = vrot.slane %v4332, %v4353
    %v4356 = vunpack.c.l.s4 1966171168
    %v4357 = vunpack.c.0.s8 %v4356
    %v4358 = vlaneseq
    %v4359 = vshrl.u32 %v4358, 7
    %v4360 = vsub.s32 %v4357, %v4359
    %v4361 = vrot.slane %v4333, %v4360
    %v4362 = vcombine.low %v4340, %v4347
    %v4363 = vcombine.low %v4354, %v4361
    %v4365 = vunpack.c.l.s4 1966171168
    %v4366 = vunpack.c.0.s8 %v4365
    %v4367 = vlaneseq
    %v4368 = vshrl.u32 %v4367, 7
    %v4369 = vsub.s32 %v4366, %v4368
    %v4370 = vrot.slane %v4362, %v4369
    %v4372 = vunpack.c.l.s4 1966171168
    %v4373 = vunpack.c.0.s8 %v4372
    %v4374 = vlaneseq
    %v4375 = vshrl.u32 %v4374, 7
    %v4376 = vsub.s32 %v4373, %v4375
    %v4377 = vrot.slane %v4363, %v4376
    %v4378 = vcombine.low %v4370, %v4377
    %v4379 = vcombine.low %v3658, %v3659
    %v4380 = vcombine.low %v3660, %v3661
    %v4381 = vcombine.low %v3662, %v3663
    %v4382 = vcombine.low %v3664, %v3665
    %v4384 = vunpack.c.l.s4 1966171168
    %v4385 = vunpack.c.0.s8 %v4384
    %v4386 = vlaneseq
    %v4387 = vshrl.u32 %v4386, 7
    %v4388 = vsub.s32 %v4385, %v4387
    %v4389 = vrot.slane %v4379, %v4388
    %v4391 = vunpack.c.l.s4 1966171168
    %v4392 = vunpack.c.0.s8 %v4391
    %v4393 = vlaneseq
    %v4394 = vshrl.u32 %v4393, 7
    %v4395 = vsub.s32 %v4392, %v4394
    %v4396 = vrot.slane %v4380, %v4395
    %v4398 = vunpack.c.l.s4 1966171168
    %v4399 = vunpack.c.0.s8 %v4398
    %v4400 = vlaneseq
    %v4401 = vshrl.u32 %v4400, 7
    %v4402 = vsub.s32 %v4399, %v4401
    %v4403 = vrot.slane %v4381, %v4402
    %v4405 = vunpack.c.l.s4 1966171168
    %v4406 = vunpack.c.0.s8 %v4405
    %v4407 = vlaneseq
    %v4408 = vshrl.u32 %v4407, 7
    %v4409 = vsub.s32 %v4406, %v4408
    %v4410 = vrot.slane %v4382, %v4409
    %v4411 = vcombine.low %v4389, %v4396
    %v4412 = vcombine.low %v4403, %v4410
    %v4414 = vunpack.c.l.s4 1966171168
    %v4415 = vunpack.c.0.s8 %v4414
    %v4416 = vlaneseq
    %v4417 = vshrl.u32 %v4416, 7
    %v4418 = vsub.s32 %v4415, %v4417
    %v4419 = vrot.slane %v4411, %v4418
    %v4421 = vunpack.c.l.s4 1966171168
    %v4422 = vunpack.c.0.s8 %v4421
    %v4423 = vlaneseq
    %v4424 = vshrl.u32 %v4423, 7
    %v4425 = vsub.s32 %v4422, %v4424
    %v4426 = vrot.slane %v4412, %v4425
    %v4427 = vcombine.low %v4419, %v4426
    %v4428 = vcombine.low %v3666, %v3667
    %v4429 = vcombine.low %v3668, %v3669
    %v4430 = vcombine.low %v3670, %v3671
    %v4431 = vcombine.low %v3672, %v3673
    %v4433 = vunpack.c.l.s4 1966171168
    %v4434 = vunpack.c.0.s8 %v4433
    %v4435 = vlaneseq
    %v4436 = vshrl.u32 %v4435, 7
    %v4437 = vsub.s32 %v4434, %v4436
    %v4438 = vrot.slane %v4428, %v4437
    %v4440 = vunpack.c.l.s4 1966171168
    %v4441 = vunpack.c.0.s8 %v4440
    %v4442 = vlaneseq
    %v4443 = vshrl.u32 %v4442, 7
    %v4444 = vsub.s32 %v4441, %v4443
    %v4445 = vrot.slane %v4429, %v4444
    %v4447 = vunpack.c.l.s4 1966171168
    %v4448 = vunpack.c.0.s8 %v4447
    %v4449 = vlaneseq
    %v4450 = vshrl.u32 %v4449, 7
    %v4451 = vsub.s32 %v4448, %v4450
    %v4452 = vrot.slane %v4430, %v4451
    %v4454 = vunpack.c.l.s4 1966171168
    %v4455 = vunpack.c.0.s8 %v4454
    %v4456 = vlaneseq
    %v4457 = vshrl.u32 %v4456, 7
    %v4458 = vsub.s32 %v4455, %v4457
    %v4459 = vrot.slane %v4431, %v4458
    %v4460 = vcombine.low %v4438, %v4445
    %v4461 = vcombine.low %v4452, %v4459
    %v4463 = vunpack.c.l.s4 1966171168
    %v4464 = vunpack.c.0.s8 %v4463
    %v4465 = vlaneseq
    %v4466 = vshrl.u32 %v4465, 7
    %v4467 = vsub.s32 %v4464, %v4466
    %v4468 = vrot.slane %v4460, %v4467
    %v4470 = vunpack.c.l.s4 1966171168
    %v4471 = vunpack.c.0.s8 %v4470
    %v4472 = vlaneseq
    %v4473 = vshrl.u32 %v4472, 7
    %v4474 = vsub.s32 %v4471, %v4473
    %v4475 = vrot.slane %v4461, %v4474
    %v4476 = vcombine.low %v4468, %v4475
    %v4477 = vcombine.low %v3674, %v3675
    %v4478 = vcombine.low %v3676, %v3677
    %v4479 = vcombine.low %v3678, %v3679
    %v4480 = vcombine.low %v3680, %v3681
    %v4482 = vunpack.c.l.s4 1966171168
    %v4483 = vunpack.c.0.s8 %v4482
    %v4484 = vlaneseq
    %v4485 = vshrl.u32 %v4484, 7
    %v4486 = vsub.s32 %v4483, %v4485
    %v4487 = vrot.slane %v4477, %v4486
    %v4489 = vunpack.c.l.s4 1966171168
    %v4490 = vunpack.c.0.s8 %v4489
    %v4491 = vlaneseq
    %v4492 = vshrl.u32 %v4491, 7
    %v4493 = vsub.s32 %v4490, %v4492
    %v4494 = vrot.slane %v4478, %v4493
    %v4496 = vunpack.c.l.s4 1966171168
    %v4497 = vunpack.c.0.s8 %v4496
    %v4498 = vlaneseq
    %v4499 = vshrl.u32 %v4498, 7
    %v4500 = vsub.s32 %v4497, %v4499
    %v4501 = vrot.slane %v4479, %v4500
    %v4503 = vunpack.c.l.s4 1966171168
    %v4504 = vunpack.c.0.s8 %v4503
    %v4505 = vlaneseq
    %v4506 = vshrl.u32 %v4505, 7
    %v4507 = vsub.s32 %v4504, %v4506
    %v4508 = vrot.slane %v4480, %v4507
    %v4509 = vcombine.low %v4487, %v4494
    %v4510 = vcombine.low %v4501, %v4508
    %v4512 = vunpack.c.l.s4 1966171168
    %v4513 = vunpack.c.0.s8 %v4512
    %v4514 = vlaneseq
    %v4515 = vshrl.u32 %v4514, 7
    %v4516 = vsub.s32 %v4513, %v4515
    %v4517 = vrot.slane %v4509, %v4516
    %v4519 = vunpack.c.l.s4 1966171168
    %v4520 = vunpack.c.0.s8 %v4519
    %v4521 = vlaneseq
    %v4522 = vshrl.u32 %v4521, 7
    %v4523 = vsub.s32 %v4520, %v4522
    %v4524 = vrot.slane %v4510, %v4523
    %v4525 = vcombine.low %v4517, %v4524
    %v4526 = vcombine.low %v3682, %v3683
    %v4527 = vcombine.low %v3684, %v3685
    %v4528 = vcombine.low %v3686, %v3687
    %v4529 = vcombine.low %v3688, %v3689
    %v4531 = vunpack.c.l.s4 1966171168
    %v4532 = vunpack.c.0.s8 %v4531
    %v4533 = vlaneseq
    %v4534 = vshrl.u32 %v4533, 7
    %v4535 = vsub.s32 %v4532, %v4534
    %v4536 = vrot.slane %v4526, %v4535
    %v4538 = vunpack.c.l.s4 1966171168
    %v4539 = vunpack.c.0.s8 %v4538
    %v4540 = vlaneseq
    %v4541 = vshrl.u32 %v4540, 7
    %v4542 = vsub.s32 %v4539, %v4541
    %v4543 = vrot.slane %v4527, %v4542
    %v4545 = vunpack.c.l.s4 1966171168
    %v4546 = vunpack.c.0.s8 %v4545
    %v4547 = vlaneseq
    %v4548 = vshrl.u32 %v4547, 7
    %v4549 = vsub.s32 %v4546, %v4548
    %v4550 = vrot.slane %v4528, %v4549
    %v4552 = vunpack.c.l.s4 1966171168
    %v4553 = vunpack.c.0.s8 %v4552
    %v4554 = vlaneseq
    %v4555 = vshrl.u32 %v4554, 7
    %v4556 = vsub.s32 %v4553, %v4555
    %v4557 = vrot.slane %v4529, %v4556
    %v4558 = vcombine.low %v4536, %v4543
    %v4559 = vcombine.low %v4550, %v4557
    %v4561 = vunpack.c.l.s4 1966171168
    %v4562 = vunpack.c.0.s8 %v4561
    %v4563 = vlaneseq
    %v4564 = vshrl.u32 %v4563, 7
    %v4565 = vsub.s32 %v4562, %v4564
    %v4566 = vrot.slane %v4558, %v4565
    %v4568 = vunpack.c.l.s4 1966171168
    %v4569 = vunpack.c.0.s8 %v4568
    %v4570 = vlaneseq
    %v4571 = vshrl.u32 %v4570, 7
    %v4572 = vsub.s32 %v4569, %v4571
    %v4573 = vrot.slane %v4559, %v4572
    %v4574 = vcombine.low %v4566, %v4573
    %v4575 = vcombine.low %v3690, %v3691
    %v4576 = vcombine.low %v3692, %v3693
    %v4577 = vcombine.low %v3694, %v3695
    %v4578 = vcombine.low %v3696, %v3697
    %v4580 = vunpack.c.l.s4 1966171168
    %v4581 = vunpack.c.0.s8 %v4580
    %v4582 = vlaneseq
    %v4583 = vshrl.u32 %v4582, 7
    %v4584 = vsub.s32 %v4581, %v4583
    %v4585 = vrot.slane %v4575, %v4584
    %v4587 = vunpack.c.l.s4 1966171168
    %v4588 = vunpack.c.0.s8 %v4587
    %v4589 = vlaneseq
    %v4590 = vshrl.u32 %v4589, 7
    %v4591 = vsub.s32 %v4588, %v4590
    %v4592 = vrot.slane %v4576, %v4591
    %v4594 = vunpack.c.l.s4 1966171168
    %v4595 = vunpack.c.0.s8 %v4594
    %v4596 = vlaneseq
    %v4597 = vshrl.u32 %v4596, 7
    %v4598 = vsub.s32 %v4595, %v4597
    %v4599 = vrot.slane %v4577, %v4598
    %v4601 = vunpack.c.l.s4 1966171168
    %v4602 = vunpack.c.0.s8 %v4601
    %v4603 = vlaneseq
    %v4604 = vshrl.u32 %v4603, 7
    %v4605 = vsub.s32 %v4602, %v4604
    %v4606 = vrot.slane %v4578, %v4605
    %v4607 = vcombine.low %v4585, %v4592
    %v4608 = vcombine.low %v4599, %v4606
    %v4610 = vunpack.c.l.s4 1966171168
    %v4611 = vunpack.c.0.s8 %v4610
    %v4612 = vlaneseq
    %v4613 = vshrl.u32 %v4612, 7
    %v4614 = vsub.s32 %v4611, %v4613
    %v4615 = vrot.slane %v4607, %v4614
    %v4617 = vunpack.c.l.s4 1966171168
    %v4618 = vunpack.c.0.s8 %v4617
    %v4619 = vlaneseq
    %v4620 = vshrl.u32 %v4619, 7
    %v4621 = vsub.s32 %v4618, %v4620
    %v4622 = vrot.slane %v4608, %v4621
    %v4623 = vcombine.low %v4615, %v4622
    %v4624 = vcombine.low %v3698, %v3699
    %v4625 = vcombine.low %v3700, %v3701
    %v4626 = vcombine.low %v3702, %v3703
    %v4627 = vcombine.low %v3704, %v3705
    %v4629 = vunpack.c.l.s4 1966171168
    %v4630 = vunpack.c.0.s8 %v4629
    %v4631 = vlaneseq
    %v4632 = vshrl.u32 %v4631, 7
    %v4633 = vsub.s32 %v4630, %v4632
    %v4634 = vrot.slane %v4624, %v4633
    %v4636 = vunpack.c.l.s4 1966171168
    %v4637 = vunpack.c.0.s8 %v4636
    %v4638 = vlaneseq
    %v4639 = vshrl.u32 %v4638, 7
    %v4640 = vsub.s32 %v4637, %v4639
    %v4641 = vrot.slane %v4625, %v4640
    %v4643 = vunpack.c.l.s4 1966171168
    %v4644 = vunpack.c.0.s8 %v4643
    %v4645 = vlaneseq
    %v4646 = vshrl.u32 %v4645, 7
    %v4647 = vsub.s32 %v4644, %v4646
    %v4648 = vrot.slane %v4626, %v4647
    %v4650 = vunpack.c.l.s4 1966171168
    %v4651 = vunpack.c.0.s8 %v4650
    %v4652 = vlaneseq
    %v4653 = vshrl.u32 %v4652, 7
    %v4654 = vsub.s32 %v4651, %v4653
    %v4655 = vrot.slane %v4627, %v4654
    %v4656 = vcombine.low %v4634, %v4641
    %v4657 = vcombine.low %v4648, %v4655
    %v4659 = vunpack.c.l.s4 1966171168
    %v4660 = vunpack.c.0.s8 %v4659
    %v4661 = vlaneseq
    %v4662 = vshrl.u32 %v4661, 7
    %v4663 = vsub.s32 %v4660, %v4662
    %v4664 = vrot.slane %v4656, %v4663
    %v4666 = vunpack.c.l.s4 1966171168
    %v4667 = vunpack.c.0.s8 %v4666
    %v4668 = vlaneseq
    %v4669 = vshrl.u32 %v4668, 7
    %v4670 = vsub.s32 %v4667, %v4669
    %v4671 = vrot.slane %v4657, %v4670
    %v4672 = vcombine.low %v4664, %v4671
    %v4673 = vcombine.low %v3706, %v3707
    %v4674 = vcombine.low %v3708, %v3709
    %v4675 = vcombine.low %v3710, %v3711
    %v4676 = vcombine.low %v3712, %v3713
    %v4678 = vunpack.c.l.s4 1966171168
    %v4679 = vunpack.c.0.s8 %v4678
    %v4680 = vlaneseq
    %v4681 = vshrl.u32 %v4680, 7
    %v4682 = vsub.s32 %v4679, %v4681
    %v4683 = vrot.slane %v4673, %v4682
    %v4685 = vunpack.c.l.s4 1966171168
    %v4686 = vunpack.c.0.s8 %v4685
    %v4687 = vlaneseq
    %v4688 = vshrl.u32 %v4687, 7
    %v4689 = vsub.s32 %v4686, %v4688
    %v4690 = vrot.slane %v4674, %v4689
    %v4692 = vunpack.c.l.s4 1966171168
    %v4693 = vunpack.c.0.s8 %v4692
    %v4694 = vlaneseq
    %v4695 = vshrl.u32 %v4694, 7
    %v4696 = vsub.s32 %v4693, %v4695
    %v4697 = vrot.slane %v4675, %v4696
    %v4699 = vunpack.c.l.s4 1966171168
    %v4700 = vunpack.c.0.s8 %v4699
    %v4701 = vlaneseq
    %v4702 = vshrl.u32 %v4701, 7
    %v4703 = vsub.s32 %v4700, %v4702
    %v4704 = vrot.slane %v4676, %v4703
    %v4705 = vcombine.low %v4683, %v4690
    %v4706 = vcombine.low %v4697, %v4704
    %v4708 = vunpack.c.l.s4 1966171168
    %v4709 = vunpack.c.0.s8 %v4708
    %v4710 = vlaneseq
    %v4711 = vshrl.u32 %v4710, 7
    %v4712 = vsub.s32 %v4709, %v4711
    %v4713 = vrot.slane %v4705, %v4712
    %v4715 = vunpack.c.l.s4 1966171168
    %v4716 = vunpack.c.0.s8 %v4715
    %v4717 = vlaneseq
    %v4718 = vshrl.u32 %v4717, 7
    %v4719 = vsub.s32 %v4716, %v4718
    %v4720 = vrot.slane %v4706, %v4719
    %v4721 = vcombine.low %v4713, %v4720
    %v4722 = vcombine.low %v3714, %v3715
    %v4723 = vcombine.low %v3716, %v3717
    %v4724 = vcombine.low %v3718, %v3719
    %v4725 = vcombine.low %v3720, %v3721
    %v4727 = vunpack.c.l.s4 1966171168
    %v4728 = vunpack.c.0.s8 %v4727
    %v4729 = vlaneseq
    %v4730 = vshrl.u32 %v4729, 7
    %v4731 = vsub.s32 %v4728, %v4730
    %v4732 = vrot.slane %v4722, %v4731
    %v4734 = vunpack.c.l.s4 1966171168
    %v4735 = vunpack.c.0.s8 %v4734
    %v4736 = vlaneseq
    %v4737 = vshrl.u32 %v4736, 7
    %v4738 = vsub.s32 %v4735, %v4737
    %v4739 = vrot.slane %v4723, %v4738
    %v4741 = vunpack.c.l.s4 1966171168
    %v4742 = vunpack.c.0.s8 %v4741
    %v4743 = vlaneseq
    %v4744 = vshrl.u32 %v4743, 7
    %v4745 = vsub.s32 %v4742, %v4744
    %v4746 = vrot.slane %v4724, %v4745
    %v4748 = vunpack.c.l.s4 1966171168
    %v4749 = vunpack.c.0.s8 %v4748
    %v4750 = vlaneseq
    %v4751 = vshrl.u32 %v4750, 7
    %v4752 = vsub.s32 %v4749, %v4751
    %v4753 = vrot.slane %v4725, %v4752
    %v4754 = vcombine.low %v4732, %v4739
    %v4755 = vcombine.low %v4746, %v4753
    %v4757 = vunpack.c.l.s4 1966171168
    %v4758 = vunpack.c.0.s8 %v4757
    %v4759 = vlaneseq
    %v4760 = vshrl.u32 %v4759, 7
    %v4761 = vsub.s32 %v4758, %v4760
    %v4762 = vrot.slane %v4754, %v4761
    %v4764 = vunpack.c.l.s4 1966171168
    %v4765 = vunpack.c.0.s8 %v4764
    %v4766 = vlaneseq
    %v4767 = vshrl.u32 %v4766, 7
    %v4768 = vsub.s32 %v4765, %v4767
    %v4769 = vrot.slane %v4755, %v4768
    %v4770 = vcombine.low %v4762, %v4769
    %v4771 = vcombine.low %v3722, %v3723
    %v4772 = vcombine.low %v3724, %v3725
    %v4773 = vcombine.low %v3726, %v3727
    %v4774 = vcombine.low %v3728, %v3729
    %v4776 = vunpack.c.l.s4 1966171168
    %v4777 = vunpack.c.0.s8 %v4776
    %v4778 = vlaneseq
    %v4779 = vshrl.u32 %v4778, 7
    %v4780 = vsub.s32 %v4777, %v4779
    %v4781 = vrot.slane %v4771, %v4780
    %v4783 = vunpack.c.l.s4 1966171168
    %v4784 = vunpack.c.0.s8 %v4783
    %v4785 = vlaneseq
    %v4786 = vshrl.u32 %v4785, 7
    %v4787 = vsub.s32 %v4784, %v4786
    %v4788 = vrot.slane %v4772, %v4787
    %v4790 = vunpack.c.l.s4 1966171168
    %v4791 = vunpack.c.0.s8 %v4790
    %v4792 = vlaneseq
    %v4793 = vshrl.u32 %v4792, 7
    %v4794 = vsub.s32 %v4791, %v4793
    %v4795 = vrot.slane %v4773, %v4794
    %v4797 = vunpack.c.l.s4 1966171168
    %v4798 = vunpack.c.0.s8 %v4797
    %v4799 = vlaneseq
    %v4800 = vshrl.u32 %v4799, 7
    %v4801 = vsub.s32 %v4798, %v4800
    %v4802 = vrot.slane %v4774, %v4801
    %v4803 = vcombine.low %v4781, %v4788
    %v4804 = vcombine.low %v4795, %v4802
    %v4806 = vunpack.c.l.s4 1966171168
    %v4807 = vunpack.c.0.s8 %v4806
    %v4808 = vlaneseq
    %v4809 = vshrl.u32 %v4808, 7
    %v4810 = vsub.s32 %v4807, %v4809
    %v4811 = vrot.slane %v4803, %v4810
    %v4813 = vunpack.c.l.s4 1966171168
    %v4814 = vunpack.c.0.s8 %v4813
    %v4815 = vlaneseq
    %v4816 = vshrl.u32 %v4815, 7
    %v4817 = vsub.s32 %v4814, %v4816
    %v4818 = vrot.slane %v4804, %v4817
    %v4819 = vcombine.low %v4811, %v4818
    %v4820 = vcombine.low %v3730, %v3731
    %v4821 = vcombine.low %v3732, %v3733
    %v4822 = vcombine.low %v3734, %v3735
    %v4823 = vcombine.low %v3736, %v3737
    %v4825 = vunpack.c.l.s4 1966171168
    %v4826 = vunpack.c.0.s8 %v4825
    %v4827 = vlaneseq
    %v4828 = vshrl.u32 %v4827, 7
    %v4829 = vsub.s32 %v4826, %v4828
    %v4830 = vrot.slane %v4820, %v4829
    %v4832 = vunpack.c.l.s4 1966171168
    %v4833 = vunpack.c.0.s8 %v4832
    %v4834 = vlaneseq
    %v4835 = vshrl.u32 %v4834, 7
    %v4836 = vsub.s32 %v4833, %v4835
    %v4837 = vrot.slane %v4821, %v4836
    %v4839 = vunpack.c.l.s4 1966171168
    %v4840 = vunpack.c.0.s8 %v4839
    %v4841 = vlaneseq
    %v4842 = vshrl.u32 %v4841, 7
    %v4843 = vsub.s32 %v4840, %v4842
    %v4844 = vrot.slane %v4822, %v4843
    %v4846 = vunpack.c.l.s4 1966171168
    %v4847 = vunpack.c.0.s8 %v4846
    %v4848 = vlaneseq
    %v4849 = vshrl.u32 %v4848, 7
    %v4850 = vsub.s32 %v4847, %v4849
    %v4851 = vrot.slane %v4823, %v4850
    %v4852 = vcombine.low %v4830, %v4837
    %v4853 = vcombine.low %v4844, %v4851
    %v4855 = vunpack.c.l.s4 1966171168
    %v4856 = vunpack.c.0.s8 %v4855
    %v4857 = vlaneseq
    %v4858 = vshrl.u32 %v4857, 7
    %v4859 = vsub.s32 %v4856, %v4858
    %v4860 = vrot.slane %v4852, %v4859
    %v4862 = vunpack.c.l.s4 1966171168
    %v4863 = vunpack.c.0.s8 %v4862
    %v4864 = vlaneseq
    %v4865 = vshrl.u32 %v4864, 7
    %v4866 = vsub.s32 %v4863, %v4865
    %v4867 = vrot.slane %v4853, %v4866
    %v4868 = vcombine.low %v4860, %v4867
    %v4869 = vcombine.low %v3738, %v3739
    %v4870 = vcombine.low %v3740, %v3741
    %v4871 = vcombine.low %v3742, %v3743
    %v4872 = vcombine.low %v3744, %v3745
    %v4874 = vunpack.c.l.s4 1966171168
    %v4875 = vunpack.c.0.s8 %v4874
    %v4876 = vlaneseq
    %v4877 = vshrl.u32 %v4876, 7
    %v4878 = vsub.s32 %v4875, %v4877
    %v4879 = vrot.slane %v4869, %v4878
    %v4881 = vunpack.c.l.s4 1966171168
    %v4882 = vunpack.c.0.s8 %v4881
    %v4883 = vlaneseq
    %v4884 = vshrl.u32 %v4883, 7
    %v4885 = vsub.s32 %v4882, %v4884
    %v4886 = vrot.slane %v4870, %v4885
    %v4888 = vunpack.c.l.s4 1966171168
    %v4889 = vunpack.c.0.s8 %v4888
    %v4890 = vlaneseq
    %v4891 = vshrl.u32 %v4890, 7
    %v4892 = vsub.s32 %v4889, %v4891
    %v4893 = vrot.slane %v4871, %v4892
    %v4895 = vunpack.c.l.s4 1966171168
    %v4896 = vunpack.c.0.s8 %v4895
    %v4897 = vlaneseq
    %v4898 = vshrl.u32 %v4897, 7
    %v4899 = vsub.s32 %v4896, %v4898
    %v4900 = vrot.slane %v4872, %v4899
    %v4901 = vcombine.low %v4879, %v4886
    %v4902 = vcombine.low %v4893, %v4900
    %v4904 = vunpack.c.l.s4 1966171168
    %v4905 = vunpack.c.0.s8 %v4904
    %v4906 = vlaneseq
    %v4907 = vshrl.u32 %v4906, 7
    %v4908 = vsub.s32 %v4905, %v4907
    %v4909 = vrot.slane %v4901, %v4908
    %v4911 = vunpack.c.l.s4 1966171168
    %v4912 = vunpack.c.0.s8 %v4911
    %v4913 = vlaneseq
    %v4914 = vshrl.u32 %v4913, 7
    %v4915 = vsub.s32 %v4912, %v4914
    %v4916 = vrot.slane %v4902, %v4915
    %v4917 = vcombine.low %v4909, %v4916
    %v4918 = vcombine.low %v3746, %v3747
    %v4919 = vcombine.low %v3748, %v3749
    %v4920 = vcombine.low %v3750, %v3751
    %v4921 = vcombine.low %v3752, %v3753
    %v4923 = vunpack.c.l.s4 1966171168
    %v4924 = vunpack.c.0.s8 %v4923
    %v4925 = vlaneseq
    %v4926 = vshrl.u32 %v4925, 7
    %v4927 = vsub.s32 %v4924, %v4926
    %v4928 = vrot.slane %v4918, %v4927
    %v4930 = vunpack.c.l.s4 1966171168
    %v4931 = vunpack.c.0.s8 %v4930
    %v4932 = vlaneseq
    %v4933 = vshrl.u32 %v4932, 7
    %v4934 = vsub.s32 %v4931, %v4933
    %v4935 = vrot.slane %v4919, %v4934
    %v4937 = vunpack.c.l.s4 1966171168
    %v4938 = vunpack.c.0.s8 %v4937
    %v4939 = vlaneseq
    %v4940 = vshrl.u32 %v4939, 7
    %v4941 = vsub.s32 %v4938, %v4940
    %v4942 = vrot.slane %v4920, %v4941
    %v4944 = vunpack.c.l.s4 1966171168
    %v4945 = vunpack.c.0.s8 %v4944
    %v4946 = vlaneseq
    %v4947 = vshrl.u32 %v4946, 7
    %v4948 = vsub.s32 %v4945, %v4947
    %v4949 = vrot.slane %v4921, %v4948
    %v4950 = vcombine.low %v4928, %v4935
    %v4951 = vcombine.low %v4942, %v4949
    %v4953 = vunpack.c.l.s4 1966171168
    %v4954 = vunpack.c.0.s8 %v4953
    %v4955 = vlaneseq
    %v4956 = vshrl.u32 %v4955, 7
    %v4957 = vsub.s32 %v4954, %v4956
    %v4958 = vrot.slane %v4950, %v4957
    %v4960 = vunpack.c.l.s4 1966171168
    %v4961 = vunpack.c.0.s8 %v4960
    %v4962 = vlaneseq
    %v4963 = vshrl.u32 %v4962, 7
    %v4964 = vsub.s32 %v4961, %v4963
    %v4965 = vrot.slane %v4951, %v4964
    %v4966 = vcombine.low %v4958, %v4965
    %v4967 = vcombine.low %v3754, %v3755
    %v4968 = vcombine.low %v3756, %v3757
    %v4969 = vcombine.low %v3758, %v3759
    %v4970 = vcombine.low %v3760, %v3761
    %v4972 = vunpack.c.l.s4 1966171168
    %v4973 = vunpack.c.0.s8 %v4972
    %v4974 = vlaneseq
    %v4975 = vshrl.u32 %v4974, 7
    %v4976 = vsub.s32 %v4973, %v4975
    %v4977 = vrot.slane %v4967, %v4976
    %v4979 = vunpack.c.l.s4 1966171168
    %v4980 = vunpack.c.0.s8 %v4979
    %v4981 = vlaneseq
    %v4982 = vshrl.u32 %v4981, 7
    %v4983 = vsub.s32 %v4980, %v4982
    %v4984 = vrot.slane %v4968, %v4983
    %v4986 = vunpack.c.l.s4 1966171168
    %v4987 = vunpack.c.0.s8 %v4986
    %v4988 = vlaneseq
    %v4989 = vshrl.u32 %v4988, 7
    %v4990 = vsub.s32 %v4987, %v4989
    %v4991 = vrot.slane %v4969, %v4990
    %v4993 = vunpack.c.l.s4 1966171168
    %v4994 = vunpack.c.0.s8 %v4993
    %v4995 = vlaneseq
    %v4996 = vshrl.u32 %v4995, 7
    %v4997 = vsub.s32 %v4994, %v4996
    %v4998 = vrot.slane %v4970, %v4997
    %v4999 = vcombine.low %v4977, %v4984
    %v5000 = vcombine.low %v4991, %v4998
    %v5002 = vunpack.c.l.s4 1966171168
    %v5003 = vunpack.c.0.s8 %v5002
    %v5004 = vlaneseq
    %v5005 = vshrl.u32 %v5004, 7
    %v5006 = vsub.s32 %v5003, %v5005
    %v5007 = vrot.slane %v4999, %v5006
    %v5009 = vunpack.c.l.s4 1966171168
    %v5010 = vunpack.c.0.s8 %v5009
    %v5011 = vlaneseq
    %v5012 = vshrl.u32 %v5011, 7
    %v5013 = vsub.s32 %v5010, %v5012
    %v5014 = vrot.slane %v5000, %v5013
    %v5015 = vcombine.low %v5007, %v5014
    %5038 = vst [vmem:[#allocation5] sm:$0xff] %v3986
    %5039 = vst [vmem:[#allocation5 + $0x8] sm:$0xff] %v4035
    %5040 = vst [vmem:[#allocation5 + $0x10] sm:$0xff] %v4084
    %5041 = vst [vmem:[#allocation5 + $0x18] sm:$0xff] %v4133
    %5042 = vst [vmem:[#allocation5 + $0x20] sm:$0xff] %v4182
    %5043 = vst [vmem:[#allocation5 + $0x28] sm:$0xff] %v4231
    %5044 = vst [vmem:[#allocation5 + $0x30] sm:$0xff] %v4280
    %5045 = vst [vmem:[#allocation5 + $0x38] sm:$0xff] %v4329
    %5046 = vst [vmem:[#allocation5 + $0x40] sm:$0xff] %v4378
    %5047 = vst [vmem:[#allocation5 + $0x48] sm:$0xff] %v4427
    %5048 = vst [vmem:[#allocation5 + $0x50] sm:$0xff] %v4476
    %5049 = vst [vmem:[#allocation5 + $0x58] sm:$0xff] %v4525
    %5050 = vst [vmem:[#allocation5 + $0x60] sm:$0xff] %v4574
    %5051 = vst [vmem:[#allocation5 + $0x68] sm:$0xff] %v4623
    %5052 = vst [vmem:[#allocation5 + $0x70] sm:$0xff] %v4672
    %5053 = vst [vmem:[#allocation5 + $0x78] sm:$0xff] %v4721
    %5054 = vst [vmem:[#allocation5 + $0x80] sm:$0xff] %v4770
    %5055 = vst [vmem:[#allocation5 + $0x88] sm:$0xff] %v4819
    %5056 = vst [vmem:[#allocation5 + $0x90] sm:$0xff] %v4868
    %5057 = vst [vmem:[#allocation5 + $0x98] sm:$0xff] %v4917
    %5058 = vst [vmem:[#allocation5 + $0xa0] sm:$0xff] %v4966
    %v5059 = vlaneseq
    %vm5060 = vcmp.ge.s32.totalorder %v5059, 0
    %vm5061 = vcmp.lt.s32.totalorder %v5059, 996
    %vm5062 = vmand %vm5060, %vm5061
    %5063 = vst.msk [vmem:[#allocation5 + $0xa8] sm:$0xff] %vm5062, %v5015
    // Predicated region
    $region10: #{tpu_custom_call.1} parent=1 // pred_check
      _
    $region11: #{tpu_custom_call.1} parent=1 // pred_check_branch
      %5065 = sbr.rel (0) target = $region13
    $region12: #{tpu_custom_call.1} parent=1 // pred_region
      %s5067 = ssub.s32 2816, 2816
      %5068 = vsyncadd [#allocation4], %s5067
      %s5070 = sshll.u32 [#allocation5], 4
      %s5071 = int_to_ptr.vmem [resolvable:$true] %s5070
      %5073 = dma.vmem_to_hbm [thread:$0]  %s5071, 2816, %s1, [#allocation4]
    $region13: #{tpu_custom_call.1} parent=1 // pred_fallthru
      _
    // Predicated region
    $region14: #{tpu_custom_call.1} parent=1 // pred_check
      _
    $region15: #{tpu_custom_call.1} parent=1 // pred_check_branch
      %5075 = sbr.rel (0) target = $region17
    $region16: #{tpu_custom_call.1} parent=1 // pred_region
      %5076 = dma.done [#allocation4], 2816
    $region17: #{tpu_custom_call.1} parent=1 // pred_fallthru
      _
    %5077 = vsyncpa [#allocation3], 1
    %5078 = vsyncpa [#allocation4], 1

</llo_original>
